<compile_context>
chip_gen: v5e
topology: v5e:2x2
jax: 0.10.0
libtpu: 0.0.40
codegen_flags: <defaults>
</compile_context>

<pallas_src>
import jax
import jax.numpy as jnp
from jax.experimental import pallas as pl
from jax.experimental.pallas import tpu as pltpu


# ----------------------------------------------------------------------------
# Fused ResIR2C kernel factory
# ----------------------------------------------------------------------------
def _make_fused_kernel(*, c1, c2, c, k, n, shortcut, H, W, B, offsets):
    """Build the fused kernel, closed over static config and SMEM param offsets.

    Every activation is a dense (H, B*W) f32 plane (one per channel); image b
    occupies lane columns [b*W, (b+1)*W).  kxk / depthwise convs build their
    zero-padded taps in-register with pltpu.roll + validity masks.
    """
    r = k // 2
    kk = k * k
    BW = B * W

    def kernel(p_ref, x_ref, o_ref):
        # p_ref : SMEM f32[P]          flat (BN-folded) weights + biases
        # x_ref : VMEM (1, c1, H, BW)  lane-packed input images
        # o_ref : VMEM (1, c2, H, BW)  lane-packed output

        def w(i):                       # scalar weight from SMEM (static index)
            return p_ref[i]

        def silu(v):
            return v * jax.nn.sigmoid(v)

        # ---- hoisted shift-validity masks (built once, reused by every kxk) ----
        ri = jax.lax.broadcasted_iota(jnp.int32, (H, BW), 0)            # row idx
        cj = jax.lax.broadcasted_iota(jnp.int32, (H, BW), 1) % W        # in-image col
        row_mask, col_mask = {}, {}
        for a in range(k):
            if a == r:
                continue
            s = a - r
            row_mask[a] = ((ri + s >= 0) & (ri + s < H)).astype(jnp.float32)
            col_mask[a] = ((cj + s >= 0) & (cj + s < W)).astype(jnp.float32)

        def gen_taps(planes, fma):
            """Emit all k*k SAME-zero-padded taps for every input plane.

            Taps are built in-register: sublane/lane rotations (XLU slot) plus a
            mask multiply; the masks also prevent bleed between lane-packed
            images and across the global wrap-around.
            """
            for ci, x in enumerate(planes):
                for a in range(k):
                    if a == r:
                        rowv = x
                    else:
                        rowv = pltpu.roll(x, shift=(r - a) % H, axis=0) * row_mask[a]
                    for b2 in range(k):
                        if b2 == r:
                            tap = rowv
                        else:
                            tap = pltpu.roll(rowv, shift=(r - b2) % BW, axis=1) * col_mask[b2]
                        fma(ci, a * k + b2, tap)

        def conv1x1(planes, woff, boff, cin, cout):
            outs = []
            for co in range(cout):
                acc = w(woff + co * cin) * planes[0]
                for ci in range(1, cin):
                    acc = acc + w(woff + co * cin + ci) * planes[ci]
                outs.append(silu(acc + w(boff + co)))
            return outs

        def fused_g(planes):
            """Two_Conv's g.cv1 and g.cv2 share one tap pass over y0."""
            w1, b1 = offsets["g_cv1"]
            w2, b2 = offsets["g_cv2"]
            accs = [None] * (2 * c)

            def fma(ci, t, tap):
                for co in range(c):
                    t1 = w(w1 + (co * c + ci) * kk + t) * tap
                    accs[co] = t1 if accs[co] is None else accs[co] + t1
                    t2 = w(w2 + (co * c + ci) * kk + t) * tap
                    accs[c + co] = t2 if accs[c + co] is None else accs[c + co] + t2

            gen_taps(planes, fma)
            g1 = [silu(accs[co] + w(b1 + co)) for co in range(c)]
            g2 = [silu(accs[c + co] + w(b2 + co)) for co in range(c)]
            return g1, g2

        def dwconv(planes, woff, boff, ch):
            accs = [None] * ch

            def fma(ci, t, tap):
                term = w(woff + ci * kk + t) * tap
                accs[ci] = term if accs[ci] is None else accs[ci] + term

            gen_taps(planes, fma)
            return [silu(accs[ci] + w(boff + ci)) for ci in range(ch)]

        # ---- streaming cv2: fold each group into c2 accumulators immediately ----
        # TODO(synk): for non-toy configs ((4+n)*c >= ~32) cv2 could be an MXU
        # matmul instead of scalar FMAs; not worth it at these channel counts.
        cv2_w, cv2_b = offsets["cv2"]
        cin_cv2 = (4 + n) * c
        cv2_acc = [None] * c2

        def stream_cv2(base, planes):
            for lc, p in enumerate(planes):
                for co in range(c2):
                    term = w(cv2_w + co * cin_cv2 + base + lc) * p
                    cv2_acc[co] = term if cv2_acc[co] is None else cv2_acc[co] + term

        # ------------------------------ forward ------------------------------
        xs = [x_ref[0, i].astype(jnp.float32) for i in range(c1)]

        y = conv1x1(xs, *offsets["cv1"], c1, 2 * c)          # cv1 (1x1), chunk(2)
        y0, y1 = y[:c], y[c:]
        stream_cv2(0, y0)
        stream_cv2(3 * c, y1)

        g1, g2 = fused_g(y0)                                  # Two_Conv (fused kxk)
        stream_cv2(c, g1)
        stream_cv2(2 * c, g2)

        cur = y1
        for i in range(n):                                    # n x Inverted_Residual_Block
            t = conv1x1(cur, *offsets[f"m{i}_conv1"], c, 2 * c)
            d = dwconv(t, *offsets[f"m{i}_dw"], 2 * c)
            o = conv1x1(d, *offsets[f"m{i}_conv2"], 2 * c, c)
            stream_cv2((4 + i) * c, o)
            cur = o

        for co in range(c2):                                  # cv2 bias + SiLU (+shortcut)
            v = silu(cv2_acc[co] + w(cv2_b + co))
            if shortcut:                                      # only when c1 == c2
                v = v + xs[co]
            o_ref[0, co] = v.astype(o_ref.dtype)              # full-width (H,BW) store

    return kernel


# ----------------------------------------------------------------------------
# Wrapper: flat SMEM parameter vector + lane-packing + pallas_call plumbing
# ----------------------------------------------------------------------------
def build_flat_params(params, n):
    """Flatten all (BN-folded) weights/biases into one f32 vector + static offsets."""
    names = ["cv1", "g_cv1", "g_cv2"]
    for i in range(n):
        names += [f"m{i}_conv1", f"m{i}_dw", f"m{i}_conv2"]
    names.append("cv2")

    chunks, offsets, pos = [], {}, 0
    for nm in names:
        w_arr = params[nm + "_w"]
        b_arr = params[nm + "_b"]
        if w_arr.ndim == 4:    # HWIO (kh, kw, cin, cout) -> (cout, cin, kh, kw)
            wf = jnp.transpose(w_arr, (3, 2, 0, 1)).reshape(-1)
        else:                  # depthwise (kh, kw, C) -> (C, kh, kw)
            wf = jnp.transpose(w_arr, (2, 0, 1)).reshape(-1)
        bf = b_arr.reshape(-1)
        offsets[nm] = (pos, pos + wf.size)
        chunks += [wf, bf]
        pos += wf.size + bf.size
    flat = jnp.concatenate(chunks).astype(jnp.float32)
    return flat, offsets


def make_resir2c_forward(offsets, n_params, *, c1, c2, c, k, n, shortcut,
                         H, W, dtype=jnp.float32):
    B_pack = max(1, 128 // W)          # images packed along the lane axis
    BW = B_pack * W

    kernel = _make_fused_kernel(c1=c1, c2=c2, c=c, k=k, n=n, shortcut=shortcut,
                                H=H, W=W, B=B_pack, offsets=offsets)

    def fwd(flat_params, x_nchw):
        Nb = x_nchw.shape[0]
        G = (Nb + B_pack - 1) // B_pack      # grid steps; >=2 feeds both v7x TCs
        Npad = G * B_pack
        xq = x_nchw.astype(dtype)
        if Npad != Nb:
            xq = jnp.pad(xq, ((0, Npad - Nb), (0, 0), (0, 0), (0, 0)))
        # lane-dense packing: (Npad,c1,H,W) -> (G,c1,H,B_pack*W)   (layout plumbing)
        xg = (xq.reshape(G, B_pack, c1, H, W)
                .transpose(0, 2, 3, 1, 4)
                .reshape(G, c1, H, BW))

        px = Npad * H * W
        macs = (c1 * 2 * c + 2 * c * c * k * k
                + n * (c * 2 * c + 2 * c * k * k + 2 * c * c)
                + (4 + n) * c * c2)
        acts = 2 * c + 2 * c + n * (2 * c + 2 * c + c) + c2
        cost = pl.CostEstimate(
            flops=int(2 * macs * px),
            transcendentals=int(acts * px),
            bytes_accessed=int(4 * (Npad * (c1 + c2) * H * W + n_params)),
        )

        out = pl.pallas_call(
            kernel,
            out_shape=jax.ShapeDtypeStruct((G, c2, H, BW), dtype),
            grid=(G,),
            in_specs=[
                pl.BlockSpec(memory_space=pltpu.MemorySpace.SMEM),       # flat params
                pl.BlockSpec((1, c1, H, BW), lambda g: (g, 0, 0, 0)),    # packed input
            ],
            out_specs=pl.BlockSpec((1, c2, H, BW), lambda g: (g, 0, 0, 0)),
            compiler_params=pltpu.CompilerParams(
                dimension_semantics=("parallel",),
                vmem_limit_bytes=32 * 1024 * 1024,
            ),
            cost_estimate=cost,
        )(flat_params, xg)

        # unpack: (G,c2,H,B_pack*W) -> (Nb,c2,H,W)
        out = (out.reshape(G, c2, H, B_pack, W)
                  .transpose(0, 3, 1, 2, 4)
                  .reshape(Npad, c2, H, W))
        return out[:Nb]

    return jax.jit(fwd)


# ----------------------------------------------------------------------------
# Parameter construction (deterministic, BN folded)
# ----------------------------------------------------------------------------
def _fold_bn(w_ocik, key_bn):
    cout = w_ocik.shape[0]
    kg, kb, km, kv = jax.random.split(key_bn, 4)
    gamma = jax.random.uniform(kg, (cout,), jnp.float32, 0.5, 1.5)
    beta = jax.random.normal(kb, (cout,), jnp.float32) * 0.1
    mean = jax.random.normal(km, (cout,), jnp.float32) * 0.1
    var = jax.random.uniform(kv, (cout,), jnp.float32, 0.5, 1.5)
    eps = 1e-3
    scale = gamma / jnp.sqrt(var + eps)
    w_f = w_ocik * scale[:, None, None, None]
    b_f = beta - mean * scale
    return w_f, b_f


def make_full_conv(key, cin, cout, k):
    kw, kbn = jax.random.split(key)
    w = jax.random.normal(kw, (cout, cin, k, k), jnp.float32) / (cin * k * k) ** 0.5
    w_f, b = _fold_bn(w, kbn)
    return jnp.transpose(w_f, (2, 3, 1, 0)), b          # HWIO


def make_dw_conv(key, ch, k):
    kw, kbn = jax.random.split(key)
    w = jax.random.normal(kw, (ch, 1, k, k), jnp.float32) / (k * k) ** 0.5
    w_f, b = _fold_bn(w, kbn)
    return jnp.transpose(w_f[:, 0], (1, 2, 0)), b        # (k, k, C)


# ----------------------------------------------------------------------------
# Pure-JAX reference (lax.conv, NHWC) for correctness check
# ----------------------------------------------------------------------------
def _ref_conv(x, w_hwio, b, k, groups=1):
    p = k // 2
    y = jax.lax.conv_general_dilated(
        x, w_hwio, (1, 1), ((p, p), (p, p)),
        dimension_numbers=("NHWC", "HWIO", "NHWC"),
        feature_group_count=groups,
    )
    y = y + b
    return y * jax.nn.sigmoid(y)


def resir2c_ref(x, params, *, c, k, n, shortcut):
    y = _ref_conv(x, params["cv1_w"], params["cv1_b"], 1)
    y0, y1 = y[..., :c], y[..., c:]
    g1 = _ref_conv(y0, params["g_cv1_w"], params["g_cv1_b"], k)
    g2 = _ref_conv(y0, params["g_cv2_w"], params["g_cv2_b"], k)
    ys = [jnp.concatenate([y0, g1, g2], axis=-1), y1]
    for i in range(n):
        t = _ref_conv(ys[-1], params[f"m{i}_conv1_w"], params[f"m{i}_conv1_b"], 1)
        C = t.shape[-1]
        t = _ref_conv(
            t, params[f"m{i}_dw_w"][:, :, None, :], params[f"m{i}_dw_b"], k, groups=C
        )
        t = _ref_conv(t, params[f"m{i}_conv2_w"], params[f"m{i}_conv2_b"], 1)
        ys.append(t)
    out = _ref_conv(jnp.concatenate(ys, axis=-1), params["cv2_w"], params["cv2_b"], 1)
    if shortcut:
        out = out + x
    return out


# ----------------------------------------------------------------------------
if __name__ == "__main__":
    key = jax.random.PRNGKey(0)
    # ResIR2C(c1=4, c2=4, k=3, shortcut=False, n=1, e=0.5)
    c1, c2, k, n, e, shortcut_flag = 4, 4, 3, 1, 0.5, False
    shortcut = bool(shortcut_flag and c1 == c2)
    c = int(c2 * e)
    # 16 images of 16x16 -> 8 images lane-packed per grid step, grid=(2,)
    Nb, H, W = 16, 16, 16

    keys = jax.random.split(key, 16)
    params = {}
    params["cv1_w"], params["cv1_b"] = make_full_conv(keys[0], c1, 2 * c, 1)
    params["g_cv1_w"], params["g_cv1_b"] = make_full_conv(keys[1], c, c, k)
    params["g_cv2_w"], params["g_cv2_b"] = make_full_conv(keys[2], c, c, k)
    for i in range(n):
        params[f"m{i}_conv1_w"], params[f"m{i}_conv1_b"] = make_full_conv(
            keys[3 + 3 * i], c, 2 * c, 1
        )
        params[f"m{i}_dw_w"], params[f"m{i}_dw_b"] = make_dw_conv(
            keys[4 + 3 * i], 2 * c, k
        )
        params[f"m{i}_conv2_w"], params[f"m{i}_conv2_b"] = make_full_conv(
            keys[5 + 3 * i], 2 * c, c, 1
        )
    params["cv2_w"], params["cv2_b"] = make_full_conv(
        keys[3 + 3 * n], (4 + n) * c, c2, 1
    )

    flat_params, offsets = build_flat_params(params, n)
    fwd = make_resir2c_forward(
        offsets, int(flat_params.size),
        c1=c1, c2=c2, c=c, k=k, n=n, shortcut=shortcut, H=H, W=W,
    )

    # PyTorch-style NCHW input; the wrapper lane-packs / unpacks around the kernel.
    x_nchw = jax.random.normal(keys[15], (Nb, c1, H, W), jnp.float32)

    out_nchw = jax.block_until_ready(fwd(flat_params, x_nchw))
    assert out_nchw.shape == (Nb, c2, H, W)

    # Correctness check against a pure-JAX (lax.conv) reference.
    x_nhwc = jnp.transpose(x_nchw, (0, 2, 3, 1))
    ref_nhwc = resir2c_ref(x_nhwc, params, c=c, k=k, n=n, shortcut=shortcut)
    ref_nchw = jnp.transpose(ref_nhwc, (0, 3, 1, 2))
    err = float(jnp.max(jnp.abs(out_nchw - ref_nchw)))
    assert err < 2e-3, f"max abs error vs reference: {err}"

    print("KERNEL_OK")
</pallas_src>

<mosaic_0001>
module attributes {stable_mosaic.version = 11 : i64} {
  func.func @kernel(%arg0: i32, %arg1: memref<202xf32, #tpu.memory_space<smem>>, %arg2: memref<1x4x16x128xf32, #tpu.memory_space<vmem>>, %arg3: memref<1x4x16x128xf32, #tpu.memory_space<vmem>>) attributes {dimension_semantics = [#tpu.dimension_semantics<parallel>], iteration_bounds = array<i64: 2>, scalar_prefetch = 0 : i64, scratch_operands = 0 : i64, tpu.core_type = #tpu.core_type<tc>, window_params = [{transform_indices = @transform_0, window_bounds = array<i64: 202>}, {transform_indices = @transform_1, window_bounds = array<i64: 1, 4, 16, 128>}, {transform_indices = @transform_2, window_bounds = array<i64: 1, 4, 16, 128>}]} {
    %0 = tpu.iota {dimensions = array<i32: 0>} : vector<16x128xi32>
    %1 = tpu.iota {dimensions = array<i32: 1>} : vector<16x128xi32>
    %c16_i32 = arith.constant 16 : i32
    %c0_i32 = arith.constant 0 : i32
    %2 = arith.cmpi eq, %c16_i32, %c0_i32 : i32
    %c1_i32 = arith.constant 1 : i32
    %3 = arith.select %2, %c1_i32, %c16_i32 : i32
    %4 = vector.broadcast %3 : i32 to vector<16x128xi32>
    %5 = arith.remsi %1, %4 : vector<16x128xi32>
    %c0_i32_0 = arith.constant 0 : i32
    %6 = vector.broadcast %c0_i32_0 : i32 to vector<16x128xi32>
    %7 = arith.cmpi ne, %5, %6 : vector<16x128xi32>
    %c0_i32_1 = arith.constant 0 : i32
    %8 = vector.broadcast %c0_i32_1 : i32 to vector<16x128xi32>
    %9 = arith.cmpi slt, %5, %8 : vector<16x128xi32>
    %c0_i32_2 = arith.constant 0 : i32
    %10 = arith.cmpi slt, %3, %c0_i32_2 : i32
    %11 = vector.broadcast %10 : i1 to vector<16x128xi1>
    %12 = vector.broadcast %11 : vector<16x128xi1> to vector<16x128xi1>
    %13 = arith.xori %9, %12 : vector<16x128xi1>
    %14 = arith.andi %13, %7 : vector<16x128xi1>
    %15 = vector.broadcast %3 : i32 to vector<16x128xi32>
    %16 = arith.addi %5, %15 : vector<16x128xi32>
    %17 = arith.select %14, %16, %5 : vector<16x128xi1>, vector<16x128xi32>
    %c-1_i32 = arith.constant -1 : i32
    %18 = vector.broadcast %c-1_i32 : i32 to vector<16x128xi32>
    %19 = arith.addi %0, %18 : vector<16x128xi32>
    %c0_i32_3 = arith.constant 0 : i32
    %20 = vector.broadcast %c0_i32_3 : i32 to vector<16x128xi32>
    %21 = arith.cmpi sge, %19, %20 : vector<16x128xi32>
    %c-1_i32_4 = arith.constant -1 : i32
    %22 = vector.broadcast %c-1_i32_4 : i32 to vector<16x128xi32>
    %23 = arith.addi %0, %22 : vector<16x128xi32>
    %c16_i32_5 = arith.constant 16 : i32
    %24 = vector.broadcast %c16_i32_5 : i32 to vector<16x128xi32>
    %25 = arith.cmpi slt, %23, %24 : vector<16x128xi32>
    %26 = arith.andi %21, %25 : vector<16x128xi1>
    %27 = arith.extui %26 : vector<16x128xi1> to vector<16x128xi32>
    %28 = arith.sitofp %27 : vector<16x128xi32> to vector<16x128xf32>
    %c-1_i32_6 = arith.constant -1 : i32
    %29 = vector.broadcast %c-1_i32_6 : i32 to vector<16x128xi32>
    %30 = arith.addi %17, %29 : vector<16x128xi32>
    %c0_i32_7 = arith.constant 0 : i32
    %31 = vector.broadcast %c0_i32_7 : i32 to vector<16x128xi32>
    %32 = arith.cmpi sge, %30, %31 : vector<16x128xi32>
    %c-1_i32_8 = arith.constant -1 : i32
    %33 = vector.broadcast %c-1_i32_8 : i32 to vector<16x128xi32>
    %34 = arith.addi %17, %33 : vector<16x128xi32>
    %c16_i32_9 = arith.constant 16 : i32
    %35 = vector.broadcast %c16_i32_9 : i32 to vector<16x128xi32>
    %36 = arith.cmpi slt, %34, %35 : vector<16x128xi32>
    %37 = arith.andi %32, %36 : vector<16x128xi1>
    %38 = arith.extui %37 : vector<16x128xi1> to vector<16x128xi32>
    %39 = arith.sitofp %38 : vector<16x128xi32> to vector<16x128xf32>
    %c1_i32_10 = arith.constant 1 : i32
    %40 = vector.broadcast %c1_i32_10 : i32 to vector<16x128xi32>
    %41 = arith.addi %0, %40 : vector<16x128xi32>
    %c0_i32_11 = arith.constant 0 : i32
    %42 = vector.broadcast %c0_i32_11 : i32 to vector<16x128xi32>
    %43 = arith.cmpi sge, %41, %42 : vector<16x128xi32>
    %c1_i32_12 = arith.constant 1 : i32
    %44 = vector.broadcast %c1_i32_12 : i32 to vector<16x128xi32>
    %45 = arith.addi %0, %44 : vector<16x128xi32>
    %c16_i32_13 = arith.constant 16 : i32
    %46 = vector.broadcast %c16_i32_13 : i32 to vector<16x128xi32>
    %47 = arith.cmpi slt, %45, %46 : vector<16x128xi32>
    %48 = arith.andi %43, %47 : vector<16x128xi1>
    %49 = arith.extui %48 : vector<16x128xi1> to vector<16x128xi32>
    %50 = arith.sitofp %49 : vector<16x128xi32> to vector<16x128xf32>
    %c1_i32_14 = arith.constant 1 : i32
    %51 = vector.broadcast %c1_i32_14 : i32 to vector<16x128xi32>
    %52 = arith.addi %17, %51 : vector<16x128xi32>
    %c0_i32_15 = arith.constant 0 : i32
    %53 = vector.broadcast %c0_i32_15 : i32 to vector<16x128xi32>
    %54 = arith.cmpi sge, %52, %53 : vector<16x128xi32>
    %c1_i32_16 = arith.constant 1 : i32
    %55 = vector.broadcast %c1_i32_16 : i32 to vector<16x128xi32>
    %56 = arith.addi %17, %55 : vector<16x128xi32>
    %c16_i32_17 = arith.constant 16 : i32
    %57 = vector.broadcast %c16_i32_17 : i32 to vector<16x128xi32>
    %58 = arith.cmpi slt, %56, %57 : vector<16x128xi32>
    %59 = arith.andi %54, %58 : vector<16x128xi1>
    %60 = arith.extui %59 : vector<16x128xi1> to vector<16x128xi32>
    %61 = arith.sitofp %60 : vector<16x128xi32> to vector<16x128xf32>
    %c0 = arith.constant 0 : index
    %c0_18 = arith.constant 0 : index
    %c0_19 = arith.constant 0 : index
    %c0_20 = arith.constant 0 : index
    %62 = vector.load %arg2[%c0, %c0_18, %c0_19, %c0_20] : memref<1x4x16x128xf32, #tpu.memory_space<vmem>>, vector<1x1x16x128xf32>
    %63 = vector.shape_cast %62 : vector<1x1x16x128xf32> to vector<16x128xf32>
    %c0_21 = arith.constant 0 : index
    %c1 = arith.constant 1 : index
    %c0_22 = arith.constant 0 : index
    %c0_23 = arith.constant 0 : index
    %64 = vector.load %arg2[%c0_21, %c1, %c0_22, %c0_23] : memref<1x4x16x128xf32, #tpu.memory_space<vmem>>, vector<1x1x16x128xf32>
    %65 = vector.shape_cast %64 : vector<1x1x16x128xf32> to vector<16x128xf32>
    %c0_24 = arith.constant 0 : index
    %c2 = arith.constant 2 : index
    %c0_25 = arith.constant 0 : index
    %c0_26 = arith.constant 0 : index
    %66 = vector.load %arg2[%c0_24, %c2, %c0_25, %c0_26] : memref<1x4x16x128xf32, #tpu.memory_space<vmem>>, vector<1x1x16x128xf32>
    %67 = vector.shape_cast %66 : vector<1x1x16x128xf32> to vector<16x128xf32>
    %c0_27 = arith.constant 0 : index
    %c3 = arith.constant 3 : index
    %c0_28 = arith.constant 0 : index
    %c0_29 = arith.constant 0 : index
    %68 = vector.load %arg2[%c0_27, %c3, %c0_28, %c0_29] : memref<1x4x16x128xf32, #tpu.memory_space<vmem>>, vector<1x1x16x128xf32>
    %69 = vector.shape_cast %68 : vector<1x1x16x128xf32> to vector<16x128xf32>
    %c0_30 = arith.constant 0 : index
    %70 = memref.load %arg1[%c0_30] : memref<202xf32, #tpu.memory_space<smem>>
    %71 = vector.broadcast %70 : f32 to vector<16x128xf32>
    %72 = arith.mulf %71, %63 : vector<16x128xf32>
    %c1_31 = arith.constant 1 : index
    %73 = memref.load %arg1[%c1_31] : memref<202xf32, #tpu.memory_space<smem>>
    %74 = vector.broadcast %73 : f32 to vector<16x128xf32>
    %75 = arith.mulf %74, %65 : vector<16x128xf32>
    %76 = arith.addf %72, %75 : vector<16x128xf32>
    %c2_32 = arith.constant 2 : index
    %77 = memref.load %arg1[%c2_32] : memref<202xf32, #tpu.memory_space<smem>>
    %78 = vector.broadcast %77 : f32 to vector<16x128xf32>
    %79 = arith.mulf %78, %67 : vector<16x128xf32>
    %80 = arith.addf %76, %79 : vector<16x128xf32>
    %c3_33 = arith.constant 3 : index
    %81 = memref.load %arg1[%c3_33] : memref<202xf32, #tpu.memory_space<smem>>
    %82 = vector.broadcast %81 : f32 to vector<16x128xf32>
    %83 = arith.mulf %82, %69 : vector<16x128xf32>
    %84 = arith.addf %80, %83 : vector<16x128xf32>
    %c16 = arith.constant 16 : index
    %85 = memref.load %arg1[%c16] : memref<202xf32, #tpu.memory_space<smem>>
    %86 = vector.broadcast %85 : f32 to vector<16x128xf32>
    %87 = arith.addf %84, %86 : vector<16x128xf32>
    %88 = arith.negf %87 : vector<16x128xf32>
    %89 = math.exp %88 : vector<16x128xf32>
    %cst = arith.constant 1.000000e+00 : f32
    %90 = vector.broadcast %cst : f32 to vector<16x128xf32>
    %91 = arith.addf %90, %89 : vector<16x128xf32>
    %92 = arith.divf %90, %91 : vector<16x128xf32>
    %93 = arith.mulf %87, %92 : vector<16x128xf32>
    %c4 = arith.constant 4 : index
    %94 = memref.load %arg1[%c4] : memref<202xf32, #tpu.memory_space<smem>>
    %95 = vector.broadcast %94 : f32 to vector<16x128xf32>
    %96 = arith.mulf %95, %63 : vector<16x128xf32>
    %c5 = arith.constant 5 : index
    %97 = memref.load %arg1[%c5] : memref<202xf32, #tpu.memory_space<smem>>
    %98 = vector.broadcast %97 : f32 to vector<16x128xf32>
    %99 = arith.mulf %98, %65 : vector<16x128xf32>
    %100 = arith.addf %96, %99 : vector<16x128xf32>
    %c6 = arith.constant 6 : index
    %101 = memref.load %arg1[%c6] : memref<202xf32, #tpu.memory_space<smem>>
    %102 = vector.broadcast %101 : f32 to vector<16x128xf32>
    %103 = arith.mulf %102, %67 : vector<16x128xf32>
    %104 = arith.addf %100, %103 : vector<16x128xf32>
    %c7 = arith.constant 7 : index
    %105 = memref.load %arg1[%c7] : memref<202xf32, #tpu.memory_space<smem>>
    %106 = vector.broadcast %105 : f32 to vector<16x128xf32>
    %107 = arith.mulf %106, %69 : vector<16x128xf32>
    %108 = arith.addf %104, %107 : vector<16x128xf32>
    %c17 = arith.constant 17 : index
    %109 = memref.load %arg1[%c17] : memref<202xf32, #tpu.memory_space<smem>>
    %110 = vector.broadcast %109 : f32 to vector<16x128xf32>
    %111 = arith.addf %108, %110 : vector<16x128xf32>
    %112 = arith.negf %111 : vector<16x128xf32>
    %113 = math.exp %112 : vector<16x128xf32>
    %cst_34 = arith.constant 1.000000e+00 : f32
    %114 = vector.broadcast %cst_34 : f32 to vector<16x128xf32>
    %115 = arith.addf %114, %113 : vector<16x128xf32>
    %116 = arith.divf %114, %115 : vector<16x128xf32>
    %117 = arith.mulf %111, %116 : vector<16x128xf32>
    %c8 = arith.constant 8 : index
    %118 = memref.load %arg1[%c8] : memref<202xf32, #tpu.memory_space<smem>>
    %119 = vector.broadcast %118 : f32 to vector<16x128xf32>
    %120 = arith.mulf %119, %63 : vector<16x128xf32>
    %c9 = arith.constant 9 : index
    %121 = memref.load %arg1[%c9] : memref<202xf32, #tpu.memory_space<smem>>
    %122 = vector.broadcast %121 : f32 to vector<16x128xf32>
    %123 = arith.mulf %122, %65 : vector<16x128xf32>
    %124 = arith.addf %120, %123 : vector<16x128xf32>
    %c10 = arith.constant 10 : index
    %125 = memref.load %arg1[%c10] : memref<202xf32, #tpu.memory_space<smem>>
    %126 = vector.broadcast %125 : f32 to vector<16x128xf32>
    %127 = arith.mulf %126, %67 : vector<16x128xf32>
    %128 = arith.addf %124, %127 : vector<16x128xf32>
    %c11 = arith.constant 11 : index
    %129 = memref.load %arg1[%c11] : memref<202xf32, #tpu.memory_space<smem>>
    %130 = vector.broadcast %129 : f32 to vector<16x128xf32>
    %131 = arith.mulf %130, %69 : vector<16x128xf32>
    %132 = arith.addf %128, %131 : vector<16x128xf32>
    %c18 = arith.constant 18 : index
    %133 = memref.load %arg1[%c18] : memref<202xf32, #tpu.memory_space<smem>>
    %134 = vector.broadcast %133 : f32 to vector<16x128xf32>
    %135 = arith.addf %132, %134 : vector<16x128xf32>
    %136 = arith.negf %135 : vector<16x128xf32>
    %137 = math.exp %136 : vector<16x128xf32>
    %cst_35 = arith.constant 1.000000e+00 : f32
    %138 = vector.broadcast %cst_35 : f32 to vector<16x128xf32>
    %139 = arith.addf %138, %137 : vector<16x128xf32>
    %140 = arith.divf %138, %139 : vector<16x128xf32>
    %141 = arith.mulf %135, %140 : vector<16x128xf32>
    %c12 = arith.constant 12 : index
    %142 = memref.load %arg1[%c12] : memref<202xf32, #tpu.memory_space<smem>>
    %143 = vector.broadcast %142 : f32 to vector<16x128xf32>
    %144 = arith.mulf %143, %63 : vector<16x128xf32>
    %c13 = arith.constant 13 : index
    %145 = memref.load %arg1[%c13] : memref<202xf32, #tpu.memory_space<smem>>
    %146 = vector.broadcast %145 : f32 to vector<16x128xf32>
    %147 = arith.mulf %146, %65 : vector<16x128xf32>
    %148 = arith.addf %144, %147 : vector<16x128xf32>
    %c14 = arith.constant 14 : index
    %149 = memref.load %arg1[%c14] : memref<202xf32, #tpu.memory_space<smem>>
    %150 = vector.broadcast %149 : f32 to vector<16x128xf32>
    %151 = arith.mulf %150, %67 : vector<16x128xf32>
    %152 = arith.addf %148, %151 : vector<16x128xf32>
    %c15 = arith.constant 15 : index
    %153 = memref.load %arg1[%c15] : memref<202xf32, #tpu.memory_space<smem>>
    %154 = vector.broadcast %153 : f32 to vector<16x128xf32>
    %155 = arith.mulf %154, %69 : vector<16x128xf32>
    %156 = arith.addf %152, %155 : vector<16x128xf32>
    %c19 = arith.constant 19 : index
    %157 = memref.load %arg1[%c19] : memref<202xf32, #tpu.memory_space<smem>>
    %158 = vector.broadcast %157 : f32 to vector<16x128xf32>
    %159 = arith.addf %156, %158 : vector<16x128xf32>
    %160 = arith.negf %159 : vector<16x128xf32>
    %161 = math.exp %160 : vector<16x128xf32>
    %cst_36 = arith.constant 1.000000e+00 : f32
    %162 = vector.broadcast %cst_36 : f32 to vector<16x128xf32>
    %163 = arith.addf %162, %161 : vector<16x128xf32>
    %164 = arith.divf %162, %163 : vector<16x128xf32>
    %165 = arith.mulf %159, %164 : vector<16x128xf32>
    %c158 = arith.constant 158 : index
    %166 = memref.load %arg1[%c158] : memref<202xf32, #tpu.memory_space<smem>>
    %167 = vector.broadcast %166 : f32 to vector<16x128xf32>
    %168 = arith.mulf %167, %93 : vector<16x128xf32>
    %c168 = arith.constant 168 : index
    %169 = memref.load %arg1[%c168] : memref<202xf32, #tpu.memory_space<smem>>
    %170 = vector.broadcast %169 : f32 to vector<16x128xf32>
    %171 = arith.mulf %170, %93 : vector<16x128xf32>
    %c178 = arith.constant 178 : index
    %172 = memref.load %arg1[%c178] : memref<202xf32, #tpu.memory_space<smem>>
    %173 = vector.broadcast %172 : f32 to vector<16x128xf32>
    %174 = arith.mulf %173, %93 : vector<16x128xf32>
    %c188 = arith.constant 188 : index
    %175 = memref.load %arg1[%c188] : memref<202xf32, #tpu.memory_space<smem>>
    %176 = vector.broadcast %175 : f32 to vector<16x128xf32>
    %177 = arith.mulf %176, %93 : vector<16x128xf32>
    %c159 = arith.constant 159 : index
    %178 = memref.load %arg1[%c159] : memref<202xf32, #tpu.memory_space<smem>>
    %179 = vector.broadcast %178 : f32 to vector<16x128xf32>
    %180 = arith.mulf %179, %117 : vector<16x128xf32>
    %181 = arith.addf %168, %180 : vector<16x128xf32>
    %c169 = arith.constant 169 : index
    %182 = memref.load %arg1[%c169] : memref<202xf32, #tpu.memory_space<smem>>
    %183 = vector.broadcast %182 : f32 to vector<16x128xf32>
    %184 = arith.mulf %183, %117 : vector<16x128xf32>
    %185 = arith.addf %171, %184 : vector<16x128xf32>
    %c179 = arith.constant 179 : index
    %186 = memref.load %arg1[%c179] : memref<202xf32, #tpu.memory_space<smem>>
    %187 = vector.broadcast %186 : f32 to vector<16x128xf32>
    %188 = arith.mulf %187, %117 : vector<16x128xf32>
    %189 = arith.addf %174, %188 : vector<16x128xf32>
    %c189 = arith.constant 189 : index
    %190 = memref.load %arg1[%c189] : memref<202xf32, #tpu.memory_space<smem>>
    %191 = vector.broadcast %190 : f32 to vector<16x128xf32>
    %192 = arith.mulf %191, %117 : vector<16x128xf32>
    %193 = arith.addf %177, %192 : vector<16x128xf32>
    %c164 = arith.constant 164 : index
    %194 = memref.load %arg1[%c164] : memref<202xf32, #tpu.memory_space<smem>>
    %195 = vector.broadcast %194 : f32 to vector<16x128xf32>
    %196 = arith.mulf %195, %141 : vector<16x128xf32>
    %197 = arith.addf %181, %196 : vector<16x128xf32>
    %c174 = arith.constant 174 : index
    %198 = memref.load %arg1[%c174] : memref<202xf32, #tpu.memory_space<smem>>
    %199 = vector.broadcast %198 : f32 to vector<16x128xf32>
    %200 = arith.mulf %199, %141 : vector<16x128xf32>
    %201 = arith.addf %185, %200 : vector<16x128xf32>
    %c184 = arith.constant 184 : index
    %202 = memref.load %arg1[%c184] : memref<202xf32, #tpu.memory_space<smem>>
    %203 = vector.broadcast %202 : f32 to vector<16x128xf32>
    %204 = arith.mulf %203, %141 : vector<16x128xf32>
    %205 = arith.addf %189, %204 : vector<16x128xf32>
    %c194 = arith.constant 194 : index
    %206 = memref.load %arg1[%c194] : memref<202xf32, #tpu.memory_space<smem>>
    %207 = vector.broadcast %206 : f32 to vector<16x128xf32>
    %208 = arith.mulf %207, %141 : vector<16x128xf32>
    %209 = arith.addf %193, %208 : vector<16x128xf32>
    %c165 = arith.constant 165 : index
    %210 = memref.load %arg1[%c165] : memref<202xf32, #tpu.memory_space<smem>>
    %211 = vector.broadcast %210 : f32 to vector<16x128xf32>
    %212 = arith.mulf %211, %165 : vector<16x128xf32>
    %213 = arith.addf %197, %212 : vector<16x128xf32>
    %c175 = arith.constant 175 : index
    %214 = memref.load %arg1[%c175] : memref<202xf32, #tpu.memory_space<smem>>
    %215 = vector.broadcast %214 : f32 to vector<16x128xf32>
    %216 = arith.mulf %215, %165 : vector<16x128xf32>
    %217 = arith.addf %201, %216 : vector<16x128xf32>
    %c185 = arith.constant 185 : index
    %218 = memref.load %arg1[%c185] : memref<202xf32, #tpu.memory_space<smem>>
    %219 = vector.broadcast %218 : f32 to vector<16x128xf32>
    %220 = arith.mulf %219, %165 : vector<16x128xf32>
    %221 = arith.addf %205, %220 : vector<16x128xf32>
    %c195 = arith.constant 195 : index
    %222 = memref.load %arg1[%c195] : memref<202xf32, #tpu.memory_space<smem>>
    %223 = vector.broadcast %222 : f32 to vector<16x128xf32>
    %224 = arith.mulf %223, %165 : vector<16x128xf32>
    %225 = arith.addf %209, %224 : vector<16x128xf32>
    %c1_i32_37 = arith.constant 1 : i32
    %226 = tpu.dynamic_rotate %93 by %c1_i32_37 dim 0 : vector<16x128xf32>, i32 -> vector<16x128xf32>
    %227 = arith.mulf %226, %28 : vector<16x128xf32>
    %c1_i32_38 = arith.constant 1 : i32
    %228 = tpu.dynamic_rotate %227 by %c1_i32_38 dim 1 : vector<16x128xf32>, i32 -> vector<16x128xf32>
    %229 = arith.mulf %228, %39 : vector<16x128xf32>
    %c20 = arith.constant 20 : index
    %230 = memref.load %arg1[%c20] : memref<202xf32, #tpu.memory_space<smem>>
    %231 = vector.broadcast %230 : f32 to vector<16x128xf32>
    %232 = arith.mulf %231, %229 : vector<16x128xf32>
    %c58 = arith.constant 58 : index
    %233 = memref.load %arg1[%c58] : memref<202xf32, #tpu.memory_space<smem>>
    %234 = vector.broadcast %233 : f32 to vector<16x128xf32>
    %235 = arith.mulf %234, %229 : vector<16x128xf32>
    %c38 = arith.constant 38 : index
    %236 = memref.load %arg1[%c38] : memref<202xf32, #tpu.memory_space<smem>>
    %237 = vector.broadcast %236 : f32 to vector<16x128xf32>
    %238 = arith.mulf %237, %229 : vector<16x128xf32>
    %c76 = arith.constant 76 : index
    %239 = memref.load %arg1[%c76] : memref<202xf32, #tpu.memory_space<smem>>
    %240 = vector.broadcast %239 : f32 to vector<16x128xf32>
    %241 = arith.mulf %240, %229 : vector<16x128xf32>
    %c21 = arith.constant 21 : index
    %242 = memref.load %arg1[%c21] : memref<202xf32, #tpu.memory_space<smem>>
    %243 = vector.broadcast %242 : f32 to vector<16x128xf32>
    %244 = arith.mulf %243, %227 : vector<16x128xf32>
    %245 = arith.addf %232, %244 : vector<16x128xf32>
    %c59 = arith.constant 59 : index
    %246 = memref.load %arg1[%c59] : memref<202xf32, #tpu.memory_space<smem>>
    %247 = vector.broadcast %246 : f32 to vector<16x128xf32>
    %248 = arith.mulf %247, %227 : vector<16x128xf32>
    %249 = arith.addf %235, %248 : vector<16x128xf32>
    %c39 = arith.constant 39 : index
    %250 = memref.load %arg1[%c39] : memref<202xf32, #tpu.memory_space<smem>>
    %251 = vector.broadcast %250 : f32 to vector<16x128xf32>
    %252 = arith.mulf %251, %227 : vector<16x128xf32>
    %253 = arith.addf %238, %252 : vector<16x128xf32>
    %c77 = arith.constant 77 : index
    %254 = memref.load %arg1[%c77] : memref<202xf32, #tpu.memory_space<smem>>
    %255 = vector.broadcast %254 : f32 to vector<16x128xf32>
    %256 = arith.mulf %255, %227 : vector<16x128xf32>
    %257 = arith.addf %241, %256 : vector<16x128xf32>
    %c127_i32 = arith.constant 127 : i32
    %258 = tpu.dynamic_rotate %227 by %c127_i32 dim 1 : vector<16x128xf32>, i32 -> vector<16x128xf32>
    %259 = arith.mulf %258, %61 : vector<16x128xf32>
    %c22 = arith.constant 22 : index
    %260 = memref.load %arg1[%c22] : memref<202xf32, #tpu.memory_space<smem>>
    %261 = vector.broadcast %260 : f32 to vector<16x128xf32>
    %262 = arith.mulf %261, %259 : vector<16x128xf32>
    %263 = arith.addf %245, %262 : vector<16x128xf32>
    %c60 = arith.constant 60 : index
    %264 = memref.load %arg1[%c60] : memref<202xf32, #tpu.memory_space<smem>>
    %265 = vector.broadcast %264 : f32 to vector<16x128xf32>
    %266 = arith.mulf %265, %259 : vector<16x128xf32>
    %267 = arith.addf %249, %266 : vector<16x128xf32>
    %c40 = arith.constant 40 : index
    %268 = memref.load %arg1[%c40] : memref<202xf32, #tpu.memory_space<smem>>
    %269 = vector.broadcast %268 : f32 to vector<16x128xf32>
    %270 = arith.mulf %269, %259 : vector<16x128xf32>
    %271 = arith.addf %253, %270 : vector<16x128xf32>
    %c78 = arith.constant 78 : index
    %272 = memref.load %arg1[%c78] : memref<202xf32, #tpu.memory_space<smem>>
    %273 = vector.broadcast %272 : f32 to vector<16x128xf32>
    %274 = arith.mulf %273, %259 : vector<16x128xf32>
    %275 = arith.addf %257, %274 : vector<16x128xf32>
    %c1_i32_39 = arith.constant 1 : i32
    %276 = tpu.dynamic_rotate %93 by %c1_i32_39 dim 1 : vector<16x128xf32>, i32 -> vector<16x128xf32>
    %277 = arith.mulf %276, %39 : vector<16x128xf32>
    %c23 = arith.constant 23 : index
    %278 = memref.load %arg1[%c23] : memref<202xf32, #tpu.memory_space<smem>>
    %279 = vector.broadcast %278 : f32 to vector<16x128xf32>
    %280 = arith.mulf %279, %277 : vector<16x128xf32>
    %281 = arith.addf %263, %280 : vector<16x128xf32>
    %c61 = arith.constant 61 : index
    %282 = memref.load %arg1[%c61] : memref<202xf32, #tpu.memory_space<smem>>
    %283 = vector.broadcast %282 : f32 to vector<16x128xf32>
    %284 = arith.mulf %283, %277 : vector<16x128xf32>
    %285 = arith.addf %267, %284 : vector<16x128xf32>
    %c41 = arith.constant 41 : index
    %286 = memref.load %arg1[%c41] : memref<202xf32, #tpu.memory_space<smem>>
    %287 = vector.broadcast %286 : f32 to vector<16x128xf32>
    %288 = arith.mulf %287, %277 : vector<16x128xf32>
    %289 = arith.addf %271, %288 : vector<16x128xf32>
    %c79 = arith.constant 79 : index
    %290 = memref.load %arg1[%c79] : memref<202xf32, #tpu.memory_space<smem>>
    %291 = vector.broadcast %290 : f32 to vector<16x128xf32>
    %292 = arith.mulf %291, %277 : vector<16x128xf32>
    %293 = arith.addf %275, %292 : vector<16x128xf32>
    %c24 = arith.constant 24 : index
    %294 = memref.load %arg1[%c24] : memref<202xf32, #tpu.memory_space<smem>>
    %295 = vector.broadcast %294 : f32 to vector<16x128xf32>
    %296 = arith.mulf %295, %93 : vector<16x128xf32>
    %297 = arith.addf %281, %296 : vector<16x128xf32>
    %c62 = arith.constant 62 : index
    %298 = memref.load %arg1[%c62] : memref<202xf32, #tpu.memory_space<smem>>
    %299 = vector.broadcast %298 : f32 to vector<16x128xf32>
    %300 = arith.mulf %299, %93 : vector<16x128xf32>
    %301 = arith.addf %285, %300 : vector<16x128xf32>
    %c42 = arith.constant 42 : index
    %302 = memref.load %arg1[%c42] : memref<202xf32, #tpu.memory_space<smem>>
    %303 = vector.broadcast %302 : f32 to vector<16x128xf32>
    %304 = arith.mulf %303, %93 : vector<16x128xf32>
    %305 = arith.addf %289, %304 : vector<16x128xf32>
    %c80 = arith.constant 80 : index
    %306 = memref.load %arg1[%c80] : memref<202xf32, #tpu.memory_space<smem>>
    %307 = vector.broadcast %306 : f32 to vector<16x128xf32>
    %308 = arith.mulf %307, %93 : vector<16x128xf32>
    %309 = arith.addf %293, %308 : vector<16x128xf32>
    %c127_i32_40 = arith.constant 127 : i32
    %310 = tpu.dynamic_rotate %93 by %c127_i32_40 dim 1 : vector<16x128xf32>, i32 -> vector<16x128xf32>
    %311 = arith.mulf %310, %61 : vector<16x128xf32>
    %c25 = arith.constant 25 : index
    %312 = memref.load %arg1[%c25] : memref<202xf32, #tpu.memory_space<smem>>
    %313 = vector.broadcast %312 : f32 to vector<16x128xf32>
    %314 = arith.mulf %313, %311 : vector<16x128xf32>
    %315 = arith.addf %297, %314 : vector<16x128xf32>
    %c63 = arith.constant 63 : index
    %316 = memref.load %arg1[%c63] : memref<202xf32, #tpu.memory_space<smem>>
    %317 = vector.broadcast %316 : f32 to vector<16x128xf32>
    %318 = arith.mulf %317, %311 : vector<16x128xf32>
    %319 = arith.addf %301, %318 : vector<16x128xf32>
    %c43 = arith.constant 43 : index
    %320 = memref.load %arg1[%c43] : memref<202xf32, #tpu.memory_space<smem>>
    %321 = vector.broadcast %320 : f32 to vector<16x128xf32>
    %322 = arith.mulf %321, %311 : vector<16x128xf32>
    %323 = arith.addf %305, %322 : vector<16x128xf32>
    %c81 = arith.constant 81 : index
    %324 = memref.load %arg1[%c81] : memref<202xf32, #tpu.memory_space<smem>>
    %325 = vector.broadcast %324 : f32 to vector<16x128xf32>
    %326 = arith.mulf %325, %311 : vector<16x128xf32>
    %327 = arith.addf %309, %326 : vector<16x128xf32>
    %c15_i32 = arith.constant 15 : i32
    %328 = tpu.dynamic_rotate %93 by %c15_i32 dim 0 : vector<16x128xf32>, i32 -> vector<16x128xf32>
    %329 = arith.mulf %328, %50 : vector<16x128xf32>
    %c1_i32_41 = arith.constant 1 : i32
    %330 = tpu.dynamic_rotate %329 by %c1_i32_41 dim 1 : vector<16x128xf32>, i32 -> vector<16x128xf32>
    %331 = arith.mulf %330, %39 : vector<16x128xf32>
    %c26 = arith.constant 26 : index
    %332 = memref.load %arg1[%c26] : memref<202xf32, #tpu.memory_space<smem>>
    %333 = vector.broadcast %332 : f32 to vector<16x128xf32>
    %334 = arith.mulf %333, %331 : vector<16x128xf32>
    %335 = arith.addf %315, %334 : vector<16x128xf32>
    %c64 = arith.constant 64 : index
    %336 = memref.load %arg1[%c64] : memref<202xf32, #tpu.memory_space<smem>>
    %337 = vector.broadcast %336 : f32 to vector<16x128xf32>
    %338 = arith.mulf %337, %331 : vector<16x128xf32>
    %339 = arith.addf %319, %338 : vector<16x128xf32>
    %c44 = arith.constant 44 : index
    %340 = memref.load %arg1[%c44] : memref<202xf32, #tpu.memory_space<smem>>
    %341 = vector.broadcast %340 : f32 to vector<16x128xf32>
    %342 = arith.mulf %341, %331 : vector<16x128xf32>
    %343 = arith.addf %323, %342 : vector<16x128xf32>
    %c82 = arith.constant 82 : index
    %344 = memref.load %arg1[%c82] : memref<202xf32, #tpu.memory_space<smem>>
    %345 = vector.broadcast %344 : f32 to vector<16x128xf32>
    %346 = arith.mulf %345, %331 : vector<16x128xf32>
    %347 = arith.addf %327, %346 : vector<16x128xf32>
    %c27 = arith.constant 27 : index
    %348 = memref.load %arg1[%c27] : memref<202xf32, #tpu.memory_space<smem>>
    %349 = vector.broadcast %348 : f32 to vector<16x128xf32>
    %350 = arith.mulf %349, %329 : vector<16x128xf32>
    %351 = arith.addf %335, %350 : vector<16x128xf32>
    %c65 = arith.constant 65 : index
    %352 = memref.load %arg1[%c65] : memref<202xf32, #tpu.memory_space<smem>>
    %353 = vector.broadcast %352 : f32 to vector<16x128xf32>
    %354 = arith.mulf %353, %329 : vector<16x128xf32>
    %355 = arith.addf %339, %354 : vector<16x128xf32>
    %c45 = arith.constant 45 : index
    %356 = memref.load %arg1[%c45] : memref<202xf32, #tpu.memory_space<smem>>
    %357 = vector.broadcast %356 : f32 to vector<16x128xf32>
    %358 = arith.mulf %357, %329 : vector<16x128xf32>
    %359 = arith.addf %343, %358 : vector<16x128xf32>
    %c83 = arith.constant 83 : index
    %360 = memref.load %arg1[%c83] : memref<202xf32, #tpu.memory_space<smem>>
    %361 = vector.broadcast %360 : f32 to vector<16x128xf32>
    %362 = arith.mulf %361, %329 : vector<16x128xf32>
    %363 = arith.addf %347, %362 : vector<16x128xf32>
    %c127_i32_42 = arith.constant 127 : i32
    %364 = tpu.dynamic_rotate %329 by %c127_i32_42 dim 1 : vector<16x128xf32>, i32 -> vector<16x128xf32>
    %365 = arith.mulf %364, %61 : vector<16x128xf32>
    %c28 = arith.constant 28 : index
    %366 = memref.load %arg1[%c28] : memref<202xf32, #tpu.memory_space<smem>>
    %367 = vector.broadcast %366 : f32 to vector<16x128xf32>
    %368 = arith.mulf %367, %365 : vector<16x128xf32>
    %369 = arith.addf %351, %368 : vector<16x128xf32>
    %c66 = arith.constant 66 : index
    %370 = memref.load %arg1[%c66] : memref<202xf32, #tpu.memory_space<smem>>
    %371 = vector.broadcast %370 : f32 to vector<16x128xf32>
    %372 = arith.mulf %371, %365 : vector<16x128xf32>
    %373 = arith.addf %355, %372 : vector<16x128xf32>
    %c46 = arith.constant 46 : index
    %374 = memref.load %arg1[%c46] : memref<202xf32, #tpu.memory_space<smem>>
    %375 = vector.broadcast %374 : f32 to vector<16x128xf32>
    %376 = arith.mulf %375, %365 : vector<16x128xf32>
    %377 = arith.addf %359, %376 : vector<16x128xf32>
    %c84 = arith.constant 84 : index
    %378 = memref.load %arg1[%c84] : memref<202xf32, #tpu.memory_space<smem>>
    %379 = vector.broadcast %378 : f32 to vector<16x128xf32>
    %380 = arith.mulf %379, %365 : vector<16x128xf32>
    %381 = arith.addf %363, %380 : vector<16x128xf32>
    %c1_i32_43 = arith.constant 1 : i32
    %382 = tpu.dynamic_rotate %117 by %c1_i32_43 dim 0 : vector<16x128xf32>, i32 -> vector<16x128xf32>
    %383 = arith.mulf %382, %28 : vector<16x128xf32>
    %c1_i32_44 = arith.constant 1 : i32
    %384 = tpu.dynamic_rotate %383 by %c1_i32_44 dim 1 : vector<16x128xf32>, i32 -> vector<16x128xf32>
    %385 = arith.mulf %384, %39 : vector<16x128xf32>
    %c29 = arith.constant 29 : index
    %386 = memref.load %arg1[%c29] : memref<202xf32, #tpu.memory_space<smem>>
    %387 = vector.broadcast %386 : f32 to vector<16x128xf32>
    %388 = arith.mulf %387, %385 : vector<16x128xf32>
    %389 = arith.addf %369, %388 : vector<16x128xf32>
    %c67 = arith.constant 67 : index
    %390 = memref.load %arg1[%c67] : memref<202xf32, #tpu.memory_space<smem>>
    %391 = vector.broadcast %390 : f32 to vector<16x128xf32>
    %392 = arith.mulf %391, %385 : vector<16x128xf32>
    %393 = arith.addf %373, %392 : vector<16x128xf32>
    %c47 = arith.constant 47 : index
    %394 = memref.load %arg1[%c47] : memref<202xf32, #tpu.memory_space<smem>>
    %395 = vector.broadcast %394 : f32 to vector<16x128xf32>
    %396 = arith.mulf %395, %385 : vector<16x128xf32>
    %397 = arith.addf %377, %396 : vector<16x128xf32>
    %c85 = arith.constant 85 : index
    %398 = memref.load %arg1[%c85] : memref<202xf32, #tpu.memory_space<smem>>
    %399 = vector.broadcast %398 : f32 to vector<16x128xf32>
    %400 = arith.mulf %399, %385 : vector<16x128xf32>
    %401 = arith.addf %381, %400 : vector<16x128xf32>
    %c30 = arith.constant 30 : index
    %402 = memref.load %arg1[%c30] : memref<202xf32, #tpu.memory_space<smem>>
    %403 = vector.broadcast %402 : f32 to vector<16x128xf32>
    %404 = arith.mulf %403, %383 : vector<16x128xf32>
    %405 = arith.addf %389, %404 : vector<16x128xf32>
    %c68 = arith.constant 68 : index
    %406 = memref.load %arg1[%c68] : memref<202xf32, #tpu.memory_space<smem>>
    %407 = vector.broadcast %406 : f32 to vector<16x128xf32>
    %408 = arith.mulf %407, %383 : vector<16x128xf32>
    %409 = arith.addf %393, %408 : vector<16x128xf32>
    %c48 = arith.constant 48 : index
    %410 = memref.load %arg1[%c48] : memref<202xf32, #tpu.memory_space<smem>>
    %411 = vector.broadcast %410 : f32 to vector<16x128xf32>
    %412 = arith.mulf %411, %383 : vector<16x128xf32>
    %413 = arith.addf %397, %412 : vector<16x128xf32>
    %c86 = arith.constant 86 : index
    %414 = memref.load %arg1[%c86] : memref<202xf32, #tpu.memory_space<smem>>
    %415 = vector.broadcast %414 : f32 to vector<16x128xf32>
    %416 = arith.mulf %415, %383 : vector<16x128xf32>
    %417 = arith.addf %401, %416 : vector<16x128xf32>
    %c127_i32_45 = arith.constant 127 : i32
    %418 = tpu.dynamic_rotate %383 by %c127_i32_45 dim 1 : vector<16x128xf32>, i32 -> vector<16x128xf32>
    %419 = arith.mulf %418, %61 : vector<16x128xf32>
    %c31 = arith.constant 31 : index
    %420 = memref.load %arg1[%c31] : memref<202xf32, #tpu.memory_space<smem>>
    %421 = vector.broadcast %420 : f32 to vector<16x128xf32>
    %422 = arith.mulf %421, %419 : vector<16x128xf32>
    %423 = arith.addf %405, %422 : vector<16x128xf32>
    %c69 = arith.constant 69 : index
    %424 = memref.load %arg1[%c69] : memref<202xf32, #tpu.memory_space<smem>>
    %425 = vector.broadcast %424 : f32 to vector<16x128xf32>
    %426 = arith.mulf %425, %419 : vector<16x128xf32>
    %427 = arith.addf %409, %426 : vector<16x128xf32>
    %c49 = arith.constant 49 : index
    %428 = memref.load %arg1[%c49] : memref<202xf32, #tpu.memory_space<smem>>
    %429 = vector.broadcast %428 : f32 to vector<16x128xf32>
    %430 = arith.mulf %429, %419 : vector<16x128xf32>
    %431 = arith.addf %413, %430 : vector<16x128xf32>
    %c87 = arith.constant 87 : index
    %432 = memref.load %arg1[%c87] : memref<202xf32, #tpu.memory_space<smem>>
    %433 = vector.broadcast %432 : f32 to vector<16x128xf32>
    %434 = arith.mulf %433, %419 : vector<16x128xf32>
    %435 = arith.addf %417, %434 : vector<16x128xf32>
    %c1_i32_46 = arith.constant 1 : i32
    %436 = tpu.dynamic_rotate %117 by %c1_i32_46 dim 1 : vector<16x128xf32>, i32 -> vector<16x128xf32>
    %437 = arith.mulf %436, %39 : vector<16x128xf32>
    %c32 = arith.constant 32 : index
    %438 = memref.load %arg1[%c32] : memref<202xf32, #tpu.memory_space<smem>>
    %439 = vector.broadcast %438 : f32 to vector<16x128xf32>
    %440 = arith.mulf %439, %437 : vector<16x128xf32>
    %441 = arith.addf %423, %440 : vector<16x128xf32>
    %c70 = arith.constant 70 : index
    %442 = memref.load %arg1[%c70] : memref<202xf32, #tpu.memory_space<smem>>
    %443 = vector.broadcast %442 : f32 to vector<16x128xf32>
    %444 = arith.mulf %443, %437 : vector<16x128xf32>
    %445 = arith.addf %427, %444 : vector<16x128xf32>
    %c50 = arith.constant 50 : index
    %446 = memref.load %arg1[%c50] : memref<202xf32, #tpu.memory_space<smem>>
    %447 = vector.broadcast %446 : f32 to vector<16x128xf32>
    %448 = arith.mulf %447, %437 : vector<16x128xf32>
    %449 = arith.addf %431, %448 : vector<16x128xf32>
    %c88 = arith.constant 88 : index
    %450 = memref.load %arg1[%c88] : memref<202xf32, #tpu.memory_space<smem>>
    %451 = vector.broadcast %450 : f32 to vector<16x128xf32>
    %452 = arith.mulf %451, %437 : vector<16x128xf32>
    %453 = arith.addf %435, %452 : vector<16x128xf32>
    %c33 = arith.constant 33 : index
    %454 = memref.load %arg1[%c33] : memref<202xf32, #tpu.memory_space<smem>>
    %455 = vector.broadcast %454 : f32 to vector<16x128xf32>
    %456 = arith.mulf %455, %117 : vector<16x128xf32>
    %457 = arith.addf %441, %456 : vector<16x128xf32>
    %c71 = arith.constant 71 : index
    %458 = memref.load %arg1[%c71] : memref<202xf32, #tpu.memory_space<smem>>
    %459 = vector.broadcast %458 : f32 to vector<16x128xf32>
    %460 = arith.mulf %459, %117 : vector<16x128xf32>
    %461 = arith.addf %445, %460 : vector<16x128xf32>
    %c51 = arith.constant 51 : index
    %462 = memref.load %arg1[%c51] : memref<202xf32, #tpu.memory_space<smem>>
    %463 = vector.broadcast %462 : f32 to vector<16x128xf32>
    %464 = arith.mulf %463, %117 : vector<16x128xf32>
    %465 = arith.addf %449, %464 : vector<16x128xf32>
    %c89 = arith.constant 89 : index
    %466 = memref.load %arg1[%c89] : memref<202xf32, #tpu.memory_space<smem>>
    %467 = vector.broadcast %466 : f32 to vector<16x128xf32>
    %468 = arith.mulf %467, %117 : vector<16x128xf32>
    %469 = arith.addf %453, %468 : vector<16x128xf32>
    %c127_i32_47 = arith.constant 127 : i32
    %470 = tpu.dynamic_rotate %117 by %c127_i32_47 dim 1 : vector<16x128xf32>, i32 -> vector<16x128xf32>
    %471 = arith.mulf %470, %61 : vector<16x128xf32>
    %c34 = arith.constant 34 : index
    %472 = memref.load %arg1[%c34] : memref<202xf32, #tpu.memory_space<smem>>
    %473 = vector.broadcast %472 : f32 to vector<16x128xf32>
    %474 = arith.mulf %473, %471 : vector<16x128xf32>
    %475 = arith.addf %457, %474 : vector<16x128xf32>
    %c72 = arith.constant 72 : index
    %476 = memref.load %arg1[%c72] : memref<202xf32, #tpu.memory_space<smem>>
    %477 = vector.broadcast %476 : f32 to vector<16x128xf32>
    %478 = arith.mulf %477, %471 : vector<16x128xf32>
    %479 = arith.addf %461, %478 : vector<16x128xf32>
    %c52 = arith.constant 52 : index
    %480 = memref.load %arg1[%c52] : memref<202xf32, #tpu.memory_space<smem>>
    %481 = vector.broadcast %480 : f32 to vector<16x128xf32>
    %482 = arith.mulf %481, %471 : vector<16x128xf32>
    %483 = arith.addf %465, %482 : vector<16x128xf32>
    %c90 = arith.constant 90 : index
    %484 = memref.load %arg1[%c90] : memref<202xf32, #tpu.memory_space<smem>>
    %485 = vector.broadcast %484 : f32 to vector<16x128xf32>
    %486 = arith.mulf %485, %471 : vector<16x128xf32>
    %487 = arith.addf %469, %486 : vector<16x128xf32>
    %c15_i32_48 = arith.constant 15 : i32
    %488 = tpu.dynamic_rotate %117 by %c15_i32_48 dim 0 : vector<16x128xf32>, i32 -> vector<16x128xf32>
    %489 = arith.mulf %488, %50 : vector<16x128xf32>
    %c1_i32_49 = arith.constant 1 : i32
    %490 = tpu.dynamic_rotate %489 by %c1_i32_49 dim 1 : vector<16x128xf32>, i32 -> vector<16x128xf32>
    %491 = arith.mulf %490, %39 : vector<16x128xf32>
    %c35 = arith.constant 35 : index
    %492 = memref.load %arg1[%c35] : memref<202xf32, #tpu.memory_space<smem>>
    %493 = vector.broadcast %492 : f32 to vector<16x128xf32>
    %494 = arith.mulf %493, %491 : vector<16x128xf32>
    %495 = arith.addf %475, %494 : vector<16x128xf32>
    %c73 = arith.constant 73 : index
    %496 = memref.load %arg1[%c73] : memref<202xf32, #tpu.memory_space<smem>>
    %497 = vector.broadcast %496 : f32 to vector<16x128xf32>
    %498 = arith.mulf %497, %491 : vector<16x128xf32>
    %499 = arith.addf %479, %498 : vector<16x128xf32>
    %c53 = arith.constant 53 : index
    %500 = memref.load %arg1[%c53] : memref<202xf32, #tpu.memory_space<smem>>
    %501 = vector.broadcast %500 : f32 to vector<16x128xf32>
    %502 = arith.mulf %501, %491 : vector<16x128xf32>
    %503 = arith.addf %483, %502 : vector<16x128xf32>
    %c91 = arith.constant 91 : index
    %504 = memref.load %arg1[%c91] : memref<202xf32, #tpu.memory_space<smem>>
    %505 = vector.broadcast %504 : f32 to vector<16x128xf32>
    %506 = arith.mulf %505, %491 : vector<16x128xf32>
    %507 = arith.addf %487, %506 : vector<16x128xf32>
    %c36 = arith.constant 36 : index
    %508 = memref.load %arg1[%c36] : memref<202xf32, #tpu.memory_space<smem>>
    %509 = vector.broadcast %508 : f32 to vector<16x128xf32>
    %510 = arith.mulf %509, %489 : vector<16x128xf32>
    %511 = arith.addf %495, %510 : vector<16x128xf32>
    %c74 = arith.constant 74 : index
    %512 = memref.load %arg1[%c74] : memref<202xf32, #tpu.memory_space<smem>>
    %513 = vector.broadcast %512 : f32 to vector<16x128xf32>
    %514 = arith.mulf %513, %489 : vector<16x128xf32>
    %515 = arith.addf %499, %514 : vector<16x128xf32>
    %c54 = arith.constant 54 : index
    %516 = memref.load %arg1[%c54] : memref<202xf32, #tpu.memory_space<smem>>
    %517 = vector.broadcast %516 : f32 to vector<16x128xf32>
    %518 = arith.mulf %517, %489 : vector<16x128xf32>
    %519 = arith.addf %503, %518 : vector<16x128xf32>
    %c92 = arith.constant 92 : index
    %520 = memref.load %arg1[%c92] : memref<202xf32, #tpu.memory_space<smem>>
    %521 = vector.broadcast %520 : f32 to vector<16x128xf32>
    %522 = arith.mulf %521, %489 : vector<16x128xf32>
    %523 = arith.addf %507, %522 : vector<16x128xf32>
    %c127_i32_50 = arith.constant 127 : i32
    %524 = tpu.dynamic_rotate %489 by %c127_i32_50 dim 1 : vector<16x128xf32>, i32 -> vector<16x128xf32>
    %525 = arith.mulf %524, %61 : vector<16x128xf32>
    %c37 = arith.constant 37 : index
    %526 = memref.load %arg1[%c37] : memref<202xf32, #tpu.memory_space<smem>>
    %527 = vector.broadcast %526 : f32 to vector<16x128xf32>
    %528 = arith.mulf %527, %525 : vector<16x128xf32>
    %529 = arith.addf %511, %528 : vector<16x128xf32>
    %c75 = arith.constant 75 : index
    %530 = memref.load %arg1[%c75] : memref<202xf32, #tpu.memory_space<smem>>
    %531 = vector.broadcast %530 : f32 to vector<16x128xf32>
    %532 = arith.mulf %531, %525 : vector<16x128xf32>
    %533 = arith.addf %515, %532 : vector<16x128xf32>
    %c55 = arith.constant 55 : index
    %534 = memref.load %arg1[%c55] : memref<202xf32, #tpu.memory_space<smem>>
    %535 = vector.broadcast %534 : f32 to vector<16x128xf32>
    %536 = arith.mulf %535, %525 : vector<16x128xf32>
    %537 = arith.addf %519, %536 : vector<16x128xf32>
    %c93 = arith.constant 93 : index
    %538 = memref.load %arg1[%c93] : memref<202xf32, #tpu.memory_space<smem>>
    %539 = vector.broadcast %538 : f32 to vector<16x128xf32>
    %540 = arith.mulf %539, %525 : vector<16x128xf32>
    %541 = arith.addf %523, %540 : vector<16x128xf32>
    %c56 = arith.constant 56 : index
    %542 = memref.load %arg1[%c56] : memref<202xf32, #tpu.memory_space<smem>>
    %543 = vector.broadcast %542 : f32 to vector<16x128xf32>
    %544 = arith.addf %529, %543 : vector<16x128xf32>
    %545 = arith.negf %544 : vector<16x128xf32>
    %546 = math.exp %545 : vector<16x128xf32>
    %cst_51 = arith.constant 1.000000e+00 : f32
    %547 = vector.broadcast %cst_51 : f32 to vector<16x128xf32>
    %548 = arith.addf %547, %546 : vector<16x128xf32>
    %549 = arith.divf %547, %548 : vector<16x128xf32>
    %550 = arith.mulf %544, %549 : vector<16x128xf32>
    %c57 = arith.constant 57 : index
    %551 = memref.load %arg1[%c57] : memref<202xf32, #tpu.memory_space<smem>>
    %552 = vector.broadcast %551 : f32 to vector<16x128xf32>
    %553 = arith.addf %537, %552 : vector<16x128xf32>
    %554 = arith.negf %553 : vector<16x128xf32>
    %555 = math.exp %554 : vector<16x128xf32>
    %cst_52 = arith.constant 1.000000e+00 : f32
    %556 = vector.broadcast %cst_52 : f32 to vector<16x128xf32>
    %557 = arith.addf %556, %555 : vector<16x128xf32>
    %558 = arith.divf %556, %557 : vector<16x128xf32>
    %559 = arith.mulf %553, %558 : vector<16x128xf32>
    %c94 = arith.constant 94 : index
    %560 = memref.load %arg1[%c94] : memref<202xf32, #tpu.memory_space<smem>>
    %561 = vector.broadcast %560 : f32 to vector<16x128xf32>
    %562 = arith.addf %533, %561 : vector<16x128xf32>
    %563 = arith.negf %562 : vector<16x128xf32>
    %564 = math.exp %563 : vector<16x128xf32>
    %cst_53 = arith.constant 1.000000e+00 : f32
    %565 = vector.broadcast %cst_53 : f32 to vector<16x128xf32>
    %566 = arith.addf %565, %564 : vector<16x128xf32>
    %567 = arith.divf %565, %566 : vector<16x128xf32>
    %568 = arith.mulf %562, %567 : vector<16x128xf32>
    %c95 = arith.constant 95 : index
    %569 = memref.load %arg1[%c95] : memref<202xf32, #tpu.memory_space<smem>>
    %570 = vector.broadcast %569 : f32 to vector<16x128xf32>
    %571 = arith.addf %541, %570 : vector<16x128xf32>
    %572 = arith.negf %571 : vector<16x128xf32>
    %573 = math.exp %572 : vector<16x128xf32>
    %cst_54 = arith.constant 1.000000e+00 : f32
    %574 = vector.broadcast %cst_54 : f32 to vector<16x128xf32>
    %575 = arith.addf %574, %573 : vector<16x128xf32>
    %576 = arith.divf %574, %575 : vector<16x128xf32>
    %577 = arith.mulf %571, %576 : vector<16x128xf32>
    %c160 = arith.constant 160 : index
    %578 = memref.load %arg1[%c160] : memref<202xf32, #tpu.memory_space<smem>>
    %579 = vector.broadcast %578 : f32 to vector<16x128xf32>
    %580 = arith.mulf %579, %550 : vector<16x128xf32>
    %581 = arith.addf %213, %580 : vector<16x128xf32>
    %c170 = arith.constant 170 : index
    %582 = memref.load %arg1[%c170] : memref<202xf32, #tpu.memory_space<smem>>
    %583 = vector.broadcast %582 : f32 to vector<16x128xf32>
    %584 = arith.mulf %583, %550 : vector<16x128xf32>
    %585 = arith.addf %217, %584 : vector<16x128xf32>
    %c180 = arith.constant 180 : index
    %586 = memref.load %arg1[%c180] : memref<202xf32, #tpu.memory_space<smem>>
    %587 = vector.broadcast %586 : f32 to vector<16x128xf32>
    %588 = arith.mulf %587, %550 : vector<16x128xf32>
    %589 = arith.addf %221, %588 : vector<16x128xf32>
    %c190 = arith.constant 190 : index
    %590 = memref.load %arg1[%c190] : memref<202xf32, #tpu.memory_space<smem>>
    %591 = vector.broadcast %590 : f32 to vector<16x128xf32>
    %592 = arith.mulf %591, %550 : vector<16x128xf32>
    %593 = arith.addf %225, %592 : vector<16x128xf32>
    %c161 = arith.constant 161 : index
    %594 = memref.load %arg1[%c161] : memref<202xf32, #tpu.memory_space<smem>>
    %595 = vector.broadcast %594 : f32 to vector<16x128xf32>
    %596 = arith.mulf %595, %559 : vector<16x128xf32>
    %597 = arith.addf %581, %596 : vector<16x128xf32>
    %c171 = arith.constant 171 : index
    %598 = memref.load %arg1[%c171] : memref<202xf32, #tpu.memory_space<smem>>
    %599 = vector.broadcast %598 : f32 to vector<16x128xf32>
    %600 = arith.mulf %599, %559 : vector<16x128xf32>
    %601 = arith.addf %585, %600 : vector<16x128xf32>
    %c181 = arith.constant 181 : index
    %602 = memref.load %arg1[%c181] : memref<202xf32, #tpu.memory_space<smem>>
    %603 = vector.broadcast %602 : f32 to vector<16x128xf32>
    %604 = arith.mulf %603, %559 : vector<16x128xf32>
    %605 = arith.addf %589, %604 : vector<16x128xf32>
    %c191 = arith.constant 191 : index
    %606 = memref.load %arg1[%c191] : memref<202xf32, #tpu.memory_space<smem>>
    %607 = vector.broadcast %606 : f32 to vector<16x128xf32>
    %608 = arith.mulf %607, %559 : vector<16x128xf32>
    %609 = arith.addf %593, %608 : vector<16x128xf32>
    %c162 = arith.constant 162 : index
    %610 = memref.load %arg1[%c162] : memref<202xf32, #tpu.memory_space<smem>>
    %611 = vector.broadcast %610 : f32 to vector<16x128xf32>
    %612 = arith.mulf %611, %568 : vector<16x128xf32>
    %613 = arith.addf %597, %612 : vector<16x128xf32>
    %c172 = arith.constant 172 : index
    %614 = memref.load %arg1[%c172] : memref<202xf32, #tpu.memory_space<smem>>
    %615 = vector.broadcast %614 : f32 to vector<16x128xf32>
    %616 = arith.mulf %615, %568 : vector<16x128xf32>
    %617 = arith.addf %601, %616 : vector<16x128xf32>
    %c182 = arith.constant 182 : index
    %618 = memref.load %arg1[%c182] : memref<202xf32, #tpu.memory_space<smem>>
    %619 = vector.broadcast %618 : f32 to vector<16x128xf32>
    %620 = arith.mulf %619, %568 : vector<16x128xf32>
    %621 = arith.addf %605, %620 : vector<16x128xf32>
    %c192 = arith.constant 192 : index
    %622 = memref.load %arg1[%c192] : memref<202xf32, #tpu.memory_space<smem>>
    %623 = vector.broadcast %622 : f32 to vector<16x128xf32>
    %624 = arith.mulf %623, %568 : vector<16x128xf32>
    %625 = arith.addf %609, %624 : vector<16x128xf32>
    %c163 = arith.constant 163 : index
    %626 = memref.load %arg1[%c163] : memref<202xf32, #tpu.memory_space<smem>>
    %627 = vector.broadcast %626 : f32 to vector<16x128xf32>
    %628 = arith.mulf %627, %577 : vector<16x128xf32>
    %629 = arith.addf %613, %628 : vector<16x128xf32>
    %c173 = arith.constant 173 : index
    %630 = memref.load %arg1[%c173] : memref<202xf32, #tpu.memory_space<smem>>
    %631 = vector.broadcast %630 : f32 to vector<16x128xf32>
    %632 = arith.mulf %631, %577 : vector<16x128xf32>
    %633 = arith.addf %617, %632 : vector<16x128xf32>
    %c183 = arith.constant 183 : index
    %634 = memref.load %arg1[%c183] : memref<202xf32, #tpu.memory_space<smem>>
    %635 = vector.broadcast %634 : f32 to vector<16x128xf32>
    %636 = arith.mulf %635, %577 : vector<16x128xf32>
    %637 = arith.addf %621, %636 : vector<16x128xf32>
    %c193 = arith.constant 193 : index
    %638 = memref.load %arg1[%c193] : memref<202xf32, #tpu.memory_space<smem>>
    %639 = vector.broadcast %638 : f32 to vector<16x128xf32>
    %640 = arith.mulf %639, %577 : vector<16x128xf32>
    %641 = arith.addf %625, %640 : vector<16x128xf32>
    %c96 = arith.constant 96 : index
    %642 = memref.load %arg1[%c96] : memref<202xf32, #tpu.memory_space<smem>>
    %643 = vector.broadcast %642 : f32 to vector<16x128xf32>
    %644 = arith.mulf %643, %141 : vector<16x128xf32>
    %c97 = arith.constant 97 : index
    %645 = memref.load %arg1[%c97] : memref<202xf32, #tpu.memory_space<smem>>
    %646 = vector.broadcast %645 : f32 to vector<16x128xf32>
    %647 = arith.mulf %646, %165 : vector<16x128xf32>
    %648 = arith.addf %644, %647 : vector<16x128xf32>
    %c104 = arith.constant 104 : index
    %649 = memref.load %arg1[%c104] : memref<202xf32, #tpu.memory_space<smem>>
    %650 = vector.broadcast %649 : f32 to vector<16x128xf32>
    %651 = arith.addf %648, %650 : vector<16x128xf32>
    %652 = arith.negf %651 : vector<16x128xf32>
    %653 = math.exp %652 : vector<16x128xf32>
    %cst_55 = arith.constant 1.000000e+00 : f32
    %654 = vector.broadcast %cst_55 : f32 to vector<16x128xf32>
    %655 = arith.addf %654, %653 : vector<16x128xf32>
    %656 = arith.divf %654, %655 : vector<16x128xf32>
    %657 = arith.mulf %651, %656 : vector<16x128xf32>
    %c98 = arith.constant 98 : index
    %658 = memref.load %arg1[%c98] : memref<202xf32, #tpu.memory_space<smem>>
    %659 = vector.broadcast %658 : f32 to vector<16x128xf32>
    %660 = arith.mulf %659, %141 : vector<16x128xf32>
    %c99 = arith.constant 99 : index
    %661 = memref.load %arg1[%c99] : memref<202xf32, #tpu.memory_space<smem>>
    %662 = vector.broadcast %661 : f32 to vector<16x128xf32>
    %663 = arith.mulf %662, %165 : vector<16x128xf32>
    %664 = arith.addf %660, %663 : vector<16x128xf32>
    %c105 = arith.constant 105 : index
    %665 = memref.load %arg1[%c105] : memref<202xf32, #tpu.memory_space<smem>>
    %666 = vector.broadcast %665 : f32 to vector<16x128xf32>
    %667 = arith.addf %664, %666 : vector<16x128xf32>
    %668 = arith.negf %667 : vector<16x128xf32>
    %669 = math.exp %668 : vector<16x128xf32>
    %cst_56 = arith.constant 1.000000e+00 : f32
    %670 = vector.broadcast %cst_56 : f32 to vector<16x128xf32>
    %671 = arith.addf %670, %669 : vector<16x128xf32>
    %672 = arith.divf %670, %671 : vector<16x128xf32>
    %673 = arith.mulf %667, %672 : vector<16x128xf32>
    %c100 = arith.constant 100 : index
    %674 = memref.load %arg1[%c100] : memref<202xf32, #tpu.memory_space<smem>>
    %675 = vector.broadcast %674 : f32 to vector<16x128xf32>
    %676 = arith.mulf %675, %141 : vector<16x128xf32>
    %c101 = arith.constant 101 : index
    %677 = memref.load %arg1[%c101] : memref<202xf32, #tpu.memory_space<smem>>
    %678 = vector.broadcast %677 : f32 to vector<16x128xf32>
    %679 = arith.mulf %678, %165 : vector<16x128xf32>
    %680 = arith.addf %676, %679 : vector<16x128xf32>
    %c106 = arith.constant 106 : index
    %681 = memref.load %arg1[%c106] : memref<202xf32, #tpu.memory_space<smem>>
    %682 = vector.broadcast %681 : f32 to vector<16x128xf32>
    %683 = arith.addf %680, %682 : vector<16x128xf32>
    %684 = arith.negf %683 : vector<16x128xf32>
    %685 = math.exp %684 : vector<16x128xf32>
    %cst_57 = arith.constant 1.000000e+00 : f32
    %686 = vector.broadcast %cst_57 : f32 to vector<16x128xf32>
    %687 = arith.addf %686, %685 : vector<16x128xf32>
    %688 = arith.divf %686, %687 : vector<16x128xf32>
    %689 = arith.mulf %683, %688 : vector<16x128xf32>
    %c102 = arith.constant 102 : index
    %690 = memref.load %arg1[%c102] : memref<202xf32, #tpu.memory_space<smem>>
    %691 = vector.broadcast %690 : f32 to vector<16x128xf32>
    %692 = arith.mulf %691, %141 : vector<16x128xf32>
    %c103 = arith.constant 103 : index
    %693 = memref.load %arg1[%c103] : memref<202xf32, #tpu.memory_space<smem>>
    %694 = vector.broadcast %693 : f32 to vector<16x128xf32>
    %695 = arith.mulf %694, %165 : vector<16x128xf32>
    %696 = arith.addf %692, %695 : vector<16x128xf32>
    %c107 = arith.constant 107 : index
    %697 = memref.load %arg1[%c107] : memref<202xf32, #tpu.memory_space<smem>>
    %698 = vector.broadcast %697 : f32 to vector<16x128xf32>
    %699 = arith.addf %696, %698 : vector<16x128xf32>
    %700 = arith.negf %699 : vector<16x128xf32>
    %701 = math.exp %700 : vector<16x128xf32>
    %cst_58 = arith.constant 1.000000e+00 : f32
    %702 = vector.broadcast %cst_58 : f32 to vector<16x128xf32>
    %703 = arith.addf %702, %701 : vector<16x128xf32>
    %704 = arith.divf %702, %703 : vector<16x128xf32>
    %705 = arith.mulf %699, %704 : vector<16x128xf32>
    %c1_i32_59 = arith.constant 1 : i32
    %706 = tpu.dynamic_rotate %657 by %c1_i32_59 dim 0 : vector<16x128xf32>, i32 -> vector<16x128xf32>
    %707 = arith.mulf %706, %28 : vector<16x128xf32>
    %c1_i32_60 = arith.constant 1 : i32
    %708 = tpu.dynamic_rotate %707 by %c1_i32_60 dim 1 : vector<16x128xf32>, i32 -> vector<16x128xf32>
    %709 = arith.mulf %708, %39 : vector<16x128xf32>
    %c108 = arith.constant 108 : index
    %710 = memref.load %arg1[%c108] : memref<202xf32, #tpu.memory_space<smem>>
    %711 = vector.broadcast %710 : f32 to vector<16x128xf32>
    %712 = arith.mulf %711, %709 : vector<16x128xf32>
    %c109 = arith.constant 109 : index
    %713 = memref.load %arg1[%c109] : memref<202xf32, #tpu.memory_space<smem>>
    %714 = vector.broadcast %713 : f32 to vector<16x128xf32>
    %715 = arith.mulf %714, %707 : vector<16x128xf32>
    %716 = arith.addf %712, %715 : vector<16x128xf32>
    %c127_i32_61 = arith.constant 127 : i32
    %717 = tpu.dynamic_rotate %707 by %c127_i32_61 dim 1 : vector<16x128xf32>, i32 -> vector<16x128xf32>
    %718 = arith.mulf %717, %61 : vector<16x128xf32>
    %c110 = arith.constant 110 : index
    %719 = memref.load %arg1[%c110] : memref<202xf32, #tpu.memory_space<smem>>
    %720 = vector.broadcast %719 : f32 to vector<16x128xf32>
    %721 = arith.mulf %720, %718 : vector<16x128xf32>
    %722 = arith.addf %716, %721 : vector<16x128xf32>
    %c1_i32_62 = arith.constant 1 : i32
    %723 = tpu.dynamic_rotate %657 by %c1_i32_62 dim 1 : vector<16x128xf32>, i32 -> vector<16x128xf32>
    %724 = arith.mulf %723, %39 : vector<16x128xf32>
    %c111 = arith.constant 111 : index
    %725 = memref.load %arg1[%c111] : memref<202xf32, #tpu.memory_space<smem>>
    %726 = vector.broadcast %725 : f32 to vector<16x128xf32>
    %727 = arith.mulf %726, %724 : vector<16x128xf32>
    %728 = arith.addf %722, %727 : vector<16x128xf32>
    %c112 = arith.constant 112 : index
    %729 = memref.load %arg1[%c112] : memref<202xf32, #tpu.memory_space<smem>>
    %730 = vector.broadcast %729 : f32 to vector<16x128xf32>
    %731 = arith.mulf %730, %657 : vector<16x128xf32>
    %732 = arith.addf %728, %731 : vector<16x128xf32>
    %c127_i32_63 = arith.constant 127 : i32
    %733 = tpu.dynamic_rotate %657 by %c127_i32_63 dim 1 : vector<16x128xf32>, i32 -> vector<16x128xf32>
    %734 = arith.mulf %733, %61 : vector<16x128xf32>
    %c113 = arith.constant 113 : index
    %735 = memref.load %arg1[%c113] : memref<202xf32, #tpu.memory_space<smem>>
    %736 = vector.broadcast %735 : f32 to vector<16x128xf32>
    %737 = arith.mulf %736, %734 : vector<16x128xf32>
    %738 = arith.addf %732, %737 : vector<16x128xf32>
    %c15_i32_64 = arith.constant 15 : i32
    %739 = tpu.dynamic_rotate %657 by %c15_i32_64 dim 0 : vector<16x128xf32>, i32 -> vector<16x128xf32>
    %740 = arith.mulf %739, %50 : vector<16x128xf32>
    %c1_i32_65 = arith.constant 1 : i32
    %741 = tpu.dynamic_rotate %740 by %c1_i32_65 dim 1 : vector<16x128xf32>, i32 -> vector<16x128xf32>
    %742 = arith.mulf %741, %39 : vector<16x128xf32>
    %c114 = arith.constant 114 : index
    %743 = memref.load %arg1[%c114] : memref<202xf32, #tpu.memory_space<smem>>
    %744 = vector.broadcast %743 : f32 to vector<16x128xf32>
    %745 = arith.mulf %744, %742 : vector<16x128xf32>
    %746 = arith.addf %738, %745 : vector<16x128xf32>
    %c115 = arith.constant 115 : index
    %747 = memref.load %arg1[%c115] : memref<202xf32, #tpu.memory_space<smem>>
    %748 = vector.broadcast %747 : f32 to vector<16x128xf32>
    %749 = arith.mulf %748, %740 : vector<16x128xf32>
    %750 = arith.addf %746, %749 : vector<16x128xf32>
    %c127_i32_66 = arith.constant 127 : i32
    %751 = tpu.dynamic_rotate %740 by %c127_i32_66 dim 1 : vector<16x128xf32>, i32 -> vector<16x128xf32>
    %752 = arith.mulf %751, %61 : vector<16x128xf32>
    %c116 = arith.constant 116 : index
    %753 = memref.load %arg1[%c116] : memref<202xf32, #tpu.memory_space<smem>>
    %754 = vector.broadcast %753 : f32 to vector<16x128xf32>
    %755 = arith.mulf %754, %752 : vector<16x128xf32>
    %756 = arith.addf %750, %755 : vector<16x128xf32>
    %c1_i32_67 = arith.constant 1 : i32
    %757 = tpu.dynamic_rotate %673 by %c1_i32_67 dim 0 : vector<16x128xf32>, i32 -> vector<16x128xf32>
    %758 = arith.mulf %757, %28 : vector<16x128xf32>
    %c1_i32_68 = arith.constant 1 : i32
    %759 = tpu.dynamic_rotate %758 by %c1_i32_68 dim 1 : vector<16x128xf32>, i32 -> vector<16x128xf32>
    %760 = arith.mulf %759, %39 : vector<16x128xf32>
    %c117 = arith.constant 117 : index
    %761 = memref.load %arg1[%c117] : memref<202xf32, #tpu.memory_space<smem>>
    %762 = vector.broadcast %761 : f32 to vector<16x128xf32>
    %763 = arith.mulf %762, %760 : vector<16x128xf32>
    %c118 = arith.constant 118 : index
    %764 = memref.load %arg1[%c118] : memref<202xf32, #tpu.memory_space<smem>>
    %765 = vector.broadcast %764 : f32 to vector<16x128xf32>
    %766 = arith.mulf %765, %758 : vector<16x128xf32>
    %767 = arith.addf %763, %766 : vector<16x128xf32>
    %c127_i32_69 = arith.constant 127 : i32
    %768 = tpu.dynamic_rotate %758 by %c127_i32_69 dim 1 : vector<16x128xf32>, i32 -> vector<16x128xf32>
    %769 = arith.mulf %768, %61 : vector<16x128xf32>
    %c119 = arith.constant 119 : index
    %770 = memref.load %arg1[%c119] : memref<202xf32, #tpu.memory_space<smem>>
    %771 = vector.broadcast %770 : f32 to vector<16x128xf32>
    %772 = arith.mulf %771, %769 : vector<16x128xf32>
    %773 = arith.addf %767, %772 : vector<16x128xf32>
    %c1_i32_70 = arith.constant 1 : i32
    %774 = tpu.dynamic_rotate %673 by %c1_i32_70 dim 1 : vector<16x128xf32>, i32 -> vector<16x128xf32>
    %775 = arith.mulf %774, %39 : vector<16x128xf32>
    %c120 = arith.constant 120 : index
    %776 = memref.load %arg1[%c120] : memref<202xf32, #tpu.memory_space<smem>>
    %777 = vector.broadcast %776 : f32 to vector<16x128xf32>
    %778 = arith.mulf %777, %775 : vector<16x128xf32>
    %779 = arith.addf %773, %778 : vector<16x128xf32>
    %c121 = arith.constant 121 : index
    %780 = memref.load %arg1[%c121] : memref<202xf32, #tpu.memory_space<smem>>
    %781 = vector.broadcast %780 : f32 to vector<16x128xf32>
    %782 = arith.mulf %781, %673 : vector<16x128xf32>
    %783 = arith.addf %779, %782 : vector<16x128xf32>
    %c127_i32_71 = arith.constant 127 : i32
    %784 = tpu.dynamic_rotate %673 by %c127_i32_71 dim 1 : vector<16x128xf32>, i32 -> vector<16x128xf32>
    %785 = arith.mulf %784, %61 : vector<16x128xf32>
    %c122 = arith.constant 122 : index
    %786 = memref.load %arg1[%c122] : memref<202xf32, #tpu.memory_space<smem>>
    %787 = vector.broadcast %786 : f32 to vector<16x128xf32>
    %788 = arith.mulf %787, %785 : vector<16x128xf32>
    %789 = arith.addf %783, %788 : vector<16x128xf32>
    %c15_i32_72 = arith.constant 15 : i32
    %790 = tpu.dynamic_rotate %673 by %c15_i32_72 dim 0 : vector<16x128xf32>, i32 -> vector<16x128xf32>
    %791 = arith.mulf %790, %50 : vector<16x128xf32>
    %c1_i32_73 = arith.constant 1 : i32
    %792 = tpu.dynamic_rotate %791 by %c1_i32_73 dim 1 : vector<16x128xf32>, i32 -> vector<16x128xf32>
    %793 = arith.mulf %792, %39 : vector<16x128xf32>
    %c123 = arith.constant 123 : index
    %794 = memref.load %arg1[%c123] : memref<202xf32, #tpu.memory_space<smem>>
    %795 = vector.broadcast %794 : f32 to vector<16x128xf32>
    %796 = arith.mulf %795, %793 : vector<16x128xf32>
    %797 = arith.addf %789, %796 : vector<16x128xf32>
    %c124 = arith.constant 124 : index
    %798 = memref.load %arg1[%c124] : memref<202xf32, #tpu.memory_space<smem>>
    %799 = vector.broadcast %798 : f32 to vector<16x128xf32>
    %800 = arith.mulf %799, %791 : vector<16x128xf32>
    %801 = arith.addf %797, %800 : vector<16x128xf32>
    %c127_i32_74 = arith.constant 127 : i32
    %802 = tpu.dynamic_rotate %791 by %c127_i32_74 dim 1 : vector<16x128xf32>, i32 -> vector<16x128xf32>
    %803 = arith.mulf %802, %61 : vector<16x128xf32>
    %c125 = arith.constant 125 : index
    %804 = memref.load %arg1[%c125] : memref<202xf32, #tpu.memory_space<smem>>
    %805 = vector.broadcast %804 : f32 to vector<16x128xf32>
    %806 = arith.mulf %805, %803 : vector<16x128xf32>
    %807 = arith.addf %801, %806 : vector<16x128xf32>
    %c1_i32_75 = arith.constant 1 : i32
    %808 = tpu.dynamic_rotate %689 by %c1_i32_75 dim 0 : vector<16x128xf32>, i32 -> vector<16x128xf32>
    %809 = arith.mulf %808, %28 : vector<16x128xf32>
    %c1_i32_76 = arith.constant 1 : i32
    %810 = tpu.dynamic_rotate %809 by %c1_i32_76 dim 1 : vector<16x128xf32>, i32 -> vector<16x128xf32>
    %811 = arith.mulf %810, %39 : vector<16x128xf32>
    %c126 = arith.constant 126 : index
    %812 = memref.load %arg1[%c126] : memref<202xf32, #tpu.memory_space<smem>>
    %813 = vector.broadcast %812 : f32 to vector<16x128xf32>
    %814 = arith.mulf %813, %811 : vector<16x128xf32>
    %c127 = arith.constant 127 : index
    %815 = memref.load %arg1[%c127] : memref<202xf32, #tpu.memory_space<smem>>
    %816 = vector.broadcast %815 : f32 to vector<16x128xf32>
    %817 = arith.mulf %816, %809 : vector<16x128xf32>
    %818 = arith.addf %814, %817 : vector<16x128xf32>
    %c127_i32_77 = arith.constant 127 : i32
    %819 = tpu.dynamic_rotate %809 by %c127_i32_77 dim 1 : vector<16x128xf32>, i32 -> vector<16x128xf32>
    %820 = arith.mulf %819, %61 : vector<16x128xf32>
    %c128 = arith.constant 128 : index
    %821 = memref.load %arg1[%c128] : memref<202xf32, #tpu.memory_space<smem>>
    %822 = vector.broadcast %821 : f32 to vector<16x128xf32>
    %823 = arith.mulf %822, %820 : vector<16x128xf32>
    %824 = arith.addf %818, %823 : vector<16x128xf32>
    %c1_i32_78 = arith.constant 1 : i32
    %825 = tpu.dynamic_rotate %689 by %c1_i32_78 dim 1 : vector<16x128xf32>, i32 -> vector<16x128xf32>
    %826 = arith.mulf %825, %39 : vector<16x128xf32>
    %c129 = arith.constant 129 : index
    %827 = memref.load %arg1[%c129] : memref<202xf32, #tpu.memory_space<smem>>
    %828 = vector.broadcast %827 : f32 to vector<16x128xf32>
    %829 = arith.mulf %828, %826 : vector<16x128xf32>
    %830 = arith.addf %824, %829 : vector<16x128xf32>
    %c130 = arith.constant 130 : index
    %831 = memref.load %arg1[%c130] : memref<202xf32, #tpu.memory_space<smem>>
    %832 = vector.broadcast %831 : f32 to vector<16x128xf32>
    %833 = arith.mulf %832, %689 : vector<16x128xf32>
    %834 = arith.addf %830, %833 : vector<16x128xf32>
    %c127_i32_79 = arith.constant 127 : i32
    %835 = tpu.dynamic_rotate %689 by %c127_i32_79 dim 1 : vector<16x128xf32>, i32 -> vector<16x128xf32>
    %836 = arith.mulf %835, %61 : vector<16x128xf32>
    %c131 = arith.constant 131 : index
    %837 = memref.load %arg1[%c131] : memref<202xf32, #tpu.memory_space<smem>>
    %838 = vector.broadcast %837 : f32 to vector<16x128xf32>
    %839 = arith.mulf %838, %836 : vector<16x128xf32>
    %840 = arith.addf %834, %839 : vector<16x128xf32>
    %c15_i32_80 = arith.constant 15 : i32
    %841 = tpu.dynamic_rotate %689 by %c15_i32_80 dim 0 : vector<16x128xf32>, i32 -> vector<16x128xf32>
    %842 = arith.mulf %841, %50 : vector<16x128xf32>
    %c1_i32_81 = arith.constant 1 : i32
    %843 = tpu.dynamic_rotate %842 by %c1_i32_81 dim 1 : vector<16x128xf32>, i32 -> vector<16x128xf32>
    %844 = arith.mulf %843, %39 : vector<16x128xf32>
    %c132 = arith.constant 132 : index
    %845 = memref.load %arg1[%c132] : memref<202xf32, #tpu.memory_space<smem>>
    %846 = vector.broadcast %845 : f32 to vector<16x128xf32>
    %847 = arith.mulf %846, %844 : vector<16x128xf32>
    %848 = arith.addf %840, %847 : vector<16x128xf32>
    %c133 = arith.constant 133 : index
    %849 = memref.load %arg1[%c133] : memref<202xf32, #tpu.memory_space<smem>>
    %850 = vector.broadcast %849 : f32 to vector<16x128xf32>
    %851 = arith.mulf %850, %842 : vector<16x128xf32>
    %852 = arith.addf %848, %851 : vector<16x128xf32>
    %c127_i32_82 = arith.constant 127 : i32
    %853 = tpu.dynamic_rotate %842 by %c127_i32_82 dim 1 : vector<16x128xf32>, i32 -> vector<16x128xf32>
    %854 = arith.mulf %853, %61 : vector<16x128xf32>
    %c134 = arith.constant 134 : index
    %855 = memref.load %arg1[%c134] : memref<202xf32, #tpu.memory_space<smem>>
    %856 = vector.broadcast %855 : f32 to vector<16x128xf32>
    %857 = arith.mulf %856, %854 : vector<16x128xf32>
    %858 = arith.addf %852, %857 : vector<16x128xf32>
    %c1_i32_83 = arith.constant 1 : i32
    %859 = tpu.dynamic_rotate %705 by %c1_i32_83 dim 0 : vector<16x128xf32>, i32 -> vector<16x128xf32>
    %860 = arith.mulf %859, %28 : vector<16x128xf32>
    %c1_i32_84 = arith.constant 1 : i32
    %861 = tpu.dynamic_rotate %860 by %c1_i32_84 dim 1 : vector<16x128xf32>, i32 -> vector<16x128xf32>
    %862 = arith.mulf %861, %39 : vector<16x128xf32>
    %c135 = arith.constant 135 : index
    %863 = memref.load %arg1[%c135] : memref<202xf32, #tpu.memory_space<smem>>
    %864 = vector.broadcast %863 : f32 to vector<16x128xf32>
    %865 = arith.mulf %864, %862 : vector<16x128xf32>
    %c136 = arith.constant 136 : index
    %866 = memref.load %arg1[%c136] : memref<202xf32, #tpu.memory_space<smem>>
    %867 = vector.broadcast %866 : f32 to vector<16x128xf32>
    %868 = arith.mulf %867, %860 : vector<16x128xf32>
    %869 = arith.addf %865, %868 : vector<16x128xf32>
    %c127_i32_85 = arith.constant 127 : i32
    %870 = tpu.dynamic_rotate %860 by %c127_i32_85 dim 1 : vector<16x128xf32>, i32 -> vector<16x128xf32>
    %871 = arith.mulf %870, %61 : vector<16x128xf32>
    %c137 = arith.constant 137 : index
    %872 = memref.load %arg1[%c137] : memref<202xf32, #tpu.memory_space<smem>>
    %873 = vector.broadcast %872 : f32 to vector<16x128xf32>
    %874 = arith.mulf %873, %871 : vector<16x128xf32>
    %875 = arith.addf %869, %874 : vector<16x128xf32>
    %c1_i32_86 = arith.constant 1 : i32
    %876 = tpu.dynamic_rotate %705 by %c1_i32_86 dim 1 : vector<16x128xf32>, i32 -> vector<16x128xf32>
    %877 = arith.mulf %876, %39 : vector<16x128xf32>
    %c138 = arith.constant 138 : index
    %878 = memref.load %arg1[%c138] : memref<202xf32, #tpu.memory_space<smem>>
    %879 = vector.broadcast %878 : f32 to vector<16x128xf32>
    %880 = arith.mulf %879, %877 : vector<16x128xf32>
    %881 = arith.addf %875, %880 : vector<16x128xf32>
    %c139 = arith.constant 139 : index
    %882 = memref.load %arg1[%c139] : memref<202xf32, #tpu.memory_space<smem>>
    %883 = vector.broadcast %882 : f32 to vector<16x128xf32>
    %884 = arith.mulf %883, %705 : vector<16x128xf32>
    %885 = arith.addf %881, %884 : vector<16x128xf32>
    %c127_i32_87 = arith.constant 127 : i32
    %886 = tpu.dynamic_rotate %705 by %c127_i32_87 dim 1 : vector<16x128xf32>, i32 -> vector<16x128xf32>
    %887 = arith.mulf %886, %61 : vector<16x128xf32>
    %c140 = arith.constant 140 : index
    %888 = memref.load %arg1[%c140] : memref<202xf32, #tpu.memory_space<smem>>
    %889 = vector.broadcast %888 : f32 to vector<16x128xf32>
    %890 = arith.mulf %889, %887 : vector<16x128xf32>
    %891 = arith.addf %885, %890 : vector<16x128xf32>
    %c15_i32_88 = arith.constant 15 : i32
    %892 = tpu.dynamic_rotate %705 by %c15_i32_88 dim 0 : vector<16x128xf32>, i32 -> vector<16x128xf32>
    %893 = arith.mulf %892, %50 : vector<16x128xf32>
    %c1_i32_89 = arith.constant 1 : i32
    %894 = tpu.dynamic_rotate %893 by %c1_i32_89 dim 1 : vector<16x128xf32>, i32 -> vector<16x128xf32>
    %895 = arith.mulf %894, %39 : vector<16x128xf32>
    %c141 = arith.constant 141 : index
    %896 = memref.load %arg1[%c141] : memref<202xf32, #tpu.memory_space<smem>>
    %897 = vector.broadcast %896 : f32 to vector<16x128xf32>
    %898 = arith.mulf %897, %895 : vector<16x128xf32>
    %899 = arith.addf %891, %898 : vector<16x128xf32>
    %c142 = arith.constant 142 : index
    %900 = memref.load %arg1[%c142] : memref<202xf32, #tpu.memory_space<smem>>
    %901 = vector.broadcast %900 : f32 to vector<16x128xf32>
    %902 = arith.mulf %901, %893 : vector<16x128xf32>
    %903 = arith.addf %899, %902 : vector<16x128xf32>
    %c127_i32_90 = arith.constant 127 : i32
    %904 = tpu.dynamic_rotate %893 by %c127_i32_90 dim 1 : vector<16x128xf32>, i32 -> vector<16x128xf32>
    %905 = arith.mulf %904, %61 : vector<16x128xf32>
    %c143 = arith.constant 143 : index
    %906 = memref.load %arg1[%c143] : memref<202xf32, #tpu.memory_space<smem>>
    %907 = vector.broadcast %906 : f32 to vector<16x128xf32>
    %908 = arith.mulf %907, %905 : vector<16x128xf32>
    %909 = arith.addf %903, %908 : vector<16x128xf32>
    %c144 = arith.constant 144 : index
    %910 = memref.load %arg1[%c144] : memref<202xf32, #tpu.memory_space<smem>>
    %911 = vector.broadcast %910 : f32 to vector<16x128xf32>
    %912 = arith.addf %756, %911 : vector<16x128xf32>
    %913 = arith.negf %912 : vector<16x128xf32>
    %914 = math.exp %913 : vector<16x128xf32>
    %cst_91 = arith.constant 1.000000e+00 : f32
    %915 = vector.broadcast %cst_91 : f32 to vector<16x128xf32>
    %916 = arith.addf %915, %914 : vector<16x128xf32>
    %917 = arith.divf %915, %916 : vector<16x128xf32>
    %918 = arith.mulf %912, %917 : vector<16x128xf32>
    %c145 = arith.constant 145 : index
    %919 = memref.load %arg1[%c145] : memref<202xf32, #tpu.memory_space<smem>>
    %920 = vector.broadcast %919 : f32 to vector<16x128xf32>
    %921 = arith.addf %807, %920 : vector<16x128xf32>
    %922 = arith.negf %921 : vector<16x128xf32>
    %923 = math.exp %922 : vector<16x128xf32>
    %cst_92 = arith.constant 1.000000e+00 : f32
    %924 = vector.broadcast %cst_92 : f32 to vector<16x128xf32>
    %925 = arith.addf %924, %923 : vector<16x128xf32>
    %926 = arith.divf %924, %925 : vector<16x128xf32>
    %927 = arith.mulf %921, %926 : vector<16x128xf32>
    %c146 = arith.constant 146 : index
    %928 = memref.load %arg1[%c146] : memref<202xf32, #tpu.memory_space<smem>>
    %929 = vector.broadcast %928 : f32 to vector<16x128xf32>
    %930 = arith.addf %858, %929 : vector<16x128xf32>
    %931 = arith.negf %930 : vector<16x128xf32>
    %932 = math.exp %931 : vector<16x128xf32>
    %cst_93 = arith.constant 1.000000e+00 : f32
    %933 = vector.broadcast %cst_93 : f32 to vector<16x128xf32>
    %934 = arith.addf %933, %932 : vector<16x128xf32>
    %935 = arith.divf %933, %934 : vector<16x128xf32>
    %936 = arith.mulf %930, %935 : vector<16x128xf32>
    %c147 = arith.constant 147 : index
    %937 = memref.load %arg1[%c147] : memref<202xf32, #tpu.memory_space<smem>>
    %938 = vector.broadcast %937 : f32 to vector<16x128xf32>
    %939 = arith.addf %909, %938 : vector<16x128xf32>
    %940 = arith.negf %939 : vector<16x128xf32>
    %941 = math.exp %940 : vector<16x128xf32>
    %cst_94 = arith.constant 1.000000e+00 : f32
    %942 = vector.broadcast %cst_94 : f32 to vector<16x128xf32>
    %943 = arith.addf %942, %941 : vector<16x128xf32>
    %944 = arith.divf %942, %943 : vector<16x128xf32>
    %945 = arith.mulf %939, %944 : vector<16x128xf32>
    %c148 = arith.constant 148 : index
    %946 = memref.load %arg1[%c148] : memref<202xf32, #tpu.memory_space<smem>>
    %947 = vector.broadcast %946 : f32 to vector<16x128xf32>
    %948 = arith.mulf %947, %918 : vector<16x128xf32>
    %c149 = arith.constant 149 : index
    %949 = memref.load %arg1[%c149] : memref<202xf32, #tpu.memory_space<smem>>
    %950 = vector.broadcast %949 : f32 to vector<16x128xf32>
    %951 = arith.mulf %950, %927 : vector<16x128xf32>
    %952 = arith.addf %948, %951 : vector<16x128xf32>
    %c150 = arith.constant 150 : index
    %953 = memref.load %arg1[%c150] : memref<202xf32, #tpu.memory_space<smem>>
    %954 = vector.broadcast %953 : f32 to vector<16x128xf32>
    %955 = arith.mulf %954, %936 : vector<16x128xf32>
    %956 = arith.addf %952, %955 : vector<16x128xf32>
    %c151 = arith.constant 151 : index
    %957 = memref.load %arg1[%c151] : memref<202xf32, #tpu.memory_space<smem>>
    %958 = vector.broadcast %957 : f32 to vector<16x128xf32>
    %959 = arith.mulf %958, %945 : vector<16x128xf32>
    %960 = arith.addf %956, %959 : vector<16x128xf32>
    %c156 = arith.constant 156 : index
    %961 = memref.load %arg1[%c156] : memref<202xf32, #tpu.memory_space<smem>>
    %962 = vector.broadcast %961 : f32 to vector<16x128xf32>
    %963 = arith.addf %960, %962 : vector<16x128xf32>
    %964 = arith.negf %963 : vector<16x128xf32>
    %965 = math.exp %964 : vector<16x128xf32>
    %cst_95 = arith.constant 1.000000e+00 : f32
    %966 = vector.broadcast %cst_95 : f32 to vector<16x128xf32>
    %967 = arith.addf %966, %965 : vector<16x128xf32>
    %968 = arith.divf %966, %967 : vector<16x128xf32>
    %969 = arith.mulf %963, %968 : vector<16x128xf32>
    %c152 = arith.constant 152 : index
    %970 = memref.load %arg1[%c152] : memref<202xf32, #tpu.memory_space<smem>>
    %971 = vector.broadcast %970 : f32 to vector<16x128xf32>
    %972 = arith.mulf %971, %918 : vector<16x128xf32>
    %c153 = arith.constant 153 : index
    %973 = memref.load %arg1[%c153] : memref<202xf32, #tpu.memory_space<smem>>
    %974 = vector.broadcast %973 : f32 to vector<16x128xf32>
    %975 = arith.mulf %974, %927 : vector<16x128xf32>
    %976 = arith.addf %972, %975 : vector<16x128xf32>
    %c154 = arith.constant 154 : index
    %977 = memref.load %arg1[%c154] : memref<202xf32, #tpu.memory_space<smem>>
    %978 = vector.broadcast %977 : f32 to vector<16x128xf32>
    %979 = arith.mulf %978, %936 : vector<16x128xf32>
    %980 = arith.addf %976, %979 : vector<16x128xf32>
    %c155 = arith.constant 155 : index
    %981 = memref.load %arg1[%c155] : memref<202xf32, #tpu.memory_space<smem>>
    %982 = vector.broadcast %981 : f32 to vector<16x128xf32>
    %983 = arith.mulf %982, %945 : vector<16x128xf32>
    %984 = arith.addf %980, %983 : vector<16x128xf32>
    %c157 = arith.constant 157 : index
    %985 = memref.load %arg1[%c157] : memref<202xf32, #tpu.memory_space<smem>>
    %986 = vector.broadcast %985 : f32 to vector<16x128xf32>
    %987 = arith.addf %984, %986 : vector<16x128xf32>
    %988 = arith.negf %987 : vector<16x128xf32>
    %989 = math.exp %988 : vector<16x128xf32>
    %cst_96 = arith.constant 1.000000e+00 : f32
    %990 = vector.broadcast %cst_96 : f32 to vector<16x128xf32>
    %991 = arith.addf %990, %989 : vector<16x128xf32>
    %992 = arith.divf %990, %991 : vector<16x128xf32>
    %993 = arith.mulf %987, %992 : vector<16x128xf32>
    %c166 = arith.constant 166 : index
    %994 = memref.load %arg1[%c166] : memref<202xf32, #tpu.memory_space<smem>>
    %995 = vector.broadcast %994 : f32 to vector<16x128xf32>
    %996 = arith.mulf %995, %969 : vector<16x128xf32>
    %997 = arith.addf %629, %996 : vector<16x128xf32>
    %c176 = arith.constant 176 : index
    %998 = memref.load %arg1[%c176] : memref<202xf32, #tpu.memory_space<smem>>
    %999 = vector.broadcast %998 : f32 to vector<16x128xf32>
    %1000 = arith.mulf %999, %969 : vector<16x128xf32>
    %1001 = arith.addf %633, %1000 : vector<16x128xf32>
    %c186 = arith.constant 186 : index
    %1002 = memref.load %arg1[%c186] : memref<202xf32, #tpu.memory_space<smem>>
    %1003 = vector.broadcast %1002 : f32 to vector<16x128xf32>
    %1004 = arith.mulf %1003, %969 : vector<16x128xf32>
    %1005 = arith.addf %637, %1004 : vector<16x128xf32>
    %c196 = arith.constant 196 : index
    %1006 = memref.load %arg1[%c196] : memref<202xf32, #tpu.memory_space<smem>>
    %1007 = vector.broadcast %1006 : f32 to vector<16x128xf32>
    %1008 = arith.mulf %1007, %969 : vector<16x128xf32>
    %1009 = arith.addf %641, %1008 : vector<16x128xf32>
    %c167 = arith.constant 167 : index
    %1010 = memref.load %arg1[%c167] : memref<202xf32, #tpu.memory_space<smem>>
    %1011 = vector.broadcast %1010 : f32 to vector<16x128xf32>
    %1012 = arith.mulf %1011, %993 : vector<16x128xf32>
    %1013 = arith.addf %997, %1012 : vector<16x128xf32>
    %c177 = arith.constant 177 : index
    %1014 = memref.load %arg1[%c177] : memref<202xf32, #tpu.memory_space<smem>>
    %1015 = vector.broadcast %1014 : f32 to vector<16x128xf32>
    %1016 = arith.mulf %1015, %993 : vector<16x128xf32>
    %1017 = arith.addf %1001, %1016 : vector<16x128xf32>
    %c187 = arith.constant 187 : index
    %1018 = memref.load %arg1[%c187] : memref<202xf32, #tpu.memory_space<smem>>
    %1019 = vector.broadcast %1018 : f32 to vector<16x128xf32>
    %1020 = arith.mulf %1019, %993 : vector<16x128xf32>
    %1021 = arith.addf %1005, %1020 : vector<16x128xf32>
    %c197 = arith.constant 197 : index
    %1022 = memref.load %arg1[%c197] : memref<202xf32, #tpu.memory_space<smem>>
    %1023 = vector.broadcast %1022 : f32 to vector<16x128xf32>
    %1024 = arith.mulf %1023, %993 : vector<16x128xf32>
    %1025 = arith.addf %1009, %1024 : vector<16x128xf32>
    %c198 = arith.constant 198 : index
    %1026 = memref.load %arg1[%c198] : memref<202xf32, #tpu.memory_space<smem>>
    %1027 = vector.broadcast %1026 : f32 to vector<16x128xf32>
    %1028 = arith.addf %1013, %1027 : vector<16x128xf32>
    %1029 = arith.negf %1028 : vector<16x128xf32>
    %1030 = math.exp %1029 : vector<16x128xf32>
    %cst_97 = arith.constant 1.000000e+00 : f32
    %1031 = vector.broadcast %cst_97 : f32 to vector<16x128xf32>
    %1032 = arith.addf %1031, %1030 : vector<16x128xf32>
    %1033 = arith.divf %1031, %1032 : vector<16x128xf32>
    %1034 = arith.mulf %1028, %1033 : vector<16x128xf32>
    %c0_98 = arith.constant 0 : index
    %c0_99 = arith.constant 0 : index
    %c0_100 = arith.constant 0 : index
    %c0_101 = arith.constant 0 : index
    %1035 = vector.load %arg3[%c0_98, %c0_99, %c0_100, %c0_101] : memref<1x4x16x128xf32, #tpu.memory_space<vmem>>, vector<1x1x16x128xf32>
    %1036 = vector.shape_cast %1035 : vector<1x1x16x128xf32> to vector<16x128xf32>
    %1037 = vector.shape_cast %1034 : vector<16x128xf32> to vector<1x1x16x128xf32>
    tpu.vector_store %arg3[%c0_98, %c0_99, %c0_100, %c0_101], %1037 {strides = array<i32>} : memref<1x4x16x128xf32, #tpu.memory_space<vmem>>, vector<1x1x16x128xf32>,
    %c199 = arith.constant 199 : index
    %1038 = memref.load %arg1[%c199] : memref<202xf32, #tpu.memory_space<smem>>
    %1039 = vector.broadcast %1038 : f32 to vector<16x128xf32>
    %1040 = arith.addf %1017, %1039 : vector<16x128xf32>
    %1041 = arith.negf %1040 : vector<16x128xf32>
    %1042 = math.exp %1041 : vector<16x128xf32>
    %cst_102 = arith.constant 1.000000e+00 : f32
    %1043 = vector.broadcast %cst_102 : f32 to vector<16x128xf32>
    %1044 = arith.addf %1043, %1042 : vector<16x128xf32>
    %1045 = arith.divf %1043, %1044 : vector<16x128xf32>
    %1046 = arith.mulf %1040, %1045 : vector<16x128xf32>
    %c0_103 = arith.constant 0 : index
    %c1_104 = arith.constant 1 : index
    %c0_105 = arith.constant 0 : index
    %c0_106 = arith.constant 0 : index
    %1047 = vector.load %arg3[%c0_103, %c1_104, %c0_105, %c0_106] : memref<1x4x16x128xf32, #tpu.memory_space<vmem>>, vector<1x1x16x128xf32>
    %1048 = vector.shape_cast %1047 : vector<1x1x16x128xf32> to vector<16x128xf32>
    %1049 = vector.shape_cast %1046 : vector<16x128xf32> to vector<1x1x16x128xf32>
    tpu.vector_store %arg3[%c0_103, %c1_104, %c0_105, %c0_106], %1049 {strides = array<i32>} : memref<1x4x16x128xf32, #tpu.memory_space<vmem>>, vector<1x1x16x128xf32>,
    %c200 = arith.constant 200 : index
    %1050 = memref.load %arg1[%c200] : memref<202xf32, #tpu.memory_space<smem>>
    %1051 = vector.broadcast %1050 : f32 to vector<16x128xf32>
    %1052 = arith.addf %1021, %1051 : vector<16x128xf32>
    %1053 = arith.negf %1052 : vector<16x128xf32>
    %1054 = math.exp %1053 : vector<16x128xf32>
    %cst_107 = arith.constant 1.000000e+00 : f32
    %1055 = vector.broadcast %cst_107 : f32 to vector<16x128xf32>
    %1056 = arith.addf %1055, %1054 : vector<16x128xf32>
    %1057 = arith.divf %1055, %1056 : vector<16x128xf32>
    %1058 = arith.mulf %1052, %1057 : vector<16x128xf32>
    %c0_108 = arith.constant 0 : index
    %c2_109 = arith.constant 2 : index
    %c0_110 = arith.constant 0 : index
    %c0_111 = arith.constant 0 : index
    %1059 = vector.load %arg3[%c0_108, %c2_109, %c0_110, %c0_111] : memref<1x4x16x128xf32, #tpu.memory_space<vmem>>, vector<1x1x16x128xf32>
    %1060 = vector.shape_cast %1059 : vector<1x1x16x128xf32> to vector<16x128xf32>
    %1061 = vector.shape_cast %1058 : vector<16x128xf32> to vector<1x1x16x128xf32>
    tpu.vector_store %arg3[%c0_108, %c2_109, %c0_110, %c0_111], %1061 {strides = array<i32>} : memref<1x4x16x128xf32, #tpu.memory_space<vmem>>, vector<1x1x16x128xf32>,
    %c201 = arith.constant 201 : index
    %1062 = memref.load %arg1[%c201] : memref<202xf32, #tpu.memory_space<smem>>
    %1063 = vector.broadcast %1062 : f32 to vector<16x128xf32>
    %1064 = arith.addf %1025, %1063 : vector<16x128xf32>
    %1065 = arith.negf %1064 : vector<16x128xf32>
    %1066 = math.exp %1065 : vector<16x128xf32>
    %cst_112 = arith.constant 1.000000e+00 : f32
    %1067 = vector.broadcast %cst_112 : f32 to vector<16x128xf32>
    %1068 = arith.addf %1067, %1066 : vector<16x128xf32>
    %1069 = arith.divf %1067, %1068 : vector<16x128xf32>
    %1070 = arith.mulf %1064, %1069 : vector<16x128xf32>
    %c0_113 = arith.constant 0 : index
    %c3_114 = arith.constant 3 : index
    %c0_115 = arith.constant 0 : index
    %c0_116 = arith.constant 0 : index
    %1071 = vector.load %arg3[%c0_113, %c3_114, %c0_115, %c0_116] : memref<1x4x16x128xf32, #tpu.memory_space<vmem>>, vector<1x1x16x128xf32>
    %1072 = vector.shape_cast %1071 : vector<1x1x16x128xf32> to vector<16x128xf32>
    %1073 = vector.shape_cast %1070 : vector<16x128xf32> to vector<1x1x16x128xf32>
    tpu.vector_store %arg3[%c0_113, %c3_114, %c0_115, %c0_116], %1073 {strides = array<i32>} : memref<1x4x16x128xf32, #tpu.memory_space<vmem>>, vector<1x1x16x128xf32>,
    return
  }
  func.func @transform_0(%arg0: i32) -> i32 {
    %c0_i32 = arith.constant 0 : i32
    %c0_i32_0 = arith.constant 0 : i32
    return %c0_i32 : i32
  }
  func.func @transform_1(%arg0: i32) -> (i32, i32, i32, i32) {
    %c0_i32 = arith.constant 0 : i32
    %c0_i32_0 = arith.constant 0 : i32
    %c0_i32_1 = arith.constant 0 : i32
    %c0_i32_2 = arith.constant 0 : i32
    return %arg0, %c0_i32, %c0_i32_0, %c0_i32_1 : i32, i32, i32, i32
  }
  func.func @transform_2(%arg0: i32) -> (i32, i32, i32, i32) {
    %c0_i32 = arith.constant 0 : i32
    %c0_i32_0 = arith.constant 0 : i32
    %c0_i32_1 = arith.constant 0 : i32
    %c0_i32_2 = arith.constant 0 : i32
    return %arg0, %c0_i32, %c0_i32_0, %c0_i32_1 : i32, i32, i32, i32
  }
}

</mosaic_0001>

<llo_original>
// kernel: fwd.1
$region0: #{fwd.1}
  #allocation0 [shape = 'u32[]', space=smem, size = 0x4, offset = 0x4, fixed_abs, tag = 'smem constant byte address 0x4 - core index']
  #allocation1 [shape = 'u32[72,128]{1,0:T(1,128)}', space=vmem, size = 0x9000, scoped, tag = 'internal scratch']
  %s0 = inlined_call_operand.vmem [shape: f32[202], index: 0, kind: input, shape index: {}]
  %s1 = inlined_call_operand.vmem [shape: f32[2,4,16,128], index: 1, kind: input, shape index: {}]
  %s2 = inlined_call_operand.vmem [shape: f32[2,4,16,128], index: 2, kind: output, shape index: {}]
  %s3 = sld [smem:[#allocation0]]
  $region45: #{fwd.1} parent=0
    _
  %s5 = ssub.s32 1, %s3
  %s6 = scalar_select 0, %s5, %s3
  $region1: #{fwd.1} parent=0
    #allocation2 [shape = 'u8[1024]{0}', space=smem, size = 0x400, scoped, tag = 'input window, operand 0, single buffered']
    #allocation3 [shape = 's32[2]{0}', space=sflag, size = 0x8, scoped, tag = 'scoped memory for fwd.1']
    %7 = vsyncpa [#allocation3], 0
    loop: start=0, step=1, limit=4
    $region2: #{fwd.1} parent=1 // loop_pre_header
      _
    $region3: #{fwd.1} parent=1 // loop_header
      %s9 = sphi 0, %s13
      %p10 = scmp.ge.s32.totalorder %s9, 4
      %s17 = sphi 0, %s17
      %s19 = sphi 0, %s17
      %s20 = sphi 0, %s19
      %s34 = sphi 0, %s20
      %s40 = sphi 0, %s42
      %s43 = sphi 0, %s40
      %s44 = sphi 0, %s43
      %s60 = sphi 0, %s44
      %s66 = sphi 0, %s68
      %s69 = sphi 0, %s66
      %s70 = sphi 0, %s69
      %s86 = sphi 0, %s70
    $region4: #{fwd.1} parent=1 // loop_header_branch
      %12 = sbr.rel (%p10) target = $region8
    $region5: #{fwd.1} parent=1 // loop_body
      %s14 = ssub.s32 %s9, 1
      %s15 = ssub.s32 %s9, 2
      %s16 = sadd.s32 %s9, 1
      %s18 = sadd.s32 %s17, 1
      %p21 = scmp.eq.s32.totalorder %s9, 1
      %p22 = scmp.ne.s32.totalorder %s17, %s19
      %p23 = scmp.eq.s32.totalorder %s9, 0
      %p24 = por %p22, %p23
      %p25 = scmp.ne.s32.totalorder %s17, %s19
      %p26 = scmp.eq.s32.totalorder %s14, 1
      %p27 = por %p25, %p26
      %p28 = scmp.ne.s32.totalorder %s19, %s20
      %p29 = scmp.eq.s32.totalorder %s14, 0
      %p30 = por %p28, %p29
      %p31 = scmp.ne.s32.totalorder %s19, %s20
      %p32 = scmp.eq.s32.totalorder %s15, 1
      %p33 = por %p31, %p32
      %p35 = scmp.ne.s32.totalorder %s20, %s34
      %p36 = scmp.eq.s32.totalorder %s15, 0
      %p37 = por %p35, %p36
      %s38 = ssub.s32 %s9, %s16
      %p39 = scmp.eq.s32.totalorder %s38, 0
      %s41 = sadd.s32 %s40, 1
      %s42 = scalar_select %p39, %s40, %s41
      %p45 = pneg %p39
      %p46 = scmp.eq.s32.totalorder %s9, 1
      %p47 = por %p45, %p46
      %p48 = scmp.ne.s32.totalorder %s40, %s43
      %p49 = scmp.eq.s32.totalorder %s9, 0
      %p50 = por %p48, %p49
      %p51 = scmp.ne.s32.totalorder %s40, %s43
      %p52 = scmp.eq.s32.totalorder %s14, 1
      %p53 = por %p51, %p52
      %p54 = scmp.ne.s32.totalorder %s43, %s44
      %p55 = scmp.eq.s32.totalorder %s14, 0
      %p56 = por %p54, %p55
      %p57 = scmp.ne.s32.totalorder %s43, %s44
      %p58 = scmp.eq.s32.totalorder %s15, 1
      %p59 = por %p57, %p58
      %p61 = scmp.ne.s32.totalorder %s44, %s60
      %p62 = scmp.eq.s32.totalorder %s15, 0
      %p63 = por %p61, %p62
      %s64 = ssub.s32 %s9, %s16
      %p65 = scmp.eq.s32.totalorder %s64, 0
      %s67 = sadd.s32 %s66, 1
      %s68 = scalar_select %p65, %s66, %s67
      %p71 = pneg %p65
      %p72 = scmp.eq.s32.totalorder %s9, 1
      %p73 = por %p71, %p72
      %p74 = scmp.ne.s32.totalorder %s66, %s69
      %p75 = scmp.eq.s32.totalorder %s9, 0
      %p76 = por %p74, %p75
      %p77 = scmp.ne.s32.totalorder %s66, %s69
      %p78 = scmp.eq.s32.totalorder %s14, 1
      %p79 = por %p77, %p78
      %p80 = scmp.ne.s32.totalorder %s69, %s70
      %p81 = scmp.eq.s32.totalorder %s14, 0
      %p82 = por %p80, %p81
      %p83 = scmp.ne.s32.totalorder %s69, %s70
      %p84 = scmp.eq.s32.totalorder %s15, 1
      %p85 = por %p83, %p84
      %p87 = scmp.ne.s32.totalorder %s70, %s86
      %p88 = scmp.eq.s32.totalorder %s15, 0
      %p89 = por %p87, %p88
      %p90 = scmp.le.s32.totalorder 1, %s9
      %p91 = scmp.lt.s32.totalorder %s9, 3
      %p92 = pnand %p90, %p91
      %p93 = pneg %p92
      // Predicated region
      $region9: #{fwd.1} parent=5 // pred_check
        _
      $region10: #{fwd.1} parent=5 // pred_check_branch
        %95 = sbr.rel (%p92) target = $region12
      $region11: #{fwd.1} parent=5 // pred_region
        %s96 = ssub.s32 %s9, 1
        // Predicated region
        $region13: #{fwd.1} parent=11 // pred_check
          %p97 = pneg %p30
        $region14: #{fwd.1} parent=11 // pred_check_branch
          %99 = sbr.rel (%p97) target = $region16
        $region15: #{fwd.1} parent=11 // pred_region
          %101 = vsyncadd [#allocation3], 0
          %s103 = sshll.u32 %s0, 4
          %s104 = int_to_ptr.vmem [resolvable:$true] %s103
          %106 = dma.vmem_to_smem %s104, 32, [#allocation2], [#allocation3]
        $region16: #{fwd.1} parent=11 // pred_fallthru
          _
      $region12: #{fwd.1} parent=5 // pred_fallthru
        _
      %p107 = scmp.lt.s32.totalorder %s9, 2
      // Predicated region
      $region17: #{fwd.1} parent=5 // pred_check
        %p108 = pneg %p107
      $region18: #{fwd.1} parent=5 // pred_check_branch
        %110 = sbr.rel (%p108) target = $region20
      $region19: #{fwd.1} parent=5 // pred_region
        // Predicated region
        $region21: #{fwd.1} parent=19 // pred_check
          %p111 = pneg %p50
        $region22: #{fwd.1} parent=19 // pred_check_branch
          %113 = sbr.rel (%p111) target = $region24
        $region23: #{fwd.1} parent=19 // pred_region
          %p114 = scmp.lt.s32.totalorder %s9, 1
          %s115 = scalar_select %p114, %s9, 1
          %s116 = smul.addr %s115, 8
          %s117 = smul.addr %s116, 8
          %s118 = scalar_lea.vmem %s1, %s117
        $region24: #{fwd.1} parent=19 // pred_fallthru
          _
      $region20: #{fwd.1} parent=5 // pred_fallthru
        _
      %p119 = scmp.le.s32.totalorder 1, %s9
      %p120 = scmp.lt.s32.totalorder %s9, 3
      %p121 = pnand %p119, %p120
      %p122 = pneg %p121
      // Predicated region
      $region25: #{fwd.1} parent=5 // pred_check
        _
      $region26: #{fwd.1} parent=5 // pred_check_branch
        %124 = sbr.rel (%p121) target = $region28
      $region27: #{fwd.1} parent=5 // pred_region
        %s125 = ssub.s32 %s9, 1
        // Predicated region
        $region29: #{fwd.1} parent=27 // pred_check
          %p126 = pneg %p30
        $region30: #{fwd.1} parent=27 // pred_check_branch
          %128 = sbr.rel (%p126) target = $region32
        $region31: #{fwd.1} parent=27 // pred_region
          %130 = dma.done [#allocation3], 32
        $region32: #{fwd.1} parent=27 // pred_fallthru
          _
        %131 = sfence
        %p132 = pneg %p30
        %p133 = pneg %p27
        %p134 = scmp.lt.s32.totalorder %s14, 1
        %s135 = scalar_select %p134, %s14, 1
        %s136 = smul.addr %s135, 8
        %s137 = smul.addr %s136, 8
        %s138 = scalar_lea.vmem %s1, %s137
        %p139 = pneg %p56
        %p140 = pneg %p53
        %p141 = pneg %p82
        %p142 = pneg %p79
        %p143 = scmp.lt.s32.totalorder %s14, 1
        %s144 = scalar_select %p143, %s14, 1
        %s145 = smul.addr %s144, 8
        %s146 = smul.addr %s145, 8
        %s147 = scalar_lea.vmem %s2, %s146
        %p148 = scmp.lt.s32.totalorder %s14, 1
        %s149 = scalar_select %p148, %s14, 1
        %s150 = smul.addr %s149, 8
        %s151 = smul.addr %s150, 8
        %s152 = scalar_lea.vmem %s1, %s151
        %p153 = scmp.lt.s32.totalorder %s14, 1
        %s154 = scalar_select %p153, %s14, 1
        %s155 = smul.addr %s154, 8
        %s156 = smul.addr %s155, 8
        %s157 = scalar_lea.vmem %s2, %s156
        %v158 = vlaneseq
        %v159 = vshrl.u32 %v158, 7
        %v160 = vadd.s32 %v159, 8
        %v161 = vlaneseq
        %v162 = vand.u32 %v161, 127
        %vm163 = vcmp.lt.s32.totalorder %v162, 0
        %v164 = vsub.s32 0, %v162
        %v165 = vsel %vm163, %v164, %v162
        %v166 = vshrl.u32 %v165, 4
        %v167 = vand.u32 %v165, 15
        %v168 = vsub.s32 0, %v167
        %v169 = vsel %vm163, %v168, %v167
        %vm170 = vcmp.ne.s32.totalorder %v169, 0
        %vm171 = vcmp.lt.s32.totalorder %v169, 0
        %vm172 = vmand %vm171, %vm170
        %v173 = vadd.s32 %v169, 16
        %v174 = vsel %vm172, %v173, %v169
        %v175 = vadd.s32 %v159, 4294967295
        %v176 = vadd.s32 %v160, 4294967295
        %vm177 = vcmp.ge.s32.totalorder %v175, 0
        %vm178 = vcmp.ge.s32.totalorder %v176, 0
        %vm179 = vcmp.lt.s32.totalorder %v175, 16
        %vm180 = vcmp.lt.s32.totalorder %v176, 16
        %vm181 = vmand %vm177, %vm179
        %vm182 = vmand %vm178, %vm180
        %v183 = vsel %vm181, 1, 0
        %v184 = vsel %vm182, 1, 0
        %v185 = vcvt.s32.f32 %v183
        %v186 = vcvt.s32.f32 %v184
        %v187 = vadd.s32 %v174, 4294967295
        %vm188 = vcmp.ge.s32.totalorder %v187, 0
        %vm189 = vcmp.lt.s32.totalorder %v187, 16
        %vm190 = vmand %vm188, %vm189
        %v191 = vsel %vm190, 1, 0
        %v192 = vcvt.s32.f32 %v191
        %v193 = vadd.s32 %v159, 1
        %v194 = vadd.s32 %v160, 1
        %vm195 = vcmp.ge.s32.totalorder %v193, 0
        %vm196 = vcmp.ge.s32.totalorder %v194, 0
        %vm197 = vcmp.lt.s32.totalorder %v193, 16
        %vm198 = vcmp.lt.s32.totalorder %v194, 16
        %vm199 = vmand %vm195, %vm197
        %vm200 = vmand %vm196, %vm198
        %v201 = vsel %vm199, 1, 0
        %v202 = vsel %vm200, 1, 0
        %v203 = vcvt.s32.f32 %v201
        %v204 = vcvt.s32.f32 %v202
        %v205 = vadd.s32 %v174, 1
        %vm206 = vcmp.ge.s32.totalorder %v205, 0
        %vm207 = vcmp.lt.s32.totalorder %v205, 16
        %vm208 = vmand %vm206, %vm207
        %v209 = vsel %vm208, 1, 0
        %v210 = vcvt.s32.f32 %v209
        %v211 = vld [vmem:[%s152] sm:$0xff]
        %v212 = vld [vmem:[%s152 + $0x8] sm:$0xff]
        %s213 = scalar_lea.vmem %s152, 16
        %v214 = vld [vmem:[%s213] sm:$0xff]
        %v215 = vld [vmem:[%s213 + $0x8] sm:$0xff]
        %s216 = scalar_lea.vmem %s152, 32
        %v217 = vld [vmem:[%s216] sm:$0xff]
        %v218 = vld [vmem:[%s216 + $0x8] sm:$0xff]
        %s219 = scalar_lea.vmem %s152, 48
        %v220 = vld [vmem:[%s219] sm:$0xff]
        %v221 = vld [vmem:[%s219 + $0x8] sm:$0xff]
        %s222 = sld [smem:[#allocation2]]
        %v223 = vstv %s222
        %v224 = vmul.f32 %v223, %v211
        %v225 = vmul.f32 %v223, %v212
        %s226 = sld [smem:[#allocation2 + $0x1]]
        %v227 = vstv %s226
        %v228 = vmul.f32 %v227, %v214
        %v229 = vmul.f32 %v227, %v215
        %v230 = vadd.f32 %v224, %v228
        %v231 = vadd.f32 %v225, %v229
        %s232 = sld [smem:[#allocation2 + $0x2]]
        %v233 = vstv %s232
        %v234 = vmul.f32 %v233, %v217
        %v235 = vmul.f32 %v233, %v218
        %v236 = vadd.f32 %v230, %v234
        %v237 = vadd.f32 %v231, %v235
        %s238 = sld [smem:[#allocation2 + $0x3]]
        %v239 = vstv %s238
        %v240 = vmul.f32 %v239, %v220
        %v241 = vmul.f32 %v239, %v221
        %v242 = vadd.f32 %v236, %v240
        %v243 = vadd.f32 %v237, %v241
        %s244 = sld [smem:[#allocation2 + $0x10]]
        %v245 = vstv %s244
        %v246 = vadd.f32 %v242, %v245
        %v247 = vadd.f32 %v243, %v245
        %v248 = vxor.u32 %v246, 2147483648
        %v249 = vxor.u32 %v247, 2147483648
        %v250 = vmul.f32 %v248, 1.442695
        %v251 = vpow.pop %v250
        %v252 = vmul.f32 %v249, 1.442695
        %v253 = vpow.pop %v252
        %v254 = vadd.f32 %v251, 1.0
        %v255 = vadd.f32 %v253, 1.0
        %v256 = vrcp.pop %v254
        %v257 = vmul.f32 %v254, %v256
        %v258 = vsub.f32 1.0, %v257
        %v259 = vmul.f32 %v256, %v258
        %v260 = vadd.f32 %v256, %v259
        %vm261 = vweird.f32 %v254
        %vm262 = vweird.f32 %v256
        %vm263 = vmor %vm261, %vm262
        %v264 = vsel %vm263, %v256, %v260
        %v265 = vand.u32 2147483647, %v254
        %vm266 = vcmp.eq.f32.partialorder %v265, 8.507059e+37
        %v267 = vand.u32 %v254, 2147483648
        %v268 = vor.u32 1.1754944e-38, %v267
        %v269 = vsel %vm266, %v268, %v264
        %v270 = vmul.f32 1.0, %v269
        %v271 = vrcp.pop %v255
        %v272 = vmul.f32 %v255, %v271
        %v273 = vsub.f32 1.0, %v272
        %v274 = vmul.f32 %v271, %v273
        %v275 = vadd.f32 %v271, %v274
        %vm276 = vweird.f32 %v255
        %vm277 = vweird.f32 %v271
        %vm278 = vmor %vm276, %vm277
        %v279 = vsel %vm278, %v271, %v275
        %v280 = vand.u32 2147483647, %v255
        %vm281 = vcmp.eq.f32.partialorder %v280, 8.507059e+37
        %v282 = vand.u32 %v255, 2147483648
        %v283 = vor.u32 1.1754944e-38, %v282
        %v284 = vsel %vm281, %v283, %v279
        %v285 = vmul.f32 1.0, %v284
        %v286 = vmul.f32 %v246, %v270
        %v287 = vmul.f32 %v247, %v285
        %s288 = sld [smem:[#allocation2 + $0x4]]
        %v289 = vstv %s288
        %v290 = vmul.f32 %v289, %v211
        %v291 = vmul.f32 %v289, %v212
        %s292 = sld [smem:[#allocation2 + $0x5]]
        %v293 = vstv %s292
        %v294 = vmul.f32 %v293, %v214
        %v295 = vmul.f32 %v293, %v215
        %v296 = vadd.f32 %v290, %v294
        %v297 = vadd.f32 %v291, %v295
        %s298 = sld [smem:[#allocation2 + $0x6]]
        %v299 = vstv %s298
        %v300 = vmul.f32 %v299, %v217
        %v301 = vmul.f32 %v299, %v218
        %v302 = vadd.f32 %v296, %v300
        %v303 = vadd.f32 %v297, %v301
        %s304 = sld [smem:[#allocation2 + $0x7]]
        %v305 = vstv %s304
        %v306 = vmul.f32 %v305, %v220
        %v307 = vmul.f32 %v305, %v221
        %v308 = vadd.f32 %v302, %v306
        %v309 = vadd.f32 %v303, %v307
        %s310 = sld [smem:[#allocation2 + $0x11]]
        %v311 = vstv %s310
        %v312 = vadd.f32 %v308, %v311
        %v313 = vadd.f32 %v309, %v311
        %v314 = vxor.u32 %v312, 2147483648
        %v315 = vxor.u32 %v313, 2147483648
        %v316 = vmul.f32 %v314, 1.442695
        %v317 = vpow.pop %v316
        %v318 = vmul.f32 %v315, 1.442695
        %v319 = vpow.pop %v318
        %v320 = vadd.f32 %v317, 1.0
        %v321 = vadd.f32 %v319, 1.0
        %v322 = vrcp.pop %v320
        %v323 = vmul.f32 %v320, %v322
        %v324 = vsub.f32 1.0, %v323
        %v325 = vmul.f32 %v322, %v324
        %v326 = vadd.f32 %v322, %v325
        %vm327 = vweird.f32 %v320
        %vm328 = vweird.f32 %v322
        %vm329 = vmor %vm327, %vm328
        %v330 = vsel %vm329, %v322, %v326
        %v331 = vand.u32 2147483647, %v320
        %vm332 = vcmp.eq.f32.partialorder %v331, 8.507059e+37
        %v333 = vand.u32 %v320, 2147483648
        %v334 = vor.u32 1.1754944e-38, %v333
        %v335 = vsel %vm332, %v334, %v330
        %v336 = vmul.f32 1.0, %v335
        %v337 = vrcp.pop %v321
        %v338 = vmul.f32 %v321, %v337
        %v339 = vsub.f32 1.0, %v338
        %v340 = vmul.f32 %v337, %v339
        %v341 = vadd.f32 %v337, %v340
        %vm342 = vweird.f32 %v321
        %vm343 = vweird.f32 %v337
        %vm344 = vmor %vm342, %vm343
        %v345 = vsel %vm344, %v337, %v341
        %v346 = vand.u32 2147483647, %v321
        %vm347 = vcmp.eq.f32.partialorder %v346, 8.507059e+37
        %v348 = vand.u32 %v321, 2147483648
        %v349 = vor.u32 1.1754944e-38, %v348
        %v350 = vsel %vm347, %v349, %v345
        %v351 = vmul.f32 1.0, %v350
        %v352 = vmul.f32 %v312, %v336
        %v353 = vmul.f32 %v313, %v351
        %s354 = sld [smem:[#allocation2 + $0x8]]
        %v355 = vstv %s354
        %v356 = vmul.f32 %v355, %v211
        %v357 = vmul.f32 %v355, %v212
        %s358 = sld [smem:[#allocation2 + $0x9]]
        %v359 = vstv %s358
        %v360 = vmul.f32 %v359, %v214
        %v361 = vmul.f32 %v359, %v215
        %v362 = vadd.f32 %v356, %v360
        %v363 = vadd.f32 %v357, %v361
        %s364 = sld [smem:[#allocation2 + $0xa]]
        %v365 = vstv %s364
        %v366 = vmul.f32 %v365, %v217
        %v367 = vmul.f32 %v365, %v218
        %v368 = vadd.f32 %v362, %v366
        %v369 = vadd.f32 %v363, %v367
        %s370 = sld [smem:[#allocation2 + $0xb]]
        %v371 = vstv %s370
        %v372 = vmul.f32 %v371, %v220
        %v373 = vmul.f32 %v371, %v221
        %v374 = vadd.f32 %v368, %v372
        %v375 = vadd.f32 %v369, %v373
        %s376 = sld [smem:[#allocation2 + $0x12]]
        %v377 = vstv %s376
        %v378 = vadd.f32 %v374, %v377
        %v379 = vadd.f32 %v375, %v377
        %v380 = vxor.u32 %v378, 2147483648
        %v381 = vxor.u32 %v379, 2147483648
        %v382 = vmul.f32 %v380, 1.442695
        %v383 = vpow.pop %v382
        %v384 = vmul.f32 %v381, 1.442695
        %v385 = vpow.pop %v384
        %v386 = vadd.f32 %v383, 1.0
        %v387 = vadd.f32 %v385, 1.0
        %v388 = vrcp.pop %v386
        %v389 = vmul.f32 %v386, %v388
        %v390 = vsub.f32 1.0, %v389
        %v391 = vmul.f32 %v388, %v390
        %v392 = vadd.f32 %v388, %v391
        %vm393 = vweird.f32 %v386
        %vm394 = vweird.f32 %v388
        %vm395 = vmor %vm393, %vm394
        %v396 = vsel %vm395, %v388, %v392
        %v397 = vand.u32 2147483647, %v386
        %vm398 = vcmp.eq.f32.partialorder %v397, 8.507059e+37
        %v399 = vand.u32 %v386, 2147483648
        %v400 = vor.u32 1.1754944e-38, %v399
        %v401 = vsel %vm398, %v400, %v396
        %v402 = vmul.f32 1.0, %v401
        %v403 = vrcp.pop %v387
        %v404 = vmul.f32 %v387, %v403
        %v405 = vsub.f32 1.0, %v404
        %v406 = vmul.f32 %v403, %v405
        %v407 = vadd.f32 %v403, %v406
        %vm408 = vweird.f32 %v387
        %vm409 = vweird.f32 %v403
        %vm410 = vmor %vm408, %vm409
        %v411 = vsel %vm410, %v403, %v407
        %v412 = vand.u32 2147483647, %v387
        %vm413 = vcmp.eq.f32.partialorder %v412, 8.507059e+37
        %v414 = vand.u32 %v387, 2147483648
        %v415 = vor.u32 1.1754944e-38, %v414
        %v416 = vsel %vm413, %v415, %v411
        %v417 = vmul.f32 1.0, %v416
        %v418 = vmul.f32 %v378, %v402
        %v419 = vmul.f32 %v379, %v417
        %s420 = sld [smem:[#allocation2 + $0xc]]
        %v421 = vstv %s420
        %v422 = vmul.f32 %v421, %v211
        %v423 = vmul.f32 %v421, %v212
        %s424 = sld [smem:[#allocation2 + $0xd]]
        %v425 = vstv %s424
        %v426 = vmul.f32 %v425, %v214
        %v427 = vmul.f32 %v425, %v215
        %v428 = vadd.f32 %v422, %v426
        %v429 = vadd.f32 %v423, %v427
        %s430 = sld [smem:[#allocation2 + $0xe]]
        %v431 = vstv %s430
        %v432 = vmul.f32 %v431, %v217
        %v433 = vmul.f32 %v431, %v218
        %v434 = vadd.f32 %v428, %v432
        %v435 = vadd.f32 %v429, %v433
        %s436 = sld [smem:[#allocation2 + $0xf]]
        %v437 = vstv %s436
        %v438 = vmul.f32 %v437, %v220
        %v439 = vmul.f32 %v437, %v221
        %v440 = vadd.f32 %v434, %v438
        %v441 = vadd.f32 %v435, %v439
        %s442 = sld [smem:[#allocation2 + $0x13]]
        %v443 = vstv %s442
        %v444 = vadd.f32 %v440, %v443
        %v445 = vadd.f32 %v441, %v443
        %v446 = vxor.u32 %v444, 2147483648
        %v447 = vxor.u32 %v445, 2147483648
        %v448 = vmul.f32 %v446, 1.442695
        %v449 = vpow.pop %v448
        %v450 = vmul.f32 %v447, 1.442695
        %v451 = vpow.pop %v450
        %v452 = vadd.f32 %v449, 1.0
        %v453 = vadd.f32 %v451, 1.0
        %v454 = vrcp.pop %v452
        %v455 = vmul.f32 %v452, %v454
        %v456 = vsub.f32 1.0, %v455
        %v457 = vmul.f32 %v454, %v456
        %v458 = vadd.f32 %v454, %v457
        %vm459 = vweird.f32 %v452
        %vm460 = vweird.f32 %v454
        %vm461 = vmor %vm459, %vm460
        %v462 = vsel %vm461, %v454, %v458
        %v463 = vand.u32 2147483647, %v452
        %vm464 = vcmp.eq.f32.partialorder %v463, 8.507059e+37
        %v465 = vand.u32 %v452, 2147483648
        %v466 = vor.u32 1.1754944e-38, %v465
        %v467 = vsel %vm464, %v466, %v462
        %v468 = vmul.f32 1.0, %v467
        %v469 = vrcp.pop %v453
        %v470 = vmul.f32 %v453, %v469
        %v471 = vsub.f32 1.0, %v470
        %v472 = vmul.f32 %v469, %v471
        %v473 = vadd.f32 %v469, %v472
        %vm474 = vweird.f32 %v453
        %vm475 = vweird.f32 %v469
        %vm476 = vmor %vm474, %vm475
        %v477 = vsel %vm476, %v469, %v473
        %v478 = vand.u32 2147483647, %v453
        %vm479 = vcmp.eq.f32.partialorder %v478, 8.507059e+37
        %v480 = vand.u32 %v453, 2147483648
        %v481 = vor.u32 1.1754944e-38, %v480
        %v482 = vsel %vm479, %v481, %v477
        %v483 = vmul.f32 1.0, %v482
        %v484 = vmul.f32 %v444, %v468
        %v485 = vmul.f32 %v445, %v483
        %s486 = sld [smem:[#allocation2 + $0x9e]]
        %v487 = vstv %s486
        %v488 = vmul.f32 %v487, %v286
        %v489 = vmul.f32 %v487, %v287
        %s490 = sld [smem:[#allocation2 + $0xa8]]
        %v491 = vstv %s490
        %v492 = vmul.f32 %v491, %v286
        %v493 = vmul.f32 %v491, %v287
        %s494 = sld [smem:[#allocation2 + $0xb2]]
        %v495 = vstv %s494
        %v496 = vmul.f32 %v495, %v286
        %v497 = vmul.f32 %v495, %v287
        %s498 = sld [smem:[#allocation2 + $0xbc]]
        %v499 = vstv %s498
        %v500 = vmul.f32 %v499, %v286
        %v501 = vmul.f32 %v499, %v287
        %s502 = sld [smem:[#allocation2 + $0x9f]]
        %v503 = vstv %s502
        %v504 = vmul.f32 %v503, %v352
        %v505 = vmul.f32 %v503, %v353
        %v506 = vadd.f32 %v488, %v504
        %v507 = vadd.f32 %v489, %v505
        %s508 = sld [smem:[#allocation2 + $0xa9]]
        %v509 = vstv %s508
        %v510 = vmul.f32 %v509, %v352
        %v511 = vmul.f32 %v509, %v353
        %v512 = vadd.f32 %v492, %v510
        %v513 = vadd.f32 %v493, %v511
        %s514 = sld [smem:[#allocation2 + $0xb3]]
        %v515 = vstv %s514
        %v516 = vmul.f32 %v515, %v352
        %v517 = vmul.f32 %v515, %v353
        %v518 = vadd.f32 %v496, %v516
        %v519 = vadd.f32 %v497, %v517
        %s520 = sld [smem:[#allocation2 + $0xbd]]
        %v521 = vstv %s520
        %v522 = vmul.f32 %v521, %v352
        %v523 = vmul.f32 %v521, %v353
        %v524 = vadd.f32 %v500, %v522
        %v525 = vadd.f32 %v501, %v523
        %s526 = sld [smem:[#allocation2 + $0xa4]]
        %v527 = vstv %s526
        %v528 = vmul.f32 %v527, %v418
        %v529 = vmul.f32 %v527, %v419
        %v530 = vadd.f32 %v506, %v528
        %v531 = vadd.f32 %v507, %v529
        %s532 = sld [smem:[#allocation2 + $0xae]]
        %v533 = vstv %s532
        %v534 = vmul.f32 %v533, %v418
        %v535 = vmul.f32 %v533, %v419
        %v536 = vadd.f32 %v512, %v534
        %v537 = vadd.f32 %v513, %v535
        %s538 = sld [smem:[#allocation2 + $0xb8]]
        %v539 = vstv %s538
        %v540 = vmul.f32 %v539, %v418
        %v541 = vmul.f32 %v539, %v419
        %v542 = vadd.f32 %v518, %v540
        %v543 = vadd.f32 %v519, %v541
        %s544 = sld [smem:[#allocation2 + $0xc2]]
        %v545 = vstv %s544
        %v546 = vmul.f32 %v545, %v418
        %v547 = vmul.f32 %v545, %v419
        %v548 = vadd.f32 %v524, %v546
        %v549 = vadd.f32 %v525, %v547
        %s550 = sld [smem:[#allocation2 + $0xa5]]
        %v551 = vstv %s550
        %v552 = vmul.f32 %v551, %v484
        %v553 = vmul.f32 %v551, %v485
        %v554 = vadd.f32 %v530, %v552
        %v555 = vadd.f32 %v531, %v553
        %s556 = sld [smem:[#allocation2 + $0xaf]]
        %v557 = vstv %s556
        %v558 = vmul.f32 %v557, %v484
        %v559 = vmul.f32 %v557, %v485
        %v560 = vadd.f32 %v536, %v558
        %v561 = vadd.f32 %v537, %v559
        %s562 = sld [smem:[#allocation2 + $0xb9]]
        %v563 = vstv %s562
        %v564 = vmul.f32 %v563, %v484
        %v565 = vmul.f32 %v563, %v485
        %v566 = vadd.f32 %v542, %v564
        %v567 = vadd.f32 %v543, %v565
        %s568 = sld [smem:[#allocation2 + $0xc3]]
        %v569 = vstv %s568
        %v570 = vmul.f32 %v569, %v484
        %v571 = vmul.f32 %v569, %v485
        %v572 = vadd.f32 %v548, %v570
        %v573 = vadd.f32 %v549, %v571
        %v574 = vrot.slane %v286, 7
        %v575 = vrot.slane %v287, 7
        %vm576 = vcmp.lt.s32.totalorder %v159, 1
        %v577 = vsel %vm576, %v574, %v575
        %v578 = vsel %vm576, %v575, %v574
        %v579 = vmul.f32 %v578, %v185
        %v580 = vmul.f32 %v577, %v186
        %581 = vrot.lane.b32.xlu0 %v579, 1
        %v582 = vpop.permute.xlu0 %581
        %583 = vrot.lane.b32.xlu0 %v580, 1
        %v584 = vpop.permute.xlu0 %583
        %v585 = vmul.f32 %v582, %v192
        %v586 = vmul.f32 %v584, %v192
        %s587 = sld [smem:[#allocation2 + $0x14]]
        %v588 = vstv %s587
        %v589 = vmul.f32 %v588, %v585
        %v590 = vmul.f32 %v588, %v586
        %s591 = sld [smem:[#allocation2 + $0x3a]]
        %v592 = vstv %s591
        %v593 = vmul.f32 %v592, %v585
        %v594 = vmul.f32 %v592, %v586
        %s595 = sld [smem:[#allocation2 + $0x26]]
        %v596 = vstv %s595
        %v597 = vmul.f32 %v596, %v585
        %v598 = vmul.f32 %v596, %v586
        %s599 = sld [smem:[#allocation2 + $0x4c]]
        %v600 = vstv %s599
        %v601 = vmul.f32 %v600, %v585
        %v602 = vmul.f32 %v600, %v586
        %s603 = sld [smem:[#allocation2 + $0x15]]
        %v604 = vstv %s603
        %v605 = vmul.f32 %v604, %v579
        %v606 = vmul.f32 %v604, %v580
        %v607 = vadd.f32 %v589, %v605
        %v608 = vadd.f32 %v590, %v606
        %s609 = sld [smem:[#allocation2 + $0x3b]]
        %v610 = vstv %s609
        %v611 = vmul.f32 %v610, %v579
        %v612 = vmul.f32 %v610, %v580
        %v613 = vadd.f32 %v593, %v611
        %v614 = vadd.f32 %v594, %v612
        %s615 = sld [smem:[#allocation2 + $0x27]]
        %v616 = vstv %s615
        %v617 = vmul.f32 %v616, %v579
        %v618 = vmul.f32 %v616, %v580
        %v619 = vadd.f32 %v597, %v617
        %v620 = vadd.f32 %v598, %v618
        %s621 = sld [smem:[#allocation2 + $0x4d]]
        %v622 = vstv %s621
        %v623 = vmul.f32 %v622, %v579
        %v624 = vmul.f32 %v622, %v580
        %v625 = vadd.f32 %v601, %v623
        %v626 = vadd.f32 %v602, %v624
        %627 = vrot.lane.b32.xlu0 %v579, 127
        %v628 = vpop.permute.xlu0 %627
        %629 = vrot.lane.b32.xlu0 %v580, 127
        %v630 = vpop.permute.xlu0 %629
        %v631 = vmul.f32 %v628, %v210
        %v632 = vmul.f32 %v630, %v210
        %s633 = sld [smem:[#allocation2 + $0x16]]
        %v634 = vstv %s633
        %v635 = vmul.f32 %v634, %v631
        %v636 = vmul.f32 %v634, %v632
        %v637 = vadd.f32 %v607, %v635
        %v638 = vadd.f32 %v608, %v636
        %s639 = sld [smem:[#allocation2 + $0x3c]]
        %v640 = vstv %s639
        %v641 = vmul.f32 %v640, %v631
        %v642 = vmul.f32 %v640, %v632
        %v643 = vadd.f32 %v613, %v641
        %v644 = vadd.f32 %v614, %v642
        %s645 = sld [smem:[#allocation2 + $0x28]]
        %v646 = vstv %s645
        %v647 = vmul.f32 %v646, %v631
        %v648 = vmul.f32 %v646, %v632
        %v649 = vadd.f32 %v619, %v647
        %v650 = vadd.f32 %v620, %v648
        %s651 = sld [smem:[#allocation2 + $0x4e]]
        %v652 = vstv %s651
        %v653 = vmul.f32 %v652, %v631
        %v654 = vmul.f32 %v652, %v632
        %v655 = vadd.f32 %v625, %v653
        %v656 = vadd.f32 %v626, %v654
        %657 = vrot.lane.b32.xlu0 %v286, 1
        %v658 = vpop.permute.xlu0 %657
        %659 = vrot.lane.b32.xlu0 %v287, 1
        %v660 = vpop.permute.xlu0 %659
        %v661 = vmul.f32 %v658, %v192
        %v662 = vmul.f32 %v660, %v192
        %s663 = sld [smem:[#allocation2 + $0x17]]
        %v664 = vstv %s663
        %v665 = vmul.f32 %v664, %v661
        %v666 = vmul.f32 %v664, %v662
        %v667 = vadd.f32 %v637, %v665
        %v668 = vadd.f32 %v638, %v666
        %s669 = sld [smem:[#allocation2 + $0x3d]]
        %v670 = vstv %s669
        %v671 = vmul.f32 %v670, %v661
        %v672 = vmul.f32 %v670, %v662
        %v673 = vadd.f32 %v643, %v671
        %v674 = vadd.f32 %v644, %v672
        %s675 = sld [smem:[#allocation2 + $0x29]]
        %v676 = vstv %s675
        %v677 = vmul.f32 %v676, %v661
        %v678 = vmul.f32 %v676, %v662
        %v679 = vadd.f32 %v649, %v677
        %v680 = vadd.f32 %v650, %v678
        %s681 = sld [smem:[#allocation2 + $0x4f]]
        %v682 = vstv %s681
        %v683 = vmul.f32 %v682, %v661
        %v684 = vmul.f32 %v682, %v662
        %v685 = vadd.f32 %v655, %v683
        %v686 = vadd.f32 %v656, %v684
        %s687 = sld [smem:[#allocation2 + $0x18]]
        %v688 = vstv %s687
        %v689 = vmul.f32 %v688, %v286
        %v690 = vmul.f32 %v688, %v287
        %v691 = vadd.f32 %v667, %v689
        %v692 = vadd.f32 %v668, %v690
        %s693 = sld [smem:[#allocation2 + $0x3e]]
        %v694 = vstv %s693
        %v695 = vmul.f32 %v694, %v286
        %v696 = vmul.f32 %v694, %v287
        %v697 = vadd.f32 %v673, %v695
        %v698 = vadd.f32 %v674, %v696
        %s699 = sld [smem:[#allocation2 + $0x2a]]
        %v700 = vstv %s699
        %v701 = vmul.f32 %v700, %v286
        %v702 = vmul.f32 %v700, %v287
        %v703 = vadd.f32 %v679, %v701
        %v704 = vadd.f32 %v680, %v702
        %s705 = sld [smem:[#allocation2 + $0x50]]
        %v706 = vstv %s705
        %v707 = vmul.f32 %v706, %v286
        %v708 = vmul.f32 %v706, %v287
        %v709 = vadd.f32 %v685, %v707
        %v710 = vadd.f32 %v686, %v708
        %711 = vrot.lane.b32.xlu0 %v286, 127
        %v712 = vpop.permute.xlu0 %711
        %713 = vrot.lane.b32.xlu0 %v287, 127
        %v714 = vpop.permute.xlu0 %713
        %v715 = vmul.f32 %v712, %v210
        %v716 = vmul.f32 %v714, %v210
        %s717 = sld [smem:[#allocation2 + $0x19]]
        %v718 = vstv %s717
        %v719 = vmul.f32 %v718, %v715
        %v720 = vmul.f32 %v718, %v716
        %v721 = vadd.f32 %v691, %v719
        %v722 = vadd.f32 %v692, %v720
        %s723 = sld [smem:[#allocation2 + $0x3f]]
        %v724 = vstv %s723
        %v725 = vmul.f32 %v724, %v715
        %v726 = vmul.f32 %v724, %v716
        %v727 = vadd.f32 %v697, %v725
        %v728 = vadd.f32 %v698, %v726
        %s729 = sld [smem:[#allocation2 + $0x2b]]
        %v730 = vstv %s729
        %v731 = vmul.f32 %v730, %v715
        %v732 = vmul.f32 %v730, %v716
        %v733 = vadd.f32 %v703, %v731
        %v734 = vadd.f32 %v704, %v732
        %s735 = sld [smem:[#allocation2 + $0x51]]
        %v736 = vstv %s735
        %v737 = vmul.f32 %v736, %v715
        %v738 = vmul.f32 %v736, %v716
        %v739 = vadd.f32 %v709, %v737
        %v740 = vadd.f32 %v710, %v738
        %v741 = vrot.slane %v286, 1
        %v742 = vrot.slane %v287, 1
        %vm743 = vcmp.lt.s32.totalorder %v159, 7
        %v744 = vsel %vm743, %v741, %v742
        %v745 = vsel %vm743, %v742, %v741
        %v746 = vmul.f32 %v744, %v203
        %v747 = vmul.f32 %v745, %v204
        %748 = vrot.lane.b32.xlu0 %v746, 1
        %v749 = vpop.permute.xlu0 %748
        %750 = vrot.lane.b32.xlu0 %v747, 1
        %v751 = vpop.permute.xlu0 %750
        %v752 = vmul.f32 %v749, %v192
        %v753 = vmul.f32 %v751, %v192
        %s754 = sld [smem:[#allocation2 + $0x1a]]
        %v755 = vstv %s754
        %v756 = vmul.f32 %v755, %v752
        %v757 = vmul.f32 %v755, %v753
        %v758 = vadd.f32 %v721, %v756
        %v759 = vadd.f32 %v722, %v757
        %s760 = sld [smem:[#allocation2 + $0x40]]
        %v761 = vstv %s760
        %v762 = vmul.f32 %v761, %v752
        %v763 = vmul.f32 %v761, %v753
        %v764 = vadd.f32 %v727, %v762
        %v765 = vadd.f32 %v728, %v763
        %s766 = sld [smem:[#allocation2 + $0x2c]]
        %v767 = vstv %s766
        %v768 = vmul.f32 %v767, %v752
        %v769 = vmul.f32 %v767, %v753
        %v770 = vadd.f32 %v733, %v768
        %v771 = vadd.f32 %v734, %v769
        %s772 = sld [smem:[#allocation2 + $0x52]]
        %v773 = vstv %s772
        %v774 = vmul.f32 %v773, %v752
        %v775 = vmul.f32 %v773, %v753
        %v776 = vadd.f32 %v739, %v774
        %v777 = vadd.f32 %v740, %v775
        %s778 = sld [smem:[#allocation2 + $0x1b]]
        %v779 = vstv %s778
        %v780 = vmul.f32 %v779, %v746
        %v781 = vmul.f32 %v779, %v747
        %v782 = vadd.f32 %v758, %v780
        %v783 = vadd.f32 %v759, %v781
        %s784 = sld [smem:[#allocation2 + $0x41]]
        %v785 = vstv %s784
        %v786 = vmul.f32 %v785, %v746
        %v787 = vmul.f32 %v785, %v747
        %v788 = vadd.f32 %v764, %v786
        %v789 = vadd.f32 %v765, %v787
        %s790 = sld [smem:[#allocation2 + $0x2d]]
        %v791 = vstv %s790
        %v792 = vmul.f32 %v791, %v746
        %v793 = vmul.f32 %v791, %v747
        %v794 = vadd.f32 %v770, %v792
        %v795 = vadd.f32 %v771, %v793
        %s796 = sld [smem:[#allocation2 + $0x53]]
        %v797 = vstv %s796
        %v798 = vmul.f32 %v797, %v746
        %v799 = vmul.f32 %v797, %v747
        %v800 = vadd.f32 %v776, %v798
        %v801 = vadd.f32 %v777, %v799
        %802 = vrot.lane.b32.xlu0 %v746, 127
        %v803 = vpop.permute.xlu0 %802
        %804 = vrot.lane.b32.xlu0 %v747, 127
        %v805 = vpop.permute.xlu0 %804
        %v806 = vmul.f32 %v803, %v210
        %v807 = vmul.f32 %v805, %v210
        %s808 = sld [smem:[#allocation2 + $0x1c]]
        %v809 = vstv %s808
        %v810 = vmul.f32 %v809, %v806
        %v811 = vmul.f32 %v809, %v807
        %v812 = vadd.f32 %v782, %v810
        %v813 = vadd.f32 %v783, %v811
        %s814 = sld [smem:[#allocation2 + $0x42]]
        %v815 = vstv %s814
        %v816 = vmul.f32 %v815, %v806
        %v817 = vmul.f32 %v815, %v807
        %v818 = vadd.f32 %v788, %v816
        %v819 = vadd.f32 %v789, %v817
        %s820 = sld [smem:[#allocation2 + $0x2e]]
        %v821 = vstv %s820
        %v822 = vmul.f32 %v821, %v806
        %v823 = vmul.f32 %v821, %v807
        %v824 = vadd.f32 %v794, %v822
        %v825 = vadd.f32 %v795, %v823
        %s826 = sld [smem:[#allocation2 + $0x54]]
        %v827 = vstv %s826
        %v828 = vmul.f32 %v827, %v806
        %v829 = vmul.f32 %v827, %v807
        %v830 = vadd.f32 %v800, %v828
        %v831 = vadd.f32 %v801, %v829
        %v832 = vrot.slane %v352, 7
        %v833 = vrot.slane %v353, 7
        %v834 = vsel %vm576, %v832, %v833
        %v835 = vsel %vm576, %v833, %v832
        %v836 = vmul.f32 %v835, %v185
        %v837 = vmul.f32 %v834, %v186
        %838 = vrot.lane.b32.xlu0 %v836, 1
        %v839 = vpop.permute.xlu0 %838
        %840 = vrot.lane.b32.xlu0 %v837, 1
        %v841 = vpop.permute.xlu0 %840
        %v842 = vmul.f32 %v839, %v192
        %v843 = vmul.f32 %v841, %v192
        %s844 = sld [smem:[#allocation2 + $0x1d]]
        %v845 = vstv %s844
        %v846 = vmul.f32 %v845, %v842
        %v847 = vmul.f32 %v845, %v843
        %v848 = vadd.f32 %v812, %v846
        %v849 = vadd.f32 %v813, %v847
        %s850 = sld [smem:[#allocation2 + $0x43]]
        %v851 = vstv %s850
        %v852 = vmul.f32 %v851, %v842
        %v853 = vmul.f32 %v851, %v843
        %v854 = vadd.f32 %v818, %v852
        %v855 = vadd.f32 %v819, %v853
        %s856 = sld [smem:[#allocation2 + $0x2f]]
        %v857 = vstv %s856
        %v858 = vmul.f32 %v857, %v842
        %v859 = vmul.f32 %v857, %v843
        %v860 = vadd.f32 %v824, %v858
        %v861 = vadd.f32 %v825, %v859
        %s862 = sld [smem:[#allocation2 + $0x55]]
        %v863 = vstv %s862
        %v864 = vmul.f32 %v863, %v842
        %v865 = vmul.f32 %v863, %v843
        %v866 = vadd.f32 %v830, %v864
        %v867 = vadd.f32 %v831, %v865
        %s868 = sld [smem:[#allocation2 + $0x1e]]
        %v869 = vstv %s868
        %v870 = vmul.f32 %v869, %v836
        %v871 = vmul.f32 %v869, %v837
        %v872 = vadd.f32 %v848, %v870
        %v873 = vadd.f32 %v849, %v871
        %s874 = sld [smem:[#allocation2 + $0x44]]
        %v875 = vstv %s874
        %v876 = vmul.f32 %v875, %v836
        %v877 = vmul.f32 %v875, %v837
        %v878 = vadd.f32 %v854, %v876
        %v879 = vadd.f32 %v855, %v877
        %s880 = sld [smem:[#allocation2 + $0x30]]
        %v881 = vstv %s880
        %v882 = vmul.f32 %v881, %v836
        %v883 = vmul.f32 %v881, %v837
        %v884 = vadd.f32 %v860, %v882
        %v885 = vadd.f32 %v861, %v883
        %s886 = sld [smem:[#allocation2 + $0x56]]
        %v887 = vstv %s886
        %v888 = vmul.f32 %v887, %v836
        %v889 = vmul.f32 %v887, %v837
        %v890 = vadd.f32 %v866, %v888
        %v891 = vadd.f32 %v867, %v889
        %892 = vrot.lane.b32.xlu0 %v836, 127
        %v893 = vpop.permute.xlu0 %892
        %894 = vrot.lane.b32.xlu0 %v837, 127
        %v895 = vpop.permute.xlu0 %894
        %v896 = vmul.f32 %v893, %v210
        %v897 = vmul.f32 %v895, %v210
        %s898 = sld [smem:[#allocation2 + $0x1f]]
        %v899 = vstv %s898
        %v900 = vmul.f32 %v899, %v896
        %v901 = vmul.f32 %v899, %v897
        %v902 = vadd.f32 %v872, %v900
        %v903 = vadd.f32 %v873, %v901
        %s904 = sld [smem:[#allocation2 + $0x45]]
        %v905 = vstv %s904
        %v906 = vmul.f32 %v905, %v896
        %v907 = vmul.f32 %v905, %v897
        %v908 = vadd.f32 %v878, %v906
        %v909 = vadd.f32 %v879, %v907
        %s910 = sld [smem:[#allocation2 + $0x31]]
        %v911 = vstv %s910
        %v912 = vmul.f32 %v911, %v896
        %v913 = vmul.f32 %v911, %v897
        %v914 = vadd.f32 %v884, %v912
        %v915 = vadd.f32 %v885, %v913
        %s916 = sld [smem:[#allocation2 + $0x57]]
        %v917 = vstv %s916
        %v918 = vmul.f32 %v917, %v896
        %v919 = vmul.f32 %v917, %v897
        %v920 = vadd.f32 %v890, %v918
        %v921 = vadd.f32 %v891, %v919
        %922 = vrot.lane.b32.xlu0 %v352, 1
        %v923 = vpop.permute.xlu0 %922
        %924 = vrot.lane.b32.xlu0 %v353, 1
        %v925 = vpop.permute.xlu0 %924
        %v926 = vmul.f32 %v923, %v192
        %v927 = vmul.f32 %v925, %v192
        %s928 = sld [smem:[#allocation2 + $0x20]]
        %v929 = vstv %s928
        %v930 = vmul.f32 %v929, %v926
        %v931 = vmul.f32 %v929, %v927
        %v932 = vadd.f32 %v902, %v930
        %v933 = vadd.f32 %v903, %v931
        %s934 = sld [smem:[#allocation2 + $0x46]]
        %v935 = vstv %s934
        %v936 = vmul.f32 %v935, %v926
        %v937 = vmul.f32 %v935, %v927
        %v938 = vadd.f32 %v908, %v936
        %v939 = vadd.f32 %v909, %v937
        %s940 = sld [smem:[#allocation2 + $0x32]]
        %v941 = vstv %s940
        %v942 = vmul.f32 %v941, %v926
        %v943 = vmul.f32 %v941, %v927
        %v944 = vadd.f32 %v914, %v942
        %v945 = vadd.f32 %v915, %v943
        %s946 = sld [smem:[#allocation2 + $0x58]]
        %v947 = vstv %s946
        %v948 = vmul.f32 %v947, %v926
        %v949 = vmul.f32 %v947, %v927
        %v950 = vadd.f32 %v920, %v948
        %v951 = vadd.f32 %v921, %v949
        %s952 = sld [smem:[#allocation2 + $0x21]]
        %v953 = vstv %s952
        %v954 = vmul.f32 %v953, %v352
        %v955 = vmul.f32 %v953, %v353
        %v956 = vadd.f32 %v932, %v954
        %v957 = vadd.f32 %v933, %v955
        %s958 = sld [smem:[#allocation2 + $0x47]]
        %v959 = vstv %s958
        %v960 = vmul.f32 %v959, %v352
        %v961 = vmul.f32 %v959, %v353
        %v962 = vadd.f32 %v938, %v960
        %v963 = vadd.f32 %v939, %v961
        %s964 = sld [smem:[#allocation2 + $0x33]]
        %v965 = vstv %s964
        %v966 = vmul.f32 %v965, %v352
        %v967 = vmul.f32 %v965, %v353
        %v968 = vadd.f32 %v944, %v966
        %v969 = vadd.f32 %v945, %v967
        %s970 = sld [smem:[#allocation2 + $0x59]]
        %v971 = vstv %s970
        %v972 = vmul.f32 %v971, %v352
        %v973 = vmul.f32 %v971, %v353
        %v974 = vadd.f32 %v950, %v972
        %v975 = vadd.f32 %v951, %v973
        %976 = vrot.lane.b32.xlu0 %v352, 127
        %v977 = vpop.permute.xlu0 %976
        %978 = vrot.lane.b32.xlu0 %v353, 127
        %v979 = vpop.permute.xlu0 %978
        %v980 = vmul.f32 %v977, %v210
        %v981 = vmul.f32 %v979, %v210
        %s982 = sld [smem:[#allocation2 + $0x22]]
        %v983 = vstv %s982
        %v984 = vmul.f32 %v983, %v980
        %v985 = vmul.f32 %v983, %v981
        %v986 = vadd.f32 %v956, %v984
        %v987 = vadd.f32 %v957, %v985
        %s988 = sld [smem:[#allocation2 + $0x48]]
        %v989 = vstv %s988
        %v990 = vmul.f32 %v989, %v980
        %v991 = vmul.f32 %v989, %v981
        %v992 = vadd.f32 %v962, %v990
        %v993 = vadd.f32 %v963, %v991
        %s994 = sld [smem:[#allocation2 + $0x34]]
        %v995 = vstv %s994
        %v996 = vmul.f32 %v995, %v980
        %v997 = vmul.f32 %v995, %v981
        %v998 = vadd.f32 %v968, %v996
        %v999 = vadd.f32 %v969, %v997
        %s1000 = sld [smem:[#allocation2 + $0x5a]]
        %v1001 = vstv %s1000
        %v1002 = vmul.f32 %v1001, %v980
        %v1003 = vmul.f32 %v1001, %v981
        %v1004 = vadd.f32 %v974, %v1002
        %v1005 = vadd.f32 %v975, %v1003
        %v1006 = vrot.slane %v352, 1
        %v1007 = vrot.slane %v353, 1
        %v1008 = vsel %vm743, %v1006, %v1007
        %v1009 = vsel %vm743, %v1007, %v1006
        %v1010 = vmul.f32 %v1008, %v203
        %v1011 = vmul.f32 %v1009, %v204
        %1012 = vrot.lane.b32.xlu0 %v1010, 1
        %v1013 = vpop.permute.xlu0 %1012
        %1014 = vrot.lane.b32.xlu0 %v1011, 1
        %v1015 = vpop.permute.xlu0 %1014
        %v1016 = vmul.f32 %v1013, %v192
        %v1017 = vmul.f32 %v1015, %v192
        %s1018 = sld [smem:[#allocation2 + $0x23]]
        %v1019 = vstv %s1018
        %v1020 = vmul.f32 %v1019, %v1016
        %v1021 = vmul.f32 %v1019, %v1017
        %v1022 = vadd.f32 %v986, %v1020
        %v1023 = vadd.f32 %v987, %v1021
        %s1024 = sld [smem:[#allocation2 + $0x49]]
        %v1025 = vstv %s1024
        %v1026 = vmul.f32 %v1025, %v1016
        %v1027 = vmul.f32 %v1025, %v1017
        %v1028 = vadd.f32 %v992, %v1026
        %v1029 = vadd.f32 %v993, %v1027
        %s1030 = sld [smem:[#allocation2 + $0x35]]
        %v1031 = vstv %s1030
        %v1032 = vmul.f32 %v1031, %v1016
        %v1033 = vmul.f32 %v1031, %v1017
        %v1034 = vadd.f32 %v998, %v1032
        %v1035 = vadd.f32 %v999, %v1033
        %s1036 = sld [smem:[#allocation2 + $0x5b]]
        %v1037 = vstv %s1036
        %v1038 = vmul.f32 %v1037, %v1016
        %v1039 = vmul.f32 %v1037, %v1017
        %v1040 = vadd.f32 %v1004, %v1038
        %v1041 = vadd.f32 %v1005, %v1039
        %s1042 = sld [smem:[#allocation2 + $0x24]]
        %v1043 = vstv %s1042
        %v1044 = vmul.f32 %v1043, %v1010
        %v1045 = vmul.f32 %v1043, %v1011
        %v1046 = vadd.f32 %v1022, %v1044
        %v1047 = vadd.f32 %v1023, %v1045
        %s1048 = sld [smem:[#allocation2 + $0x4a]]
        %v1049 = vstv %s1048
        %v1050 = vmul.f32 %v1049, %v1010
        %v1051 = vmul.f32 %v1049, %v1011
        %v1052 = vadd.f32 %v1028, %v1050
        %v1053 = vadd.f32 %v1029, %v1051
        %s1054 = sld [smem:[#allocation2 + $0x36]]
        %v1055 = vstv %s1054
        %v1056 = vmul.f32 %v1055, %v1010
        %v1057 = vmul.f32 %v1055, %v1011
        %v1058 = vadd.f32 %v1034, %v1056
        %v1059 = vadd.f32 %v1035, %v1057
        %s1060 = sld [smem:[#allocation2 + $0x5c]]
        %v1061 = vstv %s1060
        %v1062 = vmul.f32 %v1061, %v1010
        %v1063 = vmul.f32 %v1061, %v1011
        %v1064 = vadd.f32 %v1040, %v1062
        %v1065 = vadd.f32 %v1041, %v1063
        %1066 = vrot.lane.b32.xlu0 %v1010, 127
        %v1067 = vpop.permute.xlu0 %1066
        %1068 = vrot.lane.b32.xlu0 %v1011, 127
        %v1069 = vpop.permute.xlu0 %1068
        %v1070 = vmul.f32 %v1067, %v210
        %v1071 = vmul.f32 %v1069, %v210
        %s1072 = sld [smem:[#allocation2 + $0x25]]
        %v1073 = vstv %s1072
        %v1074 = vmul.f32 %v1073, %v1070
        %v1075 = vmul.f32 %v1073, %v1071
        %v1076 = vadd.f32 %v1046, %v1074
        %v1077 = vadd.f32 %v1047, %v1075
        %s1078 = sld [smem:[#allocation2 + $0x4b]]
        %v1079 = vstv %s1078
        %v1080 = vmul.f32 %v1079, %v1070
        %v1081 = vmul.f32 %v1079, %v1071
        %v1082 = vadd.f32 %v1052, %v1080
        %v1083 = vadd.f32 %v1053, %v1081
        %s1084 = sld [smem:[#allocation2 + $0x37]]
        %v1085 = vstv %s1084
        %v1086 = vmul.f32 %v1085, %v1070
        %v1087 = vmul.f32 %v1085, %v1071
        %v1088 = vadd.f32 %v1058, %v1086
        %v1089 = vadd.f32 %v1059, %v1087
        %s1090 = sld [smem:[#allocation2 + $0x5d]]
        %v1091 = vstv %s1090
        %v1092 = vmul.f32 %v1091, %v1070
        %v1093 = vmul.f32 %v1091, %v1071
        %v1094 = vadd.f32 %v1064, %v1092
        %v1095 = vadd.f32 %v1065, %v1093
        %s1096 = sld [smem:[#allocation2 + $0x38]]
        %v1097 = vstv %s1096
        %v1098 = vadd.f32 %v1076, %v1097
        %v1099 = vadd.f32 %v1077, %v1097
        %v1100 = vxor.u32 %v1098, 2147483648
        %v1101 = vxor.u32 %v1099, 2147483648
        %v1102 = vmul.f32 %v1100, 1.442695
        %v1103 = vpow.pop %v1102
        %v1104 = vmul.f32 %v1101, 1.442695
        %v1105 = vpow.pop %v1104
        %v1106 = vadd.f32 %v1103, 1.0
        %v1107 = vadd.f32 %v1105, 1.0
        %v1108 = vrcp.pop %v1106
        %v1109 = vmul.f32 %v1106, %v1108
        %v1110 = vsub.f32 1.0, %v1109
        %v1111 = vmul.f32 %v1108, %v1110
        %v1112 = vadd.f32 %v1108, %v1111
        %vm1113 = vweird.f32 %v1106
        %vm1114 = vweird.f32 %v1108
        %vm1115 = vmor %vm1113, %vm1114
        %v1116 = vsel %vm1115, %v1108, %v1112
        %v1117 = vand.u32 2147483647, %v1106
        %vm1118 = vcmp.eq.f32.partialorder %v1117, 8.507059e+37
        %v1119 = vand.u32 %v1106, 2147483648
        %v1120 = vor.u32 1.1754944e-38, %v1119
        %v1121 = vsel %vm1118, %v1120, %v1116
        %v1122 = vmul.f32 1.0, %v1121
        %v1123 = vrcp.pop %v1107
        %v1124 = vmul.f32 %v1107, %v1123
        %v1125 = vsub.f32 1.0, %v1124
        %v1126 = vmul.f32 %v1123, %v1125
        %v1127 = vadd.f32 %v1123, %v1126
        %vm1128 = vweird.f32 %v1107
        %vm1129 = vweird.f32 %v1123
        %vm1130 = vmor %vm1128, %vm1129
        %v1131 = vsel %vm1130, %v1123, %v1127
        %v1132 = vand.u32 2147483647, %v1107
        %vm1133 = vcmp.eq.f32.partialorder %v1132, 8.507059e+37
        %v1134 = vand.u32 %v1107, 2147483648
        %v1135 = vor.u32 1.1754944e-38, %v1134
        %v1136 = vsel %vm1133, %v1135, %v1131
        %v1137 = vmul.f32 1.0, %v1136
        %v1138 = vmul.f32 %v1098, %v1122
        %v1139 = vmul.f32 %v1099, %v1137
        %s1140 = sld [smem:[#allocation2 + $0x39]]
        %v1141 = vstv %s1140
        %v1142 = vadd.f32 %v1088, %v1141
        %v1143 = vadd.f32 %v1089, %v1141
        %v1144 = vxor.u32 %v1142, 2147483648
        %v1145 = vxor.u32 %v1143, 2147483648
        %v1146 = vmul.f32 %v1144, 1.442695
        %v1147 = vpow.pop %v1146
        %v1148 = vmul.f32 %v1145, 1.442695
        %v1149 = vpow.pop %v1148
        %v1150 = vadd.f32 %v1147, 1.0
        %v1151 = vadd.f32 %v1149, 1.0
        %v1152 = vrcp.pop %v1150
        %v1153 = vmul.f32 %v1150, %v1152
        %v1154 = vsub.f32 1.0, %v1153
        %v1155 = vmul.f32 %v1152, %v1154
        %v1156 = vadd.f32 %v1152, %v1155
        %vm1157 = vweird.f32 %v1150
        %vm1158 = vweird.f32 %v1152
        %vm1159 = vmor %vm1157, %vm1158
        %v1160 = vsel %vm1159, %v1152, %v1156
        %v1161 = vand.u32 2147483647, %v1150
        %vm1162 = vcmp.eq.f32.partialorder %v1161, 8.507059e+37
        %v1163 = vand.u32 %v1150, 2147483648
        %v1164 = vor.u32 1.1754944e-38, %v1163
        %v1165 = vsel %vm1162, %v1164, %v1160
        %v1166 = vmul.f32 1.0, %v1165
        %v1167 = vrcp.pop %v1151
        %v1168 = vmul.f32 %v1151, %v1167
        %v1169 = vsub.f32 1.0, %v1168
        %v1170 = vmul.f32 %v1167, %v1169
        %v1171 = vadd.f32 %v1167, %v1170
        %vm1172 = vweird.f32 %v1151
        %vm1173 = vweird.f32 %v1167
        %vm1174 = vmor %vm1172, %vm1173
        %v1175 = vsel %vm1174, %v1167, %v1171
        %v1176 = vand.u32 2147483647, %v1151
        %vm1177 = vcmp.eq.f32.partialorder %v1176, 8.507059e+37
        %v1178 = vand.u32 %v1151, 2147483648
        %v1179 = vor.u32 1.1754944e-38, %v1178
        %v1180 = vsel %vm1177, %v1179, %v1175
        %v1181 = vmul.f32 1.0, %v1180
        %v1182 = vmul.f32 %v1142, %v1166
        %v1183 = vmul.f32 %v1143, %v1181
        %s1184 = sld [smem:[#allocation2 + $0x5e]]
        %v1185 = vstv %s1184
        %v1186 = vadd.f32 %v1082, %v1185
        %v1187 = vadd.f32 %v1083, %v1185
        %v1188 = vxor.u32 %v1186, 2147483648
        %v1189 = vxor.u32 %v1187, 2147483648
        %v1190 = vmul.f32 %v1188, 1.442695
        %v1191 = vpow.pop %v1190
        %v1192 = vmul.f32 %v1189, 1.442695
        %v1193 = vpow.pop %v1192
        %v1194 = vadd.f32 %v1191, 1.0
        %v1195 = vadd.f32 %v1193, 1.0
        %v1196 = vrcp.pop %v1194
        %v1197 = vmul.f32 %v1194, %v1196
        %v1198 = vsub.f32 1.0, %v1197
        %v1199 = vmul.f32 %v1196, %v1198
        %v1200 = vadd.f32 %v1196, %v1199
        %vm1201 = vweird.f32 %v1194
        %vm1202 = vweird.f32 %v1196
        %vm1203 = vmor %vm1201, %vm1202
        %v1204 = vsel %vm1203, %v1196, %v1200
        %v1205 = vand.u32 2147483647, %v1194
        %vm1206 = vcmp.eq.f32.partialorder %v1205, 8.507059e+37
        %v1207 = vand.u32 %v1194, 2147483648
        %v1208 = vor.u32 1.1754944e-38, %v1207
        %v1209 = vsel %vm1206, %v1208, %v1204
        %v1210 = vmul.f32 1.0, %v1209
        %v1211 = vrcp.pop %v1195
        %v1212 = vmul.f32 %v1195, %v1211
        %v1213 = vsub.f32 1.0, %v1212
        %v1214 = vmul.f32 %v1211, %v1213
        %v1215 = vadd.f32 %v1211, %v1214
        %vm1216 = vweird.f32 %v1195
        %vm1217 = vweird.f32 %v1211
        %vm1218 = vmor %vm1216, %vm1217
        %v1219 = vsel %vm1218, %v1211, %v1215
        %v1220 = vand.u32 2147483647, %v1195
        %vm1221 = vcmp.eq.f32.partialorder %v1220, 8.507059e+37
        %v1222 = vand.u32 %v1195, 2147483648
        %v1223 = vor.u32 1.1754944e-38, %v1222
        %v1224 = vsel %vm1221, %v1223, %v1219
        %v1225 = vmul.f32 1.0, %v1224
        %v1226 = vmul.f32 %v1186, %v1210
        %v1227 = vmul.f32 %v1187, %v1225
        %s1228 = sld [smem:[#allocation2 + $0x5f]]
        %v1229 = vstv %s1228
        %v1230 = vadd.f32 %v1094, %v1229
        %v1231 = vadd.f32 %v1095, %v1229
        %v1232 = vxor.u32 %v1230, 2147483648
        %v1233 = vxor.u32 %v1231, 2147483648
        %v1234 = vmul.f32 %v1232, 1.442695
        %v1235 = vpow.pop %v1234
        %v1236 = vmul.f32 %v1233, 1.442695
        %v1237 = vpow.pop %v1236
        %v1238 = vadd.f32 %v1235, 1.0
        %v1239 = vadd.f32 %v1237, 1.0
        %v1240 = vrcp.pop %v1238
        %v1241 = vmul.f32 %v1238, %v1240
        %v1242 = vsub.f32 1.0, %v1241
        %v1243 = vmul.f32 %v1240, %v1242
        %v1244 = vadd.f32 %v1240, %v1243
        %vm1245 = vweird.f32 %v1238
        %vm1246 = vweird.f32 %v1240
        %vm1247 = vmor %vm1245, %vm1246
        %v1248 = vsel %vm1247, %v1240, %v1244
        %v1249 = vand.u32 2147483647, %v1238
        %vm1250 = vcmp.eq.f32.partialorder %v1249, 8.507059e+37
        %v1251 = vand.u32 %v1238, 2147483648
        %v1252 = vor.u32 1.1754944e-38, %v1251
        %v1253 = vsel %vm1250, %v1252, %v1248
        %v1254 = vmul.f32 1.0, %v1253
        %v1255 = vrcp.pop %v1239
        %v1256 = vmul.f32 %v1239, %v1255
        %v1257 = vsub.f32 1.0, %v1256
        %v1258 = vmul.f32 %v1255, %v1257
        %v1259 = vadd.f32 %v1255, %v1258
        %vm1260 = vweird.f32 %v1239
        %vm1261 = vweird.f32 %v1255
        %vm1262 = vmor %vm1260, %vm1261
        %v1263 = vsel %vm1262, %v1255, %v1259
        %v1264 = vand.u32 2147483647, %v1239
        %vm1265 = vcmp.eq.f32.partialorder %v1264, 8.507059e+37
        %v1266 = vand.u32 %v1239, 2147483648
        %v1267 = vor.u32 1.1754944e-38, %v1266
        %v1268 = vsel %vm1265, %v1267, %v1263
        %v1269 = vmul.f32 1.0, %v1268
        %v1270 = vmul.f32 %v1230, %v1254
        %v1271 = vmul.f32 %v1231, %v1269
        %s1272 = sld [smem:[#allocation2 + $0xa0]]
        %v1273 = vstv %s1272
        %v1274 = vmul.f32 %v1273, %v1138
        %v1275 = vmul.f32 %v1273, %v1139
        %v1276 = vadd.f32 %v554, %v1274
        %v1277 = vadd.f32 %v555, %v1275
        %s1278 = sld [smem:[#allocation2 + $0xaa]]
        %v1279 = vstv %s1278
        %v1280 = vmul.f32 %v1279, %v1138
        %v1281 = vmul.f32 %v1279, %v1139
        %v1282 = vadd.f32 %v560, %v1280
        %v1283 = vadd.f32 %v561, %v1281
        %s1284 = sld [smem:[#allocation2 + $0xb4]]
        %v1285 = vstv %s1284
        %v1286 = vmul.f32 %v1285, %v1138
        %v1287 = vmul.f32 %v1285, %v1139
        %v1288 = vadd.f32 %v566, %v1286
        %v1289 = vadd.f32 %v567, %v1287
        %s1290 = sld [smem:[#allocation2 + $0xbe]]
        %v1291 = vstv %s1290
        %v1292 = vmul.f32 %v1291, %v1138
        %v1293 = vmul.f32 %v1291, %v1139
        %v1294 = vadd.f32 %v572, %v1292
        %v1295 = vadd.f32 %v573, %v1293
        %s1296 = sld [smem:[#allocation2 + $0xa1]]
        %v1297 = vstv %s1296
        %v1298 = vmul.f32 %v1297, %v1182
        %v1299 = vmul.f32 %v1297, %v1183
        %v1300 = vadd.f32 %v1276, %v1298
        %v1301 = vadd.f32 %v1277, %v1299
        %s1302 = sld [smem:[#allocation2 + $0xab]]
        %v1303 = vstv %s1302
        %v1304 = vmul.f32 %v1303, %v1182
        %v1305 = vmul.f32 %v1303, %v1183
        %v1306 = vadd.f32 %v1282, %v1304
        %v1307 = vadd.f32 %v1283, %v1305
        %s1308 = sld [smem:[#allocation2 + $0xb5]]
        %v1309 = vstv %s1308
        %v1310 = vmul.f32 %v1309, %v1182
        %v1311 = vmul.f32 %v1309, %v1183
        %v1312 = vadd.f32 %v1288, %v1310
        %v1313 = vadd.f32 %v1289, %v1311
        %s1314 = sld [smem:[#allocation2 + $0xbf]]
        %v1315 = vstv %s1314
        %v1316 = vmul.f32 %v1315, %v1182
        %v1317 = vmul.f32 %v1315, %v1183
        %v1318 = vadd.f32 %v1294, %v1316
        %v1319 = vadd.f32 %v1295, %v1317
        %s1320 = sld [smem:[#allocation2 + $0xa2]]
        %v1321 = vstv %s1320
        %v1322 = vmul.f32 %v1321, %v1226
        %v1323 = vmul.f32 %v1321, %v1227
        %v1324 = vadd.f32 %v1300, %v1322
        %v1325 = vadd.f32 %v1301, %v1323
        %s1326 = sld [smem:[#allocation2 + $0xac]]
        %v1327 = vstv %s1326
        %v1328 = vmul.f32 %v1327, %v1226
        %v1329 = vmul.f32 %v1327, %v1227
        %v1330 = vadd.f32 %v1306, %v1328
        %v1331 = vadd.f32 %v1307, %v1329
        %s1332 = sld [smem:[#allocation2 + $0xb6]]
        %v1333 = vstv %s1332
        %v1334 = vmul.f32 %v1333, %v1226
        %v1335 = vmul.f32 %v1333, %v1227
        %v1336 = vadd.f32 %v1312, %v1334
        %v1337 = vadd.f32 %v1313, %v1335
        %s1338 = sld [smem:[#allocation2 + $0xc0]]
        %v1339 = vstv %s1338
        %v1340 = vmul.f32 %v1339, %v1226
        %v1341 = vmul.f32 %v1339, %v1227
        %v1342 = vadd.f32 %v1318, %v1340
        %v1343 = vadd.f32 %v1319, %v1341
        %s1344 = sld [smem:[#allocation2 + $0xa3]]
        %v1345 = vstv %s1344
        %v1346 = vmul.f32 %v1345, %v1270
        %v1347 = vmul.f32 %v1345, %v1271
        %v1348 = vadd.f32 %v1324, %v1346
        %v1349 = vadd.f32 %v1325, %v1347
        %s1350 = sld [smem:[#allocation2 + $0xad]]
        %v1351 = vstv %s1350
        %v1352 = vmul.f32 %v1351, %v1270
        %v1353 = vmul.f32 %v1351, %v1271
        %v1354 = vadd.f32 %v1330, %v1352
        %v1355 = vadd.f32 %v1331, %v1353
        %s1356 = sld [smem:[#allocation2 + $0xb7]]
        %v1357 = vstv %s1356
        %v1358 = vmul.f32 %v1357, %v1270
        %v1359 = vmul.f32 %v1357, %v1271
        %v1360 = vadd.f32 %v1336, %v1358
        %v1361 = vadd.f32 %v1337, %v1359
        %s1362 = sld [smem:[#allocation2 + $0xc1]]
        %v1363 = vstv %s1362
        %v1364 = vmul.f32 %v1363, %v1270
        %v1365 = vmul.f32 %v1363, %v1271
        %v1366 = vadd.f32 %v1342, %v1364
        %v1367 = vadd.f32 %v1343, %v1365
        %s1368 = sld [smem:[#allocation2 + $0x60]]
        %v1369 = vstv %s1368
        %v1370 = vmul.f32 %v1369, %v418
        %v1371 = vmul.f32 %v1369, %v419
        %s1372 = sld [smem:[#allocation2 + $0x61]]
        %v1373 = vstv %s1372
        %v1374 = vmul.f32 %v1373, %v484
        %v1375 = vmul.f32 %v1373, %v485
        %v1376 = vadd.f32 %v1370, %v1374
        %v1377 = vadd.f32 %v1371, %v1375
        %s1378 = sld [smem:[#allocation2 + $0x68]]
        %v1379 = vstv %s1378
        %v1380 = vadd.f32 %v1376, %v1379
        %v1381 = vadd.f32 %v1377, %v1379
        %v1382 = vxor.u32 %v1380, 2147483648
        %v1383 = vxor.u32 %v1381, 2147483648
        %v1384 = vmul.f32 %v1382, 1.442695
        %v1385 = vpow.pop %v1384
        %v1386 = vmul.f32 %v1383, 1.442695
        %v1387 = vpow.pop %v1386
        %v1388 = vadd.f32 %v1385, 1.0
        %v1389 = vadd.f32 %v1387, 1.0
        %v1390 = vrcp.pop %v1388
        %v1391 = vmul.f32 %v1388, %v1390
        %v1392 = vsub.f32 1.0, %v1391
        %v1393 = vmul.f32 %v1390, %v1392
        %v1394 = vadd.f32 %v1390, %v1393
        %vm1395 = vweird.f32 %v1388
        %vm1396 = vweird.f32 %v1390
        %vm1397 = vmor %vm1395, %vm1396
        %v1398 = vsel %vm1397, %v1390, %v1394
        %v1399 = vand.u32 2147483647, %v1388
        %vm1400 = vcmp.eq.f32.partialorder %v1399, 8.507059e+37
        %v1401 = vand.u32 %v1388, 2147483648
        %v1402 = vor.u32 1.1754944e-38, %v1401
        %v1403 = vsel %vm1400, %v1402, %v1398
        %v1404 = vmul.f32 1.0, %v1403
        %v1405 = vrcp.pop %v1389
        %v1406 = vmul.f32 %v1389, %v1405
        %v1407 = vsub.f32 1.0, %v1406
        %v1408 = vmul.f32 %v1405, %v1407
        %v1409 = vadd.f32 %v1405, %v1408
        %vm1410 = vweird.f32 %v1389
        %vm1411 = vweird.f32 %v1405
        %vm1412 = vmor %vm1410, %vm1411
        %v1413 = vsel %vm1412, %v1405, %v1409
        %v1414 = vand.u32 2147483647, %v1389
        %vm1415 = vcmp.eq.f32.partialorder %v1414, 8.507059e+37
        %v1416 = vand.u32 %v1389, 2147483648
        %v1417 = vor.u32 1.1754944e-38, %v1416
        %v1418 = vsel %vm1415, %v1417, %v1413
        %v1419 = vmul.f32 1.0, %v1418
        %v1420 = vmul.f32 %v1380, %v1404
        %v1421 = vmul.f32 %v1381, %v1419
        %s1422 = sld [smem:[#allocation2 + $0x62]]
        %v1423 = vstv %s1422
        %v1424 = vmul.f32 %v1423, %v418
        %v1425 = vmul.f32 %v1423, %v419
        %s1426 = sld [smem:[#allocation2 + $0x63]]
        %v1427 = vstv %s1426
        %v1428 = vmul.f32 %v1427, %v484
        %v1429 = vmul.f32 %v1427, %v485
        %v1430 = vadd.f32 %v1424, %v1428
        %v1431 = vadd.f32 %v1425, %v1429
        %s1432 = sld [smem:[#allocation2 + $0x69]]
        %v1433 = vstv %s1432
        %v1434 = vadd.f32 %v1430, %v1433
        %v1435 = vadd.f32 %v1431, %v1433
        %v1436 = vxor.u32 %v1434, 2147483648
        %v1437 = vxor.u32 %v1435, 2147483648
        %v1438 = vmul.f32 %v1436, 1.442695
        %v1439 = vpow.pop %v1438
        %v1440 = vmul.f32 %v1437, 1.442695
        %v1441 = vpow.pop %v1440
        %v1442 = vadd.f32 %v1439, 1.0
        %v1443 = vadd.f32 %v1441, 1.0
        %v1444 = vrcp.pop %v1442
        %v1445 = vmul.f32 %v1442, %v1444
        %v1446 = vsub.f32 1.0, %v1445
        %v1447 = vmul.f32 %v1444, %v1446
        %v1448 = vadd.f32 %v1444, %v1447
        %vm1449 = vweird.f32 %v1442
        %vm1450 = vweird.f32 %v1444
        %vm1451 = vmor %vm1449, %vm1450
        %v1452 = vsel %vm1451, %v1444, %v1448
        %v1453 = vand.u32 2147483647, %v1442
        %vm1454 = vcmp.eq.f32.partialorder %v1453, 8.507059e+37
        %v1455 = vand.u32 %v1442, 2147483648
        %v1456 = vor.u32 1.1754944e-38, %v1455
        %v1457 = vsel %vm1454, %v1456, %v1452
        %v1458 = vmul.f32 1.0, %v1457
        %v1459 = vrcp.pop %v1443
        %v1460 = vmul.f32 %v1443, %v1459
        %v1461 = vsub.f32 1.0, %v1460
        %v1462 = vmul.f32 %v1459, %v1461
        %v1463 = vadd.f32 %v1459, %v1462
        %vm1464 = vweird.f32 %v1443
        %vm1465 = vweird.f32 %v1459
        %vm1466 = vmor %vm1464, %vm1465
        %v1467 = vsel %vm1466, %v1459, %v1463
        %v1468 = vand.u32 2147483647, %v1443
        %vm1469 = vcmp.eq.f32.partialorder %v1468, 8.507059e+37
        %v1470 = vand.u32 %v1443, 2147483648
        %v1471 = vor.u32 1.1754944e-38, %v1470
        %v1472 = vsel %vm1469, %v1471, %v1467
        %v1473 = vmul.f32 1.0, %v1472
        %v1474 = vmul.f32 %v1434, %v1458
        %v1475 = vmul.f32 %v1435, %v1473
        %s1476 = sld [smem:[#allocation2 + $0x64]]
        %v1477 = vstv %s1476
        %v1478 = vmul.f32 %v1477, %v418
        %v1479 = vmul.f32 %v1477, %v419
        %s1480 = sld [smem:[#allocation2 + $0x65]]
        %v1481 = vstv %s1480
        %v1482 = vmul.f32 %v1481, %v484
        %v1483 = vmul.f32 %v1481, %v485
        %v1484 = vadd.f32 %v1478, %v1482
        %v1485 = vadd.f32 %v1479, %v1483
        %s1486 = sld [smem:[#allocation2 + $0x6a]]
        %v1487 = vstv %s1486
        %v1488 = vadd.f32 %v1484, %v1487
        %v1489 = vadd.f32 %v1485, %v1487
        %v1490 = vxor.u32 %v1488, 2147483648
        %v1491 = vxor.u32 %v1489, 2147483648
        %v1492 = vmul.f32 %v1490, 1.442695
        %v1493 = vpow.pop %v1492
        %v1494 = vmul.f32 %v1491, 1.442695
        %v1495 = vpow.pop %v1494
        %v1496 = vadd.f32 %v1493, 1.0
        %v1497 = vadd.f32 %v1495, 1.0
        %v1498 = vrcp.pop %v1496
        %v1499 = vmul.f32 %v1496, %v1498
        %v1500 = vsub.f32 1.0, %v1499
        %v1501 = vmul.f32 %v1498, %v1500
        %v1502 = vadd.f32 %v1498, %v1501
        %vm1503 = vweird.f32 %v1496
        %vm1504 = vweird.f32 %v1498
        %vm1505 = vmor %vm1503, %vm1504
        %v1506 = vsel %vm1505, %v1498, %v1502
        %v1507 = vand.u32 2147483647, %v1496
        %vm1508 = vcmp.eq.f32.partialorder %v1507, 8.507059e+37
        %v1509 = vand.u32 %v1496, 2147483648
        %v1510 = vor.u32 1.1754944e-38, %v1509
        %v1511 = vsel %vm1508, %v1510, %v1506
        %v1512 = vmul.f32 1.0, %v1511
        %v1513 = vrcp.pop %v1497
        %v1514 = vmul.f32 %v1497, %v1513
        %v1515 = vsub.f32 1.0, %v1514
        %v1516 = vmul.f32 %v1513, %v1515
        %v1517 = vadd.f32 %v1513, %v1516
        %vm1518 = vweird.f32 %v1497
        %vm1519 = vweird.f32 %v1513
        %vm1520 = vmor %vm1518, %vm1519
        %v1521 = vsel %vm1520, %v1513, %v1517
        %v1522 = vand.u32 2147483647, %v1497
        %vm1523 = vcmp.eq.f32.partialorder %v1522, 8.507059e+37
        %v1524 = vand.u32 %v1497, 2147483648
        %v1525 = vor.u32 1.1754944e-38, %v1524
        %v1526 = vsel %vm1523, %v1525, %v1521
        %v1527 = vmul.f32 1.0, %v1526
        %v1528 = vmul.f32 %v1488, %v1512
        %v1529 = vmul.f32 %v1489, %v1527
        %s1530 = sld [smem:[#allocation2 + $0x66]]
        %v1531 = vstv %s1530
        %v1532 = vmul.f32 %v1531, %v418
        %v1533 = vmul.f32 %v1531, %v419
        %s1534 = sld [smem:[#allocation2 + $0x67]]
        %v1535 = vstv %s1534
        %v1536 = vmul.f32 %v1535, %v484
        %v1537 = vmul.f32 %v1535, %v485
        %v1538 = vadd.f32 %v1532, %v1536
        %v1539 = vadd.f32 %v1533, %v1537
        %s1540 = sld [smem:[#allocation2 + $0x6b]]
        %v1541 = vstv %s1540
        %v1542 = vadd.f32 %v1538, %v1541
        %v1543 = vadd.f32 %v1539, %v1541
        %v1544 = vxor.u32 %v1542, 2147483648
        %v1545 = vxor.u32 %v1543, 2147483648
        %v1546 = vmul.f32 %v1544, 1.442695
        %v1547 = vpow.pop %v1546
        %v1548 = vmul.f32 %v1545, 1.442695
        %v1549 = vpow.pop %v1548
        %v1550 = vadd.f32 %v1547, 1.0
        %v1551 = vadd.f32 %v1549, 1.0
        %v1552 = vrcp.pop %v1550
        %v1553 = vmul.f32 %v1550, %v1552
        %v1554 = vsub.f32 1.0, %v1553
        %v1555 = vmul.f32 %v1552, %v1554
        %v1556 = vadd.f32 %v1552, %v1555
        %vm1557 = vweird.f32 %v1550
        %vm1558 = vweird.f32 %v1552
        %vm1559 = vmor %vm1557, %vm1558
        %v1560 = vsel %vm1559, %v1552, %v1556
        %v1561 = vand.u32 2147483647, %v1550
        %vm1562 = vcmp.eq.f32.partialorder %v1561, 8.507059e+37
        %v1563 = vand.u32 %v1550, 2147483648
        %v1564 = vor.u32 1.1754944e-38, %v1563
        %v1565 = vsel %vm1562, %v1564, %v1560
        %v1566 = vmul.f32 1.0, %v1565
        %v1567 = vrcp.pop %v1551
        %v1568 = vmul.f32 %v1551, %v1567
        %v1569 = vsub.f32 1.0, %v1568
        %v1570 = vmul.f32 %v1567, %v1569
        %v1571 = vadd.f32 %v1567, %v1570
        %vm1572 = vweird.f32 %v1551
        %vm1573 = vweird.f32 %v1567
        %vm1574 = vmor %vm1572, %vm1573
        %v1575 = vsel %vm1574, %v1567, %v1571
        %v1576 = vand.u32 2147483647, %v1551
        %vm1577 = vcmp.eq.f32.partialorder %v1576, 8.507059e+37
        %v1578 = vand.u32 %v1551, 2147483648
        %v1579 = vor.u32 1.1754944e-38, %v1578
        %v1580 = vsel %vm1577, %v1579, %v1575
        %v1581 = vmul.f32 1.0, %v1580
        %v1582 = vmul.f32 %v1542, %v1566
        %v1583 = vmul.f32 %v1543, %v1581
        %v1584 = vrot.slane %v1420, 7
        %v1585 = vrot.slane %v1421, 7
        %v1586 = vsel %vm576, %v1584, %v1585
        %v1587 = vsel %vm576, %v1585, %v1584
        %v1588 = vmul.f32 %v1587, %v185
        %v1589 = vmul.f32 %v1586, %v186
        %1590 = vrot.lane.b32.xlu0 %v1588, 1
        %v1591 = vpop.permute.xlu0 %1590
        %1592 = vrot.lane.b32.xlu0 %v1589, 1
        %v1593 = vpop.permute.xlu0 %1592
        %v1594 = vmul.f32 %v1591, %v192
        %v1595 = vmul.f32 %v1593, %v192
        %s1596 = sld [smem:[#allocation2 + $0x6c]]
        %v1597 = vstv %s1596
        %v1598 = vmul.f32 %v1597, %v1594
        %v1599 = vmul.f32 %v1597, %v1595
        %s1600 = sld [smem:[#allocation2 + $0x6d]]
        %v1601 = vstv %s1600
        %v1602 = vmul.f32 %v1601, %v1588
        %v1603 = vmul.f32 %v1601, %v1589
        %v1604 = vadd.f32 %v1598, %v1602
        %v1605 = vadd.f32 %v1599, %v1603
        %1606 = vrot.lane.b32.xlu0 %v1588, 127
        %v1607 = vpop.permute.xlu0 %1606
        %1608 = vrot.lane.b32.xlu0 %v1589, 127
        %v1609 = vpop.permute.xlu0 %1608
        %v1610 = vmul.f32 %v1607, %v210
        %v1611 = vmul.f32 %v1609, %v210
        %s1612 = sld [smem:[#allocation2 + $0x6e]]
        %v1613 = vstv %s1612
        %v1614 = vmul.f32 %v1613, %v1610
        %v1615 = vmul.f32 %v1613, %v1611
        %v1616 = vadd.f32 %v1604, %v1614
        %v1617 = vadd.f32 %v1605, %v1615
        %1618 = vrot.lane.b32.xlu0 %v1420, 1
        %v1619 = vpop.permute.xlu0 %1618
        %1620 = vrot.lane.b32.xlu0 %v1421, 1
        %v1621 = vpop.permute.xlu0 %1620
        %v1622 = vmul.f32 %v1619, %v192
        %v1623 = vmul.f32 %v1621, %v192
        %s1624 = sld [smem:[#allocation2 + $0x6f]]
        %v1625 = vstv %s1624
        %v1626 = vmul.f32 %v1625, %v1622
        %v1627 = vmul.f32 %v1625, %v1623
        %v1628 = vadd.f32 %v1616, %v1626
        %v1629 = vadd.f32 %v1617, %v1627
        %s1630 = sld [smem:[#allocation2 + $0x70]]
        %v1631 = vstv %s1630
        %v1632 = vmul.f32 %v1631, %v1420
        %v1633 = vmul.f32 %v1631, %v1421
        %v1634 = vadd.f32 %v1628, %v1632
        %v1635 = vadd.f32 %v1629, %v1633
        %1636 = vrot.lane.b32.xlu0 %v1420, 127
        %v1637 = vpop.permute.xlu0 %1636
        %1638 = vrot.lane.b32.xlu0 %v1421, 127
        %v1639 = vpop.permute.xlu0 %1638
        %v1640 = vmul.f32 %v1637, %v210
        %v1641 = vmul.f32 %v1639, %v210
        %s1642 = sld [smem:[#allocation2 + $0x71]]
        %v1643 = vstv %s1642
        %v1644 = vmul.f32 %v1643, %v1640
        %v1645 = vmul.f32 %v1643, %v1641
        %v1646 = vadd.f32 %v1634, %v1644
        %v1647 = vadd.f32 %v1635, %v1645
        %v1648 = vrot.slane %v1420, 1
        %v1649 = vrot.slane %v1421, 1
        %v1650 = vsel %vm743, %v1648, %v1649
        %v1651 = vsel %vm743, %v1649, %v1648
        %v1652 = vmul.f32 %v1650, %v203
        %v1653 = vmul.f32 %v1651, %v204
        %1654 = vrot.lane.b32.xlu0 %v1652, 1
        %v1655 = vpop.permute.xlu0 %1654
        %1656 = vrot.lane.b32.xlu0 %v1653, 1
        %v1657 = vpop.permute.xlu0 %1656
        %v1658 = vmul.f32 %v1655, %v192
        %v1659 = vmul.f32 %v1657, %v192
        %s1660 = sld [smem:[#allocation2 + $0x72]]
        %v1661 = vstv %s1660
        %v1662 = vmul.f32 %v1661, %v1658
        %v1663 = vmul.f32 %v1661, %v1659
        %v1664 = vadd.f32 %v1646, %v1662
        %v1665 = vadd.f32 %v1647, %v1663
        %s1666 = sld [smem:[#allocation2 + $0x73]]
        %v1667 = vstv %s1666
        %v1668 = vmul.f32 %v1667, %v1652
        %v1669 = vmul.f32 %v1667, %v1653
        %v1670 = vadd.f32 %v1664, %v1668
        %v1671 = vadd.f32 %v1665, %v1669
        %1672 = vrot.lane.b32.xlu0 %v1652, 127
        %v1673 = vpop.permute.xlu0 %1672
        %1674 = vrot.lane.b32.xlu0 %v1653, 127
        %v1675 = vpop.permute.xlu0 %1674
        %v1676 = vmul.f32 %v1673, %v210
        %v1677 = vmul.f32 %v1675, %v210
        %s1678 = sld [smem:[#allocation2 + $0x74]]
        %v1679 = vstv %s1678
        %v1680 = vmul.f32 %v1679, %v1676
        %v1681 = vmul.f32 %v1679, %v1677
        %v1682 = vadd.f32 %v1670, %v1680
        %v1683 = vadd.f32 %v1671, %v1681
        %v1684 = vrot.slane %v1474, 7
        %v1685 = vrot.slane %v1475, 7
        %v1686 = vsel %vm576, %v1684, %v1685
        %v1687 = vsel %vm576, %v1685, %v1684
        %v1688 = vmul.f32 %v1687, %v185
        %v1689 = vmul.f32 %v1686, %v186
        %1690 = vrot.lane.b32.xlu0 %v1688, 1
        %v1691 = vpop.permute.xlu0 %1690
        %1692 = vrot.lane.b32.xlu0 %v1689, 1
        %v1693 = vpop.permute.xlu0 %1692
        %v1694 = vmul.f32 %v1691, %v192
        %v1695 = vmul.f32 %v1693, %v192
        %s1696 = sld [smem:[#allocation2 + $0x75]]
        %v1697 = vstv %s1696
        %v1698 = vmul.f32 %v1697, %v1694
        %v1699 = vmul.f32 %v1697, %v1695
        %s1700 = sld [smem:[#allocation2 + $0x76]]
        %v1701 = vstv %s1700
        %v1702 = vmul.f32 %v1701, %v1688
        %v1703 = vmul.f32 %v1701, %v1689
        %v1704 = vadd.f32 %v1698, %v1702
        %v1705 = vadd.f32 %v1699, %v1703
        %1706 = vrot.lane.b32.xlu0 %v1688, 127
        %v1707 = vpop.permute.xlu0 %1706
        %1708 = vrot.lane.b32.xlu0 %v1689, 127
        %v1709 = vpop.permute.xlu0 %1708
        %v1710 = vmul.f32 %v1707, %v210
        %v1711 = vmul.f32 %v1709, %v210
        %s1712 = sld [smem:[#allocation2 + $0x77]]
        %v1713 = vstv %s1712
        %v1714 = vmul.f32 %v1713, %v1710
        %v1715 = vmul.f32 %v1713, %v1711
        %v1716 = vadd.f32 %v1704, %v1714
        %v1717 = vadd.f32 %v1705, %v1715
        %1718 = vrot.lane.b32.xlu0 %v1474, 1
        %v1719 = vpop.permute.xlu0 %1718
        %1720 = vrot.lane.b32.xlu0 %v1475, 1
        %v1721 = vpop.permute.xlu0 %1720
        %v1722 = vmul.f32 %v1719, %v192
        %v1723 = vmul.f32 %v1721, %v192
        %s1724 = sld [smem:[#allocation2 + $0x78]]
        %v1725 = vstv %s1724
        %v1726 = vmul.f32 %v1725, %v1722
        %v1727 = vmul.f32 %v1725, %v1723
        %v1728 = vadd.f32 %v1716, %v1726
        %v1729 = vadd.f32 %v1717, %v1727
        %s1730 = sld [smem:[#allocation2 + $0x79]]
        %v1731 = vstv %s1730
        %v1732 = vmul.f32 %v1731, %v1474
        %v1733 = vmul.f32 %v1731, %v1475
        %v1734 = vadd.f32 %v1728, %v1732
        %v1735 = vadd.f32 %v1729, %v1733
        %1736 = vrot.lane.b32.xlu0 %v1474, 127
        %v1737 = vpop.permute.xlu0 %1736
        %1738 = vrot.lane.b32.xlu0 %v1475, 127
        %v1739 = vpop.permute.xlu0 %1738
        %v1740 = vmul.f32 %v1737, %v210
        %v1741 = vmul.f32 %v1739, %v210
        %s1742 = sld [smem:[#allocation2 + $0x7a]]
        %v1743 = vstv %s1742
        %v1744 = vmul.f32 %v1743, %v1740
        %v1745 = vmul.f32 %v1743, %v1741
        %v1746 = vadd.f32 %v1734, %v1744
        %v1747 = vadd.f32 %v1735, %v1745
        %v1748 = vrot.slane %v1474, 1
        %v1749 = vrot.slane %v1475, 1
        %v1750 = vsel %vm743, %v1748, %v1749
        %v1751 = vsel %vm743, %v1749, %v1748
        %v1752 = vmul.f32 %v1750, %v203
        %v1753 = vmul.f32 %v1751, %v204
        %1754 = vrot.lane.b32.xlu0 %v1752, 1
        %v1755 = vpop.permute.xlu0 %1754
        %1756 = vrot.lane.b32.xlu0 %v1753, 1
        %v1757 = vpop.permute.xlu0 %1756
        %v1758 = vmul.f32 %v1755, %v192
        %v1759 = vmul.f32 %v1757, %v192
        %s1760 = sld [smem:[#allocation2 + $0x7b]]
        %v1761 = vstv %s1760
        %v1762 = vmul.f32 %v1761, %v1758
        %v1763 = vmul.f32 %v1761, %v1759
        %v1764 = vadd.f32 %v1746, %v1762
        %v1765 = vadd.f32 %v1747, %v1763
        %s1766 = sld [smem:[#allocation2 + $0x7c]]
        %v1767 = vstv %s1766
        %v1768 = vmul.f32 %v1767, %v1752
        %v1769 = vmul.f32 %v1767, %v1753
        %v1770 = vadd.f32 %v1764, %v1768
        %v1771 = vadd.f32 %v1765, %v1769
        %1772 = vrot.lane.b32.xlu0 %v1752, 127
        %v1773 = vpop.permute.xlu0 %1772
        %1774 = vrot.lane.b32.xlu0 %v1753, 127
        %v1775 = vpop.permute.xlu0 %1774
        %v1776 = vmul.f32 %v1773, %v210
        %v1777 = vmul.f32 %v1775, %v210
        %s1778 = sld [smem:[#allocation2 + $0x7d]]
        %v1779 = vstv %s1778
        %v1780 = vmul.f32 %v1779, %v1776
        %v1781 = vmul.f32 %v1779, %v1777
        %v1782 = vadd.f32 %v1770, %v1780
        %v1783 = vadd.f32 %v1771, %v1781
        %v1784 = vrot.slane %v1528, 7
        %v1785 = vrot.slane %v1529, 7
        %v1786 = vsel %vm576, %v1784, %v1785
        %v1787 = vsel %vm576, %v1785, %v1784
        %v1788 = vmul.f32 %v1787, %v185
        %v1789 = vmul.f32 %v1786, %v186
        %1790 = vrot.lane.b32.xlu0 %v1788, 1
        %v1791 = vpop.permute.xlu0 %1790
        %1792 = vrot.lane.b32.xlu0 %v1789, 1
        %v1793 = vpop.permute.xlu0 %1792
        %v1794 = vmul.f32 %v1791, %v192
        %v1795 = vmul.f32 %v1793, %v192
        %s1796 = sld [smem:[#allocation2 + $0x7e]]
        %v1797 = vstv %s1796
        %v1798 = vmul.f32 %v1797, %v1794
        %v1799 = vmul.f32 %v1797, %v1795
        %s1800 = sld [smem:[#allocation2 + $0x7f]]
        %v1801 = vstv %s1800
        %v1802 = vmul.f32 %v1801, %v1788
        %v1803 = vmul.f32 %v1801, %v1789
        %v1804 = vadd.f32 %v1798, %v1802
        %v1805 = vadd.f32 %v1799, %v1803
        %1806 = vrot.lane.b32.xlu0 %v1788, 127
        %v1807 = vpop.permute.xlu0 %1806
        %1808 = vrot.lane.b32.xlu0 %v1789, 127
        %v1809 = vpop.permute.xlu0 %1808
        %v1810 = vmul.f32 %v1807, %v210
        %v1811 = vmul.f32 %v1809, %v210
        %s1812 = sld [smem:[#allocation2 + $0x80]]
        %v1813 = vstv %s1812
        %v1814 = vmul.f32 %v1813, %v1810
        %v1815 = vmul.f32 %v1813, %v1811
        %v1816 = vadd.f32 %v1804, %v1814
        %v1817 = vadd.f32 %v1805, %v1815
        %1818 = vrot.lane.b32.xlu0 %v1528, 1
        %v1819 = vpop.permute.xlu0 %1818
        %1820 = vrot.lane.b32.xlu0 %v1529, 1
        %v1821 = vpop.permute.xlu0 %1820
        %v1822 = vmul.f32 %v1819, %v192
        %v1823 = vmul.f32 %v1821, %v192
        %s1824 = sld [smem:[#allocation2 + $0x81]]
        %v1825 = vstv %s1824
        %v1826 = vmul.f32 %v1825, %v1822
        %v1827 = vmul.f32 %v1825, %v1823
        %v1828 = vadd.f32 %v1816, %v1826
        %v1829 = vadd.f32 %v1817, %v1827
        %s1830 = sld [smem:[#allocation2 + $0x82]]
        %v1831 = vstv %s1830
        %v1832 = vmul.f32 %v1831, %v1528
        %v1833 = vmul.f32 %v1831, %v1529
        %v1834 = vadd.f32 %v1828, %v1832
        %v1835 = vadd.f32 %v1829, %v1833
        %1836 = vrot.lane.b32.xlu0 %v1528, 127
        %v1837 = vpop.permute.xlu0 %1836
        %1838 = vrot.lane.b32.xlu0 %v1529, 127
        %v1839 = vpop.permute.xlu0 %1838
        %v1840 = vmul.f32 %v1837, %v210
        %v1841 = vmul.f32 %v1839, %v210
        %s1842 = sld [smem:[#allocation2 + $0x83]]
        %v1843 = vstv %s1842
        %v1844 = vmul.f32 %v1843, %v1840
        %v1845 = vmul.f32 %v1843, %v1841
        %v1846 = vadd.f32 %v1834, %v1844
        %v1847 = vadd.f32 %v1835, %v1845
        %v1848 = vrot.slane %v1528, 1
        %v1849 = vrot.slane %v1529, 1
        %v1850 = vsel %vm743, %v1848, %v1849
        %v1851 = vsel %vm743, %v1849, %v1848
        %v1852 = vmul.f32 %v1850, %v203
        %v1853 = vmul.f32 %v1851, %v204
        %1854 = vrot.lane.b32.xlu0 %v1852, 1
        %v1855 = vpop.permute.xlu0 %1854
        %1856 = vrot.lane.b32.xlu0 %v1853, 1
        %v1857 = vpop.permute.xlu0 %1856
        %v1858 = vmul.f32 %v1855, %v192
        %v1859 = vmul.f32 %v1857, %v192
        %s1860 = sld [smem:[#allocation2 + $0x84]]
        %v1861 = vstv %s1860
        %v1862 = vmul.f32 %v1861, %v1858
        %v1863 = vmul.f32 %v1861, %v1859
        %v1864 = vadd.f32 %v1846, %v1862
        %v1865 = vadd.f32 %v1847, %v1863
        %s1866 = sld [smem:[#allocation2 + $0x85]]
        %v1867 = vstv %s1866
        %v1868 = vmul.f32 %v1867, %v1852
        %v1869 = vmul.f32 %v1867, %v1853
        %v1870 = vadd.f32 %v1864, %v1868
        %v1871 = vadd.f32 %v1865, %v1869
        %1872 = vrot.lane.b32.xlu0 %v1852, 127
        %v1873 = vpop.permute.xlu0 %1872
        %1874 = vrot.lane.b32.xlu0 %v1853, 127
        %v1875 = vpop.permute.xlu0 %1874
        %v1876 = vmul.f32 %v1873, %v210
        %v1877 = vmul.f32 %v1875, %v210
        %s1878 = sld [smem:[#allocation2 + $0x86]]
        %v1879 = vstv %s1878
        %v1880 = vmul.f32 %v1879, %v1876
        %v1881 = vmul.f32 %v1879, %v1877
        %v1882 = vadd.f32 %v1870, %v1880
        %v1883 = vadd.f32 %v1871, %v1881
        %v1884 = vrot.slane %v1582, 7
        %v1885 = vrot.slane %v1583, 7
        %v1886 = vsel %vm576, %v1884, %v1885
        %v1887 = vsel %vm576, %v1885, %v1884
        %v1888 = vmul.f32 %v1887, %v185
        %v1889 = vmul.f32 %v1886, %v186
        %1890 = vrot.lane.b32.xlu0 %v1888, 1
        %v1891 = vpop.permute.xlu0 %1890
        %1892 = vrot.lane.b32.xlu0 %v1889, 1
        %v1893 = vpop.permute.xlu0 %1892
        %v1894 = vmul.f32 %v1891, %v192
        %v1895 = vmul.f32 %v1893, %v192
        %s1896 = sld [smem:[#allocation2 + $0x87]]
        %v1897 = vstv %s1896
        %v1898 = vmul.f32 %v1897, %v1894
        %v1899 = vmul.f32 %v1897, %v1895
        %s1900 = sld [smem:[#allocation2 + $0x88]]
        %v1901 = vstv %s1900
        %v1902 = vmul.f32 %v1901, %v1888
        %v1903 = vmul.f32 %v1901, %v1889
        %v1904 = vadd.f32 %v1898, %v1902
        %v1905 = vadd.f32 %v1899, %v1903
        %1906 = vrot.lane.b32.xlu0 %v1888, 127
        %v1907 = vpop.permute.xlu0 %1906
        %1908 = vrot.lane.b32.xlu0 %v1889, 127
        %v1909 = vpop.permute.xlu0 %1908
        %v1910 = vmul.f32 %v1907, %v210
        %v1911 = vmul.f32 %v1909, %v210
        %s1912 = sld [smem:[#allocation2 + $0x89]]
        %v1913 = vstv %s1912
        %v1914 = vmul.f32 %v1913, %v1910
        %v1915 = vmul.f32 %v1913, %v1911
        %v1916 = vadd.f32 %v1904, %v1914
        %v1917 = vadd.f32 %v1905, %v1915
        %1918 = vrot.lane.b32.xlu0 %v1582, 1
        %v1919 = vpop.permute.xlu0 %1918
        %1920 = vrot.lane.b32.xlu0 %v1583, 1
        %v1921 = vpop.permute.xlu0 %1920
        %v1922 = vmul.f32 %v1919, %v192
        %v1923 = vmul.f32 %v1921, %v192
        %s1924 = sld [smem:[#allocation2 + $0x8a]]
        %v1925 = vstv %s1924
        %v1926 = vmul.f32 %v1925, %v1922
        %v1927 = vmul.f32 %v1925, %v1923
        %v1928 = vadd.f32 %v1916, %v1926
        %v1929 = vadd.f32 %v1917, %v1927
        %s1930 = sld [smem:[#allocation2 + $0x8b]]
        %v1931 = vstv %s1930
        %v1932 = vmul.f32 %v1931, %v1582
        %v1933 = vmul.f32 %v1931, %v1583
        %v1934 = vadd.f32 %v1928, %v1932
        %v1935 = vadd.f32 %v1929, %v1933
        %1936 = vrot.lane.b32.xlu0 %v1582, 127
        %v1937 = vpop.permute.xlu0 %1936
        %1938 = vrot.lane.b32.xlu0 %v1583, 127
        %v1939 = vpop.permute.xlu0 %1938
        %v1940 = vmul.f32 %v1937, %v210
        %v1941 = vmul.f32 %v1939, %v210
        %s1942 = sld [smem:[#allocation2 + $0x8c]]
        %v1943 = vstv %s1942
        %v1944 = vmul.f32 %v1943, %v1940
        %v1945 = vmul.f32 %v1943, %v1941
        %v1946 = vadd.f32 %v1934, %v1944
        %v1947 = vadd.f32 %v1935, %v1945
        %v1948 = vrot.slane %v1582, 1
        %v1949 = vrot.slane %v1583, 1
        %v1950 = vsel %vm743, %v1948, %v1949
        %v1951 = vsel %vm743, %v1949, %v1948
        %v1952 = vmul.f32 %v1950, %v203
        %v1953 = vmul.f32 %v1951, %v204
        %1954 = vrot.lane.b32.xlu0 %v1952, 1
        %v1955 = vpop.permute.xlu0 %1954
        %1956 = vrot.lane.b32.xlu0 %v1953, 1
        %v1957 = vpop.permute.xlu0 %1956
        %v1958 = vmul.f32 %v1955, %v192
        %v1959 = vmul.f32 %v1957, %v192
        %s1960 = sld [smem:[#allocation2 + $0x8d]]
        %v1961 = vstv %s1960
        %v1962 = vmul.f32 %v1961, %v1958
        %v1963 = vmul.f32 %v1961, %v1959
        %v1964 = vadd.f32 %v1946, %v1962
        %v1965 = vadd.f32 %v1947, %v1963
        %s1966 = sld [smem:[#allocation2 + $0x8e]]
        %v1967 = vstv %s1966
        %v1968 = vmul.f32 %v1967, %v1952
        %v1969 = vmul.f32 %v1967, %v1953
        %v1970 = vadd.f32 %v1964, %v1968
        %v1971 = vadd.f32 %v1965, %v1969
        %1972 = vrot.lane.b32.xlu0 %v1952, 127
        %v1973 = vpop.permute.xlu0 %1972
        %1974 = vrot.lane.b32.xlu0 %v1953, 127
        %v1975 = vpop.permute.xlu0 %1974
        %v1976 = vmul.f32 %v1973, %v210
        %v1977 = vmul.f32 %v1975, %v210
        %s1978 = sld [smem:[#allocation2 + $0x8f]]
        %v1979 = vstv %s1978
        %v1980 = vmul.f32 %v1979, %v1976
        %v1981 = vmul.f32 %v1979, %v1977
        %v1982 = vadd.f32 %v1970, %v1980
        %v1983 = vadd.f32 %v1971, %v1981
        %s1984 = sld [smem:[#allocation2 + $0x90]]
        %v1985 = vstv %s1984
        %v1986 = vadd.f32 %v1682, %v1985
        %v1987 = vadd.f32 %v1683, %v1985
        %v1988 = vxor.u32 %v1986, 2147483648
        %v1989 = vxor.u32 %v1987, 2147483648
        %v1990 = vmul.f32 %v1988, 1.442695
        %v1991 = vpow.pop %v1990
        %v1992 = vmul.f32 %v1989, 1.442695
        %v1993 = vpow.pop %v1992
        %v1994 = vadd.f32 %v1991, 1.0
        %v1995 = vadd.f32 %v1993, 1.0
        %v1996 = vrcp.pop %v1994
        %v1997 = vmul.f32 %v1994, %v1996
        %v1998 = vsub.f32 1.0, %v1997
        %v1999 = vmul.f32 %v1996, %v1998
        %v2000 = vadd.f32 %v1996, %v1999
        %vm2001 = vweird.f32 %v1994
        %vm2002 = vweird.f32 %v1996
        %vm2003 = vmor %vm2001, %vm2002
        %v2004 = vsel %vm2003, %v1996, %v2000
        %v2005 = vand.u32 2147483647, %v1994
        %vm2006 = vcmp.eq.f32.partialorder %v2005, 8.507059e+37
        %v2007 = vand.u32 %v1994, 2147483648
        %v2008 = vor.u32 1.1754944e-38, %v2007
        %v2009 = vsel %vm2006, %v2008, %v2004
        %v2010 = vmul.f32 1.0, %v2009
        %v2011 = vrcp.pop %v1995
        %v2012 = vmul.f32 %v1995, %v2011
        %v2013 = vsub.f32 1.0, %v2012
        %v2014 = vmul.f32 %v2011, %v2013
        %v2015 = vadd.f32 %v2011, %v2014
        %vm2016 = vweird.f32 %v1995
        %vm2017 = vweird.f32 %v2011
        %vm2018 = vmor %vm2016, %vm2017
        %v2019 = vsel %vm2018, %v2011, %v2015
        %v2020 = vand.u32 2147483647, %v1995
        %vm2021 = vcmp.eq.f32.partialorder %v2020, 8.507059e+37
        %v2022 = vand.u32 %v1995, 2147483648
        %v2023 = vor.u32 1.1754944e-38, %v2022
        %v2024 = vsel %vm2021, %v2023, %v2019
        %v2025 = vmul.f32 1.0, %v2024
        %v2026 = vmul.f32 %v1986, %v2010
        %v2027 = vmul.f32 %v1987, %v2025
        %s2028 = sld [smem:[#allocation2 + $0x91]]
        %v2029 = vstv %s2028
        %v2030 = vadd.f32 %v1782, %v2029
        %v2031 = vadd.f32 %v1783, %v2029
        %v2032 = vxor.u32 %v2030, 2147483648
        %v2033 = vxor.u32 %v2031, 2147483648
        %v2034 = vmul.f32 %v2032, 1.442695
        %v2035 = vpow.pop %v2034
        %v2036 = vmul.f32 %v2033, 1.442695
        %v2037 = vpow.pop %v2036
        %v2038 = vadd.f32 %v2035, 1.0
        %v2039 = vadd.f32 %v2037, 1.0
        %v2040 = vrcp.pop %v2038
        %v2041 = vmul.f32 %v2038, %v2040
        %v2042 = vsub.f32 1.0, %v2041
        %v2043 = vmul.f32 %v2040, %v2042
        %v2044 = vadd.f32 %v2040, %v2043
        %vm2045 = vweird.f32 %v2038
        %vm2046 = vweird.f32 %v2040
        %vm2047 = vmor %vm2045, %vm2046
        %v2048 = vsel %vm2047, %v2040, %v2044
        %v2049 = vand.u32 2147483647, %v2038
        %vm2050 = vcmp.eq.f32.partialorder %v2049, 8.507059e+37
        %v2051 = vand.u32 %v2038, 2147483648
        %v2052 = vor.u32 1.1754944e-38, %v2051
        %v2053 = vsel %vm2050, %v2052, %v2048
        %v2054 = vmul.f32 1.0, %v2053
        %v2055 = vrcp.pop %v2039
        %v2056 = vmul.f32 %v2039, %v2055
        %v2057 = vsub.f32 1.0, %v2056
        %v2058 = vmul.f32 %v2055, %v2057
        %v2059 = vadd.f32 %v2055, %v2058
        %vm2060 = vweird.f32 %v2039
        %vm2061 = vweird.f32 %v2055
        %vm2062 = vmor %vm2060, %vm2061
        %v2063 = vsel %vm2062, %v2055, %v2059
        %v2064 = vand.u32 2147483647, %v2039
        %vm2065 = vcmp.eq.f32.partialorder %v2064, 8.507059e+37
        %v2066 = vand.u32 %v2039, 2147483648
        %v2067 = vor.u32 1.1754944e-38, %v2066
        %v2068 = vsel %vm2065, %v2067, %v2063
        %v2069 = vmul.f32 1.0, %v2068
        %v2070 = vmul.f32 %v2030, %v2054
        %v2071 = vmul.f32 %v2031, %v2069
        %s2072 = sld [smem:[#allocation2 + $0x92]]
        %v2073 = vstv %s2072
        %v2074 = vadd.f32 %v1882, %v2073
        %v2075 = vadd.f32 %v1883, %v2073
        %v2076 = vxor.u32 %v2074, 2147483648
        %v2077 = vxor.u32 %v2075, 2147483648
        %v2078 = vmul.f32 %v2076, 1.442695
        %v2079 = vpow.pop %v2078
        %v2080 = vmul.f32 %v2077, 1.442695
        %v2081 = vpow.pop %v2080
        %v2082 = vadd.f32 %v2079, 1.0
        %v2083 = vadd.f32 %v2081, 1.0
        %v2084 = vrcp.pop %v2082
        %v2085 = vmul.f32 %v2082, %v2084
        %v2086 = vsub.f32 1.0, %v2085
        %v2087 = vmul.f32 %v2084, %v2086
        %v2088 = vadd.f32 %v2084, %v2087
        %vm2089 = vweird.f32 %v2082
        %vm2090 = vweird.f32 %v2084
        %vm2091 = vmor %vm2089, %vm2090
        %v2092 = vsel %vm2091, %v2084, %v2088
        %v2093 = vand.u32 2147483647, %v2082
        %vm2094 = vcmp.eq.f32.partialorder %v2093, 8.507059e+37
        %v2095 = vand.u32 %v2082, 2147483648
        %v2096 = vor.u32 1.1754944e-38, %v2095
        %v2097 = vsel %vm2094, %v2096, %v2092
        %v2098 = vmul.f32 1.0, %v2097
        %v2099 = vrcp.pop %v2083
        %v2100 = vmul.f32 %v2083, %v2099
        %v2101 = vsub.f32 1.0, %v2100
        %v2102 = vmul.f32 %v2099, %v2101
        %v2103 = vadd.f32 %v2099, %v2102
        %vm2104 = vweird.f32 %v2083
        %vm2105 = vweird.f32 %v2099
        %vm2106 = vmor %vm2104, %vm2105
        %v2107 = vsel %vm2106, %v2099, %v2103
        %v2108 = vand.u32 2147483647, %v2083
        %vm2109 = vcmp.eq.f32.partialorder %v2108, 8.507059e+37
        %v2110 = vand.u32 %v2083, 2147483648
        %v2111 = vor.u32 1.1754944e-38, %v2110
        %v2112 = vsel %vm2109, %v2111, %v2107
        %v2113 = vmul.f32 1.0, %v2112
        %v2114 = vmul.f32 %v2074, %v2098
        %v2115 = vmul.f32 %v2075, %v2113
        %s2116 = sld [smem:[#allocation2 + $0x93]]
        %v2117 = vstv %s2116
        %v2118 = vadd.f32 %v1982, %v2117
        %v2119 = vadd.f32 %v1983, %v2117
        %v2120 = vxor.u32 %v2118, 2147483648
        %v2121 = vxor.u32 %v2119, 2147483648
        %v2122 = vmul.f32 %v2120, 1.442695
        %v2123 = vpow.pop %v2122
        %v2124 = vmul.f32 %v2121, 1.442695
        %v2125 = vpow.pop %v2124
        %v2126 = vadd.f32 %v2123, 1.0
        %v2127 = vadd.f32 %v2125, 1.0
        %v2128 = vrcp.pop %v2126
        %v2129 = vmul.f32 %v2126, %v2128
        %v2130 = vsub.f32 1.0, %v2129
        %v2131 = vmul.f32 %v2128, %v2130
        %v2132 = vadd.f32 %v2128, %v2131
        %vm2133 = vweird.f32 %v2126
        %vm2134 = vweird.f32 %v2128
        %vm2135 = vmor %vm2133, %vm2134
        %v2136 = vsel %vm2135, %v2128, %v2132
        %v2137 = vand.u32 2147483647, %v2126
        %vm2138 = vcmp.eq.f32.partialorder %v2137, 8.507059e+37
        %v2139 = vand.u32 %v2126, 2147483648
        %v2140 = vor.u32 1.1754944e-38, %v2139
        %v2141 = vsel %vm2138, %v2140, %v2136
        %v2142 = vmul.f32 1.0, %v2141
        %v2143 = vrcp.pop %v2127
        %v2144 = vmul.f32 %v2127, %v2143
        %v2145 = vsub.f32 1.0, %v2144
        %v2146 = vmul.f32 %v2143, %v2145
        %v2147 = vadd.f32 %v2143, %v2146
        %vm2148 = vweird.f32 %v2127
        %vm2149 = vweird.f32 %v2143
        %vm2150 = vmor %vm2148, %vm2149
        %v2151 = vsel %vm2150, %v2143, %v2147
        %v2152 = vand.u32 2147483647, %v2127
        %vm2153 = vcmp.eq.f32.partialorder %v2152, 8.507059e+37
        %v2154 = vand.u32 %v2127, 2147483648
        %v2155 = vor.u32 1.1754944e-38, %v2154
        %v2156 = vsel %vm2153, %v2155, %v2151
        %v2157 = vmul.f32 1.0, %v2156
        %v2158 = vmul.f32 %v2118, %v2142
        %v2159 = vmul.f32 %v2119, %v2157
        %s2160 = sld [smem:[#allocation2 + $0x94]]
        %v2161 = vstv %s2160
        %v2162 = vmul.f32 %v2161, %v2026
        %v2163 = vmul.f32 %v2161, %v2027
        %s2164 = sld [smem:[#allocation2 + $0x95]]
        %v2165 = vstv %s2164
        %v2166 = vmul.f32 %v2165, %v2070
        %v2167 = vmul.f32 %v2165, %v2071
        %v2168 = vadd.f32 %v2162, %v2166
        %v2169 = vadd.f32 %v2163, %v2167
        %s2170 = sld [smem:[#allocation2 + $0x96]]
        %v2171 = vstv %s2170
        %v2172 = vmul.f32 %v2171, %v2114
        %v2173 = vmul.f32 %v2171, %v2115
        %v2174 = vadd.f32 %v2168, %v2172
        %v2175 = vadd.f32 %v2169, %v2173
        %s2176 = sld [smem:[#allocation2 + $0x97]]
        %v2177 = vstv %s2176
        %v2178 = vmul.f32 %v2177, %v2158
        %v2179 = vmul.f32 %v2177, %v2159
        %v2180 = vadd.f32 %v2174, %v2178
        %v2181 = vadd.f32 %v2175, %v2179
        %s2182 = sld [smem:[#allocation2 + $0x9c]]
        %v2183 = vstv %s2182
        %v2184 = vadd.f32 %v2180, %v2183
        %v2185 = vadd.f32 %v2181, %v2183
        %v2186 = vxor.u32 %v2184, 2147483648
        %v2187 = vxor.u32 %v2185, 2147483648
        %v2188 = vmul.f32 %v2186, 1.442695
        %v2189 = vpow.pop %v2188
        %v2190 = vmul.f32 %v2187, 1.442695
        %v2191 = vpow.pop %v2190
        %v2192 = vadd.f32 %v2189, 1.0
        %v2193 = vadd.f32 %v2191, 1.0
        %v2194 = vrcp.pop %v2192
        %v2195 = vmul.f32 %v2192, %v2194
        %v2196 = vsub.f32 1.0, %v2195
        %v2197 = vmul.f32 %v2194, %v2196
        %v2198 = vadd.f32 %v2194, %v2197
        %vm2199 = vweird.f32 %v2192
        %vm2200 = vweird.f32 %v2194
        %vm2201 = vmor %vm2199, %vm2200
        %v2202 = vsel %vm2201, %v2194, %v2198
        %v2203 = vand.u32 2147483647, %v2192
        %vm2204 = vcmp.eq.f32.partialorder %v2203, 8.507059e+37
        %v2205 = vand.u32 %v2192, 2147483648
        %v2206 = vor.u32 1.1754944e-38, %v2205
        %v2207 = vsel %vm2204, %v2206, %v2202
        %v2208 = vmul.f32 1.0, %v2207
        %v2209 = vrcp.pop %v2193
        %v2210 = vmul.f32 %v2193, %v2209
        %v2211 = vsub.f32 1.0, %v2210
        %v2212 = vmul.f32 %v2209, %v2211
        %v2213 = vadd.f32 %v2209, %v2212
        %vm2214 = vweird.f32 %v2193
        %vm2215 = vweird.f32 %v2209
        %vm2216 = vmor %vm2214, %vm2215
        %v2217 = vsel %vm2216, %v2209, %v2213
        %v2218 = vand.u32 2147483647, %v2193
        %vm2219 = vcmp.eq.f32.partialorder %v2218, 8.507059e+37
        %v2220 = vand.u32 %v2193, 2147483648
        %v2221 = vor.u32 1.1754944e-38, %v2220
        %v2222 = vsel %vm2219, %v2221, %v2217
        %v2223 = vmul.f32 1.0, %v2222
        %v2224 = vmul.f32 %v2184, %v2208
        %v2225 = vmul.f32 %v2185, %v2223
        %s2226 = sld [smem:[#allocation2 + $0x98]]
        %v2227 = vstv %s2226
        %v2228 = vmul.f32 %v2227, %v2026
        %v2229 = vmul.f32 %v2227, %v2027
        %s2230 = sld [smem:[#allocation2 + $0x99]]
        %v2231 = vstv %s2230
        %v2232 = vmul.f32 %v2231, %v2070
        %v2233 = vmul.f32 %v2231, %v2071
        %v2234 = vadd.f32 %v2228, %v2232
        %v2235 = vadd.f32 %v2229, %v2233
        %s2236 = sld [smem:[#allocation2 + $0x9a]]
        %v2237 = vstv %s2236
        %v2238 = vmul.f32 %v2237, %v2114
        %v2239 = vmul.f32 %v2237, %v2115
        %v2240 = vadd.f32 %v2234, %v2238
        %v2241 = vadd.f32 %v2235, %v2239
        %s2242 = sld [smem:[#allocation2 + $0x9b]]
        %v2243 = vstv %s2242
        %v2244 = vmul.f32 %v2243, %v2158
        %v2245 = vmul.f32 %v2243, %v2159
        %v2246 = vadd.f32 %v2240, %v2244
        %v2247 = vadd.f32 %v2241, %v2245
        %s2248 = sld [smem:[#allocation2 + $0x9d]]
        %v2249 = vstv %s2248
        %v2250 = vadd.f32 %v2246, %v2249
        %v2251 = vadd.f32 %v2247, %v2249
        %v2252 = vxor.u32 %v2250, 2147483648
        %v2253 = vxor.u32 %v2251, 2147483648
        %v2254 = vmul.f32 %v2252, 1.442695
        %v2255 = vpow.pop %v2254
        %v2256 = vmul.f32 %v2253, 1.442695
        %v2257 = vpow.pop %v2256
        %v2258 = vadd.f32 %v2255, 1.0
        %v2259 = vadd.f32 %v2257, 1.0
        %v2260 = vrcp.pop %v2258
        %v2261 = vmul.f32 %v2258, %v2260
        %v2262 = vsub.f32 1.0, %v2261
        %v2263 = vmul.f32 %v2260, %v2262
        %v2264 = vadd.f32 %v2260, %v2263
        %vm2265 = vweird.f32 %v2258
        %vm2266 = vweird.f32 %v2260
        %vm2267 = vmor %vm2265, %vm2266
        %v2268 = vsel %vm2267, %v2260, %v2264
        %v2269 = vand.u32 2147483647, %v2258
        %vm2270 = vcmp.eq.f32.partialorder %v2269, 8.507059e+37
        %v2271 = vand.u32 %v2258, 2147483648
        %v2272 = vor.u32 1.1754944e-38, %v2271
        %v2273 = vsel %vm2270, %v2272, %v2268
        %v2274 = vmul.f32 1.0, %v2273
        %v2275 = vrcp.pop %v2259
        %v2276 = vmul.f32 %v2259, %v2275
        %v2277 = vsub.f32 1.0, %v2276
        %v2278 = vmul.f32 %v2275, %v2277
        %v2279 = vadd.f32 %v2275, %v2278
        %vm2280 = vweird.f32 %v2259
        %vm2281 = vweird.f32 %v2275
        %vm2282 = vmor %vm2280, %vm2281
        %v2283 = vsel %vm2282, %v2275, %v2279
        %v2284 = vand.u32 2147483647, %v2259
        %vm2285 = vcmp.eq.f32.partialorder %v2284, 8.507059e+37
        %v2286 = vand.u32 %v2259, 2147483648
        %v2287 = vor.u32 1.1754944e-38, %v2286
        %v2288 = vsel %vm2285, %v2287, %v2283
        %v2289 = vmul.f32 1.0, %v2288
        %v2290 = vmul.f32 %v2250, %v2274
        %v2291 = vmul.f32 %v2251, %v2289
        %s2292 = sld [smem:[#allocation2 + $0xa6]]
        %v2293 = vstv %s2292
        %v2294 = vmul.f32 %v2293, %v2224
        %v2295 = vmul.f32 %v2293, %v2225
        %v2296 = vadd.f32 %v1348, %v2294
        %v2297 = vadd.f32 %v1349, %v2295
        %s2298 = sld [smem:[#allocation2 + $0xb0]]
        %v2299 = vstv %s2298
        %v2300 = vmul.f32 %v2299, %v2224
        %v2301 = vmul.f32 %v2299, %v2225
        %v2302 = vadd.f32 %v1354, %v2300
        %v2303 = vadd.f32 %v1355, %v2301
        %s2304 = sld [smem:[#allocation2 + $0xba]]
        %v2305 = vstv %s2304
        %v2306 = vmul.f32 %v2305, %v2224
        %v2307 = vmul.f32 %v2305, %v2225
        %v2308 = vadd.f32 %v1360, %v2306
        %v2309 = vadd.f32 %v1361, %v2307
        %s2310 = sld [smem:[#allocation2 + $0xc4]]
        %v2311 = vstv %s2310
        %v2312 = vmul.f32 %v2311, %v2224
        %v2313 = vmul.f32 %v2311, %v2225
        %v2314 = vadd.f32 %v1366, %v2312
        %v2315 = vadd.f32 %v1367, %v2313
        %s2316 = sld [smem:[#allocation2 + $0xa7]]
        %v2317 = vstv %s2316
        %v2318 = vmul.f32 %v2317, %v2290
        %v2319 = vmul.f32 %v2317, %v2291
        %v2320 = vadd.f32 %v2296, %v2318
        %v2321 = vadd.f32 %v2297, %v2319
        %s2322 = sld [smem:[#allocation2 + $0xb1]]
        %v2323 = vstv %s2322
        %v2324 = vmul.f32 %v2323, %v2290
        %v2325 = vmul.f32 %v2323, %v2291
        %v2326 = vadd.f32 %v2302, %v2324
        %v2327 = vadd.f32 %v2303, %v2325
        %s2328 = sld [smem:[#allocation2 + $0xbb]]
        %v2329 = vstv %s2328
        %v2330 = vmul.f32 %v2329, %v2290
        %v2331 = vmul.f32 %v2329, %v2291
        %v2332 = vadd.f32 %v2308, %v2330
        %v2333 = vadd.f32 %v2309, %v2331
        %s2334 = sld [smem:[#allocation2 + $0xc5]]
        %v2335 = vstv %s2334
        %v2336 = vmul.f32 %v2335, %v2290
        %v2337 = vmul.f32 %v2335, %v2291
        %v2338 = vadd.f32 %v2314, %v2336
        %v2339 = vadd.f32 %v2315, %v2337
        %s2340 = sld [smem:[#allocation2 + $0xc6]]
        %v2341 = vstv %s2340
        %v2342 = vadd.f32 %v2320, %v2341
        %v2343 = vadd.f32 %v2321, %v2341
        %v2344 = vxor.u32 %v2342, 2147483648
        %v2345 = vxor.u32 %v2343, 2147483648
        %v2346 = vmul.f32 %v2344, 1.442695
        %v2347 = vpow.pop %v2346
        %v2348 = vmul.f32 %v2345, 1.442695
        %v2349 = vpow.pop %v2348
        %v2350 = vadd.f32 %v2347, 1.0
        %v2351 = vadd.f32 %v2349, 1.0
        %v2352 = vrcp.pop %v2350
        %v2353 = vmul.f32 %v2350, %v2352
        %v2354 = vsub.f32 1.0, %v2353
        %v2355 = vmul.f32 %v2352, %v2354
        %v2356 = vadd.f32 %v2352, %v2355
        %vm2357 = vweird.f32 %v2350
        %vm2358 = vweird.f32 %v2352
        %vm2359 = vmor %vm2357, %vm2358
        %v2360 = vsel %vm2359, %v2352, %v2356
        %v2361 = vand.u32 2147483647, %v2350
        %vm2362 = vcmp.eq.f32.partialorder %v2361, 8.507059e+37
        %v2363 = vand.u32 %v2350, 2147483648
        %v2364 = vor.u32 1.1754944e-38, %v2363
        %v2365 = vsel %vm2362, %v2364, %v2360
        %v2366 = vmul.f32 1.0, %v2365
        %v2367 = vrcp.pop %v2351
        %v2368 = vmul.f32 %v2351, %v2367
        %v2369 = vsub.f32 1.0, %v2368
        %v2370 = vmul.f32 %v2367, %v2369
        %v2371 = vadd.f32 %v2367, %v2370
        %vm2372 = vweird.f32 %v2351
        %vm2373 = vweird.f32 %v2367
        %vm2374 = vmor %vm2372, %vm2373
        %v2375 = vsel %vm2374, %v2367, %v2371
        %v2376 = vand.u32 2147483647, %v2351
        %vm2377 = vcmp.eq.f32.partialorder %v2376, 8.507059e+37
        %v2378 = vand.u32 %v2351, 2147483648
        %v2379 = vor.u32 1.1754944e-38, %v2378
        %v2380 = vsel %vm2377, %v2379, %v2375
        %v2381 = vmul.f32 1.0, %v2380
        %v2382 = vmul.f32 %v2342, %v2366
        %v2383 = vmul.f32 %v2343, %v2381
        %2384 = vst [vmem:[%s157] sm:$0xff] %v2382
        %2385 = vst [vmem:[%s157 + $0x8] sm:$0xff] %v2383
        %s2386 = sld [smem:[#allocation2 + $0xc7]]
        %v2387 = vstv %s2386
        %v2388 = vadd.f32 %v2326, %v2387
        %v2389 = vadd.f32 %v2327, %v2387
        %v2390 = vxor.u32 %v2388, 2147483648
        %v2391 = vxor.u32 %v2389, 2147483648
        %v2392 = vmul.f32 %v2390, 1.442695
        %v2393 = vpow.pop %v2392
        %v2394 = vmul.f32 %v2391, 1.442695
        %v2395 = vpow.pop %v2394
        %v2396 = vadd.f32 %v2393, 1.0
        %v2397 = vadd.f32 %v2395, 1.0
        %v2398 = vrcp.pop %v2396
        %v2399 = vmul.f32 %v2396, %v2398
        %v2400 = vsub.f32 1.0, %v2399
        %v2401 = vmul.f32 %v2398, %v2400
        %v2402 = vadd.f32 %v2398, %v2401
        %vm2403 = vweird.f32 %v2396
        %vm2404 = vweird.f32 %v2398
        %vm2405 = vmor %vm2403, %vm2404
        %v2406 = vsel %vm2405, %v2398, %v2402
        %v2407 = vand.u32 2147483647, %v2396
        %vm2408 = vcmp.eq.f32.partialorder %v2407, 8.507059e+37
        %v2409 = vand.u32 %v2396, 2147483648
        %v2410 = vor.u32 1.1754944e-38, %v2409
        %v2411 = vsel %vm2408, %v2410, %v2406
        %v2412 = vmul.f32 1.0, %v2411
        %v2413 = vrcp.pop %v2397
        %v2414 = vmul.f32 %v2397, %v2413
        %v2415 = vsub.f32 1.0, %v2414
        %v2416 = vmul.f32 %v2413, %v2415
        %v2417 = vadd.f32 %v2413, %v2416
        %vm2418 = vweird.f32 %v2397
        %vm2419 = vweird.f32 %v2413
        %vm2420 = vmor %vm2418, %vm2419
        %v2421 = vsel %vm2420, %v2413, %v2417
        %v2422 = vand.u32 2147483647, %v2397
        %vm2423 = vcmp.eq.f32.partialorder %v2422, 8.507059e+37
        %v2424 = vand.u32 %v2397, 2147483648
        %v2425 = vor.u32 1.1754944e-38, %v2424
        %v2426 = vsel %vm2423, %v2425, %v2421
        %v2427 = vmul.f32 1.0, %v2426
        %v2428 = vmul.f32 %v2388, %v2412
        %v2429 = vmul.f32 %v2389, %v2427
        %s2430 = scalar_lea.vmem %s157, 16
        %2431 = vst [vmem:[%s2430] sm:$0xff] %v2428
        %2432 = vst [vmem:[%s2430 + $0x8] sm:$0xff] %v2429
        %s2433 = sld [smem:[#allocation2 + $0xc8]]
        %v2434 = vstv %s2433
        %v2435 = vadd.f32 %v2332, %v2434
        %v2436 = vadd.f32 %v2333, %v2434
        %v2437 = vxor.u32 %v2435, 2147483648
        %v2438 = vxor.u32 %v2436, 2147483648
        %v2439 = vmul.f32 %v2437, 1.442695
        %v2440 = vpow.pop %v2439
        %v2441 = vmul.f32 %v2438, 1.442695
        %v2442 = vpow.pop %v2441
        %v2443 = vadd.f32 %v2440, 1.0
        %v2444 = vadd.f32 %v2442, 1.0
        %v2445 = vrcp.pop %v2443
        %v2446 = vmul.f32 %v2443, %v2445
        %v2447 = vsub.f32 1.0, %v2446
        %v2448 = vmul.f32 %v2445, %v2447
        %v2449 = vadd.f32 %v2445, %v2448
        %vm2450 = vweird.f32 %v2443
        %vm2451 = vweird.f32 %v2445
        %vm2452 = vmor %vm2450, %vm2451
        %v2453 = vsel %vm2452, %v2445, %v2449
        %v2454 = vand.u32 2147483647, %v2443
        %vm2455 = vcmp.eq.f32.partialorder %v2454, 8.507059e+37
        %v2456 = vand.u32 %v2443, 2147483648
        %v2457 = vor.u32 1.1754944e-38, %v2456
        %v2458 = vsel %vm2455, %v2457, %v2453
        %v2459 = vmul.f32 1.0, %v2458
        %v2460 = vrcp.pop %v2444
        %v2461 = vmul.f32 %v2444, %v2460
        %v2462 = vsub.f32 1.0, %v2461
        %v2463 = vmul.f32 %v2460, %v2462
        %v2464 = vadd.f32 %v2460, %v2463
        %vm2465 = vweird.f32 %v2444
        %vm2466 = vweird.f32 %v2460
        %vm2467 = vmor %vm2465, %vm2466
        %v2468 = vsel %vm2467, %v2460, %v2464
        %v2469 = vand.u32 2147483647, %v2444
        %vm2470 = vcmp.eq.f32.partialorder %v2469, 8.507059e+37
        %v2471 = vand.u32 %v2444, 2147483648
        %v2472 = vor.u32 1.1754944e-38, %v2471
        %v2473 = vsel %vm2470, %v2472, %v2468
        %v2474 = vmul.f32 1.0, %v2473
        %v2475 = vmul.f32 %v2435, %v2459
        %v2476 = vmul.f32 %v2436, %v2474
        %s2477 = scalar_lea.vmem %s157, 32
        %2478 = vst [vmem:[%s2477] sm:$0xff] %v2475
        %2479 = vst [vmem:[%s2477 + $0x8] sm:$0xff] %v2476
        %s2480 = sld [smem:[#allocation2 + $0xc9]]
        %v2481 = vstv %s2480
        %v2482 = vadd.f32 %v2338, %v2481
        %v2483 = vadd.f32 %v2339, %v2481
        %v2484 = vxor.u32 %v2482, 2147483648
        %v2485 = vxor.u32 %v2483, 2147483648
        %v2486 = vmul.f32 %v2484, 1.442695
        %v2487 = vpow.pop %v2486
        %v2488 = vmul.f32 %v2485, 1.442695
        %v2489 = vpow.pop %v2488
        %v2490 = vadd.f32 %v2487, 1.0
        %v2491 = vadd.f32 %v2489, 1.0
        %v2492 = vrcp.pop %v2490
        %v2493 = vmul.f32 %v2490, %v2492
        %v2494 = vsub.f32 1.0, %v2493
        %v2495 = vmul.f32 %v2492, %v2494
        %v2496 = vadd.f32 %v2492, %v2495
        %vm2497 = vweird.f32 %v2490
        %vm2498 = vweird.f32 %v2492
        %vm2499 = vmor %vm2497, %vm2498
        %v2500 = vsel %vm2499, %v2492, %v2496
        %v2501 = vand.u32 2147483647, %v2490
        %vm2502 = vcmp.eq.f32.partialorder %v2501, 8.507059e+37
        %v2503 = vand.u32 %v2490, 2147483648
        %v2504 = vor.u32 1.1754944e-38, %v2503
        %v2505 = vsel %vm2502, %v2504, %v2500
        %v2506 = vmul.f32 1.0, %v2505
        %v2507 = vrcp.pop %v2491
        %v2508 = vmul.f32 %v2491, %v2507
        %v2509 = vsub.f32 1.0, %v2508
        %v2510 = vmul.f32 %v2507, %v2509
        %v2511 = vadd.f32 %v2507, %v2510
        %vm2512 = vweird.f32 %v2491
        %vm2513 = vweird.f32 %v2507
        %vm2514 = vmor %vm2512, %vm2513
        %v2515 = vsel %vm2514, %v2507, %v2511
        %v2516 = vand.u32 2147483647, %v2491
        %vm2517 = vcmp.eq.f32.partialorder %v2516, 8.507059e+37
        %v2518 = vand.u32 %v2491, 2147483648
        %v2519 = vor.u32 1.1754944e-38, %v2518
        %v2520 = vsel %vm2517, %v2519, %v2515
        %v2521 = vmul.f32 1.0, %v2520
        %v2522 = vmul.f32 %v2482, %v2506
        %v2523 = vmul.f32 %v2483, %v2521
        %s2524 = scalar_lea.vmem %s157, 48
        %2525 = vst [vmem:[%s2524] sm:$0xff] %v2522
        %2526 = vst [vmem:[%s2524 + $0x8] sm:$0xff] %v2523
        %p2527 = scmp.lt.s32.totalorder %s14, 1
        %s2528 = scalar_select %p2527, %s14, 1
        %s2529 = smul.addr %s2528, 8
        %s2530 = smul.addr %s2529, 8
        %s2531 = scalar_lea.vmem %s2, %s2530
        // Predicated region
        $region33: #{fwd.1} parent=27 // pred_check
          %p2532 = pneg %p79
        $region34: #{fwd.1} parent=27 // pred_check_branch
          %2534 = sbr.rel (%p2532) target = $region36
        $region35: #{fwd.1} parent=27 // pred_region
          _
        $region36: #{fwd.1} parent=27 // pred_fallthru
          _
      $region28: #{fwd.1} parent=5 // pred_fallthru
        _
      %p2535 = scmp.le.s32.totalorder 2, %s9
      // Predicated region
      $region37: #{fwd.1} parent=5 // pred_check
        %p2536 = pneg %p2535
      $region38: #{fwd.1} parent=5 // pred_check_branch
        %2538 = sbr.rel (%p2536) target = $region40
      $region39: #{fwd.1} parent=5 // pred_region
        %s2539 = ssub.s32 %s9, 2
        // Predicated region
        $region41: #{fwd.1} parent=39 // pred_check
          %p2540 = pneg %p85
        $region42: #{fwd.1} parent=39 // pred_check_branch
          %2542 = sbr.rel (%p2540) target = $region44
        $region43: #{fwd.1} parent=39 // pred_region
          %p2543 = scmp.lt.s32.totalorder %s15, 1
          %s2544 = scalar_select %p2543, %s15, 1
          %s2545 = smul.addr %s2544, 8
          %s2546 = smul.addr %s2545, 8
          %s2547 = scalar_lea.vmem %s2, %s2546
        $region44: #{fwd.1} parent=39 // pred_fallthru
          _
      $region40: #{fwd.1} parent=5 // pred_fallthru
        _
    $region6: #{fwd.1} parent=1 // loop_footer
      %s13 = sadd.s32 1, %s9
    $region7: #{fwd.1} parent=1 // loop_footer_branch
      %8 = sbr.rel target = $region3
    $region8: #{fwd.1} parent=1 // loop_exit
      _
    %2548 = vsyncpa [#allocation3], 1
    %s2549 = scalar_lea.sflag [#allocation3], 1
    %2550 = vsyncpa %s2549, 1

</llo_original>
